<compile_context>
chip_gen: v5e
topology: v5e:2x2
jax: 0.10.0
libtpu: 0.0.40
codegen_flags: <defaults>
</compile_context>

<pallas_src>
import jax
import jax.numpy as jnp
from jax.experimental import pallas as pl
from jax.experimental.pallas import tpu as pltpu


def _round_up(v, m):
    return (v + m - 1) // m * m


# ---------------------------------------------------------------------------
# Fused kernel: 1x1 conv + GELU -> chained depthwise 3x3 dilated convs + GELU
#                -> concatenated channel output, all in VMEM per image block.
# ---------------------------------------------------------------------------
def _make_fused_kernel(H, W, Cin, C, dilations, approximate_gelu):
    dilations = tuple(int(d) for d in dilations)
    dmax = max(dilations)
    pad_lw = _round_up(dmax, 8)          # left W halo rounded up to a sublane multiple
    Hp = H + 2 * dmax
    Wp = W + pad_lw + dmax

    def gelu(v):
        return jax.nn.gelu(v, approximate=approximate_gelu)

    def kernel(x_ref, w1_ref, b1_ref, dww_ref, dwb_ref, o_ref, hbuf):
        # x_ref  : (1, H, W, Cin)   input image block
        # w1_ref : (Cin, C)         1x1 conv weight
        # b1_ref : (1, C)           1x1 conv bias
        # dww_ref: (nd, 9, C)       depthwise 3x3 weights, tap-major, per channel
        # dwb_ref: (nd, C)          depthwise biases
        # o_ref  : (1, H, W, nd*C)  concatenated output block
        # hbuf   : VMEM (Hp, Wp, C) f32 scratch; zero halo frame, interior rewritten per stage
        f32 = jnp.float32

        # Zero only the halo frame (re-done each step -> megacore-safe; interior is
        # always fully overwritten below).
        hbuf[0:dmax, :, :] = jnp.zeros((dmax, Wp, C), f32)
        hbuf[Hp - dmax:Hp, :, :] = jnp.zeros((dmax, Wp, C), f32)
        hbuf[:, 0:pad_lw, :] = jnp.zeros((Hp, pad_lw, C), f32)
        hbuf[:, pad_lw + W:Wp, :] = jnp.zeros((Hp, Wp - pad_lw - W, C), f32)

        # ---- 1x1 conv (pointwise over channels) on the MXU + GELU ----
        # The MXU is otherwise idle here; HIGHEST keeps f32-accurate accumulation.
        # NOTE: the (H, W, Cin) -> (H*W, Cin) reshape is layout-preserving when W % 8 == 0.
        # TODO(synk): for W not a multiple of 8, keep strips 8-aligned to avoid a relayout copy.
        x = x_ref[0].astype(f32)                               # (H, W, Cin)
        h = jnp.dot(
            x.reshape(H * W, Cin),
            w1_ref[...].astype(f32),
            preferred_element_type=f32,
            precision=jax.lax.Precision.HIGHEST,
        ).reshape(H, W, C)
        h = gelu(h + b1_ref[...].reshape(1, 1, C).astype(f32))

        # ---- chained depthwise 3x3 dilated convs + GELU ----
        outs = []
        for i, d in enumerate(dilations):
            # Stage input lives in the zero-framed scratch (halo handles padding=d).
            # pad_lw is sublane-aligned, so this is a full, unmasked interior store.
            hbuf[dmax:dmax + H, pad_lw:pad_lw + W, :] = h
            wst = dww_ref[i].astype(f32)                       # (9, C)
            acc = None
            # Slice the scratch *ref* directly: 3 column windows per stage (no whole-
            # buffer load); H tap offsets are free slices on the untiled leading dim.
            for kj in range(3):
                c0 = pad_lw + (kj - 1) * d
                col = hbuf[:, c0:c0 + W, :]                    # (Hp, W, C)
                for ki in range(3):
                    r0 = dmax + (ki - 1) * d
                    patch = col[r0:r0 + H]                     # (H, W, C)
                    term = patch * wst[ki * 3 + kj].reshape(1, 1, C)
                    acc = term if acc is None else acc + term
            # TODO(synk): on v6e/v7x a bf16 hbuf / bf16 tap math halves traffic; kept
            # f32 here to match PyTorch f32 numerics.
            h = gelu(acc + dwb_ref[i].astype(f32).reshape(1, 1, C))
            outs.append(h)

        # Register-level channel concat -> ONE wide store per image block
        # (lane-dense for production nd*C >= 128; avoids per-stage masked stores).
        o_ref[0] = jnp.concatenate(outs, axis=-1).astype(o_ref.dtype)

    return kernel


# ---------------------------------------------------------------------------
# Module forward: matches ConvolutionLayer.forward, channels-last output.
# ---------------------------------------------------------------------------
def convolution_layer_forward(x, params, dilation, *, approximate_gelu=True):
    # x: [B, L, L, input_size] -> out: [B, L, L, len(dilation)*channels]
    # approximate_gelu=True (tanh, EUP-friendly, review-recommended); pass False to
    # reproduce PyTorch nn.GELU()'s default exact-erf formula.
    B, H, W, Cin = x.shape
    C = params["w1"].shape[1]
    dilations = tuple(int(d) for d in dilation)
    nd = len(dilations)
    dmax = max(dilations)
    pad_lw = _round_up(dmax, 8)
    Hp, Wp = H + 2 * dmax, W + pad_lw + dmax

    dww = jnp.stack([jnp.asarray(w) for w in params["dw_w"]], axis=0)  # (nd, 9, C)
    dwb = jnp.stack([jnp.asarray(b) for b in params["dw_b"]], axis=0)  # (nd, C)
    b1 = jnp.asarray(params["b1"]).reshape(1, C)

    # --- VMEM budget with lane(128)/sublane(8)-padded footprints + temporaries ---
    itemsize = jnp.dtype(x.dtype).itemsize
    Cin_p, C_p, Co_p = _round_up(Cin, 128), _round_up(C, 128), _round_up(nd * C, 128)
    W_p, Wp_p = _round_up(W, 8), _round_up(Wp, 8)
    needed = (
        2 * H * W_p * Cin_p * itemsize                     # double-buffered input block
        + 2 * H * W_p * Co_p * itemsize                    # double-buffered output block
        + Hp * Wp_p * C_p * 4                              # zero-framed halo scratch (f32)
        + (4 * H * W_p * C_p + H * W_p * Co_p) * 4         # in-kernel temporaries (h/acc/col + concat)
        + 2 * (_round_up(Cin, 8) * C_p + C_p
               + nd * _round_up(9, 8) * C_p + nd * C_p) * 4  # (small) weight blocks
    )

    # Generation-aware ceiling (v5e/v6e: 128 MiB physical, v7x: 64 MiB) with headroom
    # for compiler-internal scratch — no blanket 64 MiB clamp on the 128 MiB parts.
    capacity = 128 * 2 ** 20
    try:
        capacity = int(getattr(pltpu.get_tpu_info(), "vmem_capacity_bytes", capacity)) or capacity
    except Exception:
        pass
    usable = int(capacity * 0.85)
    vmem_limit = int(min(max(int(needed * 1.25), 32 * 2 ** 20), usable))
    # TODO(synk): for production L/C on v7x (needed > usable) or B < num cores, add an
    # H-strip "parallel" grid axis with a sum(dilation)-row halo (recompute the chained
    # stages over the extended strip) so blocks fit 64 MiB and both TensorCores get work.

    return pl.pallas_call(
        _make_fused_kernel(H, W, Cin, C, dilations, approximate_gelu),
        out_shape=jax.ShapeDtypeStruct((B, H, W, nd * C), x.dtype),
        grid_spec=pltpu.PrefetchScalarGridSpec(
            num_scalar_prefetch=0,
            grid=(B,),
            in_specs=[
                pl.BlockSpec((1, H, W, Cin), lambda b: (b, 0, 0, 0)),
                pl.BlockSpec((Cin, C), lambda b: (0, 0)),
                pl.BlockSpec((1, C), lambda b: (0, 0)),
                pl.BlockSpec((nd, 9, C), lambda b: (0, 0, 0)),
                pl.BlockSpec((nd, C), lambda b: (0, 0)),
            ],
            out_specs=pl.BlockSpec((1, H, W, nd * C), lambda b: (b, 0, 0, 0)),
            scratch_shapes=[pltpu.VMEM((Hp, Wp, C), jnp.float32)],
        ),
        compiler_params=pltpu.CompilerParams(
            dimension_semantics=("parallel",),
            vmem_limit_bytes=vmem_limit,
        ),
    )(x, params["w1"], b1, dww, dwb)


# ---------------------------------------------------------------------------
# Pure-JAX reference (for correctness check)
# ---------------------------------------------------------------------------
def reference_forward(x, params, dilation, *, approximate_gelu=True):
    C = params["w1"].shape[1]
    h = jnp.einsum("bhwc,cd->bhwd", x, params["w1"],
                   precision=jax.lax.Precision.HIGHEST) + params["b1"]
    h = jax.nn.gelu(h, approximate=approximate_gelu)
    outs = []
    for i, d in enumerate(dilation):
        w_hwio = params["dw_w"][i].reshape(3, 3, 1, C)
        h = jax.lax.conv_general_dilated(
            h, w_hwio, window_strides=(1, 1), padding=((d, d), (d, d)),
            rhs_dilation=(d, d), dimension_numbers=("NHWC", "HWIO", "NHWC"),
            feature_group_count=C, precision=jax.lax.Precision.HIGHEST)
        h = jax.nn.gelu(h + params["dw_b"][i], approximate=approximate_gelu)
        outs.append(h)
    return jnp.concatenate(outs, axis=-1)


if __name__ == "__main__":
    B, L = 2, 16
    input_size, channels = 8, 16
    dilation = (1, 2, 3)

    keys = jax.random.split(jax.random.PRNGKey(0), 3 + 2 * len(dilation))
    x = jax.random.normal(keys[0], (B, L, L, input_size), jnp.float32)

    params = {
        "w1": jax.random.normal(keys[1], (input_size, channels), jnp.float32)
              / (input_size ** 0.5),
        "b1": 0.1 * jax.random.normal(keys[2], (channels,), jnp.float32),
        "dw_w": [
            jax.random.normal(keys[3 + 2 * i], (9, channels), jnp.float32) / 3.0
            for i in range(len(dilation))
        ],
        "dw_b": [
            0.1 * jax.random.normal(keys[4 + 2 * i], (channels,), jnp.float32)
            for i in range(len(dilation))
        ],
    }

    out = convolution_layer_forward(x, params, dilation)
    out = jax.block_until_ready(out)

    assert out.shape == (B, L, L, len(dilation) * channels), out.shape
    ref = reference_forward(x, params, dilation)
    max_err = float(jnp.max(jnp.abs(out - ref)))
    assert jnp.allclose(out, ref, atol=2e-3, rtol=2e-3), f"max_err={max_err}"

    print("KERNEL_OK")
</pallas_src>

<mosaic_0001>
module attributes {stable_mosaic.version = 11 : i64} {
  func.func @kernel(%arg0: i32, %arg1: memref<1x16x16x8xf32, #tpu.memory_space<vmem>>, %arg2: memref<8x16xf32, #tpu.memory_space<vmem>>, %arg3: memref<1x16xf32, #tpu.memory_space<vmem>>, %arg4: memref<3x9x16xf32, #tpu.memory_space<vmem>>, %arg5: memref<3x16xf32, #tpu.memory_space<vmem>>, %arg6: memref<1x16x16x48xf32, #tpu.memory_space<vmem>>, %arg7: memref<22x27x16xf32, #tpu.memory_space<vmem>>) attributes {dimension_semantics = [#tpu.dimension_semantics<parallel>], iteration_bounds = array<i64: 2>, scalar_prefetch = 0 : i64, scratch_operands = 1 : i64, tpu.core_type = #tpu.core_type<tc>, window_params = [{transform_indices = @transform_0, window_bounds = array<i64: 1, 16, 16, 8>}, {pipeline_mode = #tpu.pipeline_mode<synchronous>, transform_indices = @transform_1, window_bounds = array<i64: 8, 16>}, {pipeline_mode = #tpu.pipeline_mode<synchronous>, transform_indices = @transform_2, window_bounds = array<i64: 1, 16>}, {pipeline_mode = #tpu.pipeline_mode<synchronous>, transform_indices = @transform_3, window_bounds = array<i64: 3, 9, 16>}, {pipeline_mode = #tpu.pipeline_mode<synchronous>, transform_indices = @transform_4, window_bounds = array<i64: 3, 16>}, {transform_indices = @transform_5, window_bounds = array<i64: 1, 16, 16, 48>}]} {
    %cst = arith.constant 0.000000e+00 : f32
    %0 = vector.broadcast %cst : f32 to vector<3x27x16xf32>
    %c0 = arith.constant 0 : index
    %c0_0 = arith.constant 0 : index
    %c0_1 = arith.constant 0 : index
    %1 = vector.load %arg7[%c0, %c0_0, %c0_1] : memref<22x27x16xf32, #tpu.memory_space<vmem>>, vector<3x27x16xf32>
    tpu.vector_store %arg7[%c0, %c0_0, %c0_1], %0 {strides = array<i32>} : memref<22x27x16xf32, #tpu.memory_space<vmem>>, vector<3x27x16xf32>,
    %cst_2 = arith.constant 0.000000e+00 : f32
    %2 = vector.broadcast %cst_2 : f32 to vector<3x27x16xf32>
    %c19 = arith.constant 19 : index
    %c0_3 = arith.constant 0 : index
    %c0_4 = arith.constant 0 : index
    %3 = vector.load %arg7[%c19, %c0_3, %c0_4] : memref<22x27x16xf32, #tpu.memory_space<vmem>>, vector<3x27x16xf32>
    tpu.vector_store %arg7[%c19, %c0_3, %c0_4], %2 {strides = array<i32>} : memref<22x27x16xf32, #tpu.memory_space<vmem>>, vector<3x27x16xf32>,
    %cst_5 = arith.constant 0.000000e+00 : f32
    %4 = vector.broadcast %cst_5 : f32 to vector<22x8x16xf32>
    %c0_6 = arith.constant 0 : index
    %c0_7 = arith.constant 0 : index
    %c0_8 = arith.constant 0 : index
    %5 = vector.load %arg7[%c0_6, %c0_7, %c0_8] : memref<22x27x16xf32, #tpu.memory_space<vmem>>, vector<22x8x16xf32>
    tpu.vector_store %arg7[%c0_6, %c0_7, %c0_8], %4 {strides = array<i32>} : memref<22x27x16xf32, #tpu.memory_space<vmem>>, vector<22x8x16xf32>,
    %cst_9 = arith.constant 0.000000e+00 : f32
    %6 = vector.broadcast %cst_9 : f32 to vector<22x3x16xf32>
    %c0_10 = arith.constant 0 : index
    %c24 = arith.constant 24 : index
    %c0_11 = arith.constant 0 : index
    %7 = vector.load %arg7[%c0_10, %c24, %c0_11] : memref<22x27x16xf32, #tpu.memory_space<vmem>>, vector<22x3x16xf32>
    tpu.vector_store %arg7[%c0_10, %c24, %c0_11], %6 {strides = array<i32>} : memref<22x27x16xf32, #tpu.memory_space<vmem>>, vector<22x3x16xf32>,
    %c0_12 = arith.constant 0 : index
    %c0_13 = arith.constant 0 : index
    %c0_14 = arith.constant 0 : index
    %c0_15 = arith.constant 0 : index
    %8 = vector.load %arg1[%c0_12, %c0_13, %c0_14, %c0_15] : memref<1x16x16x8xf32, #tpu.memory_space<vmem>>, vector<1x16x16x8xf32>
    %9 = vector.shape_cast %8 : vector<1x16x16x8xf32> to vector<16x16x8xf32>
    %10 = vector.shape_cast %9 : vector<16x16x8xf32> to vector<256x8xf32>
    %c0_16 = arith.constant 0 : index
    %c0_17 = arith.constant 0 : index
    %11 = vector.load %arg2[%c0_16, %c0_17] : memref<8x16xf32, #tpu.memory_space<vmem>>, vector<8x16xf32>
    %cst_18 = arith.constant dense<0.000000e+00> : vector<256x16xf32>
    %12 = tpu.matmul %10, %11, %cst_18 {dimension_numbers = #tpu.dot_dimension_numbers<[1], [0], [0], [1], [0, 0, 1, 1], [], []>, precision = #tpu.contract_precision<fp32>} : vector<256x8xf32>, vector<8x16xf32>, vector<256x16xf32> -> vector<256x16xf32>
    %13 = vector.shape_cast %12 : vector<256x16xf32> to vector<16x16x16xf32>
    %c0_19 = arith.constant 0 : index
    %c0_20 = arith.constant 0 : index
    %14 = vector.load %arg3[%c0_19, %c0_20] : memref<1x16xf32, #tpu.memory_space<vmem>>, vector<1x16xf32>
    %15 = vector.shape_cast %14 : vector<1x16xf32> to vector<1x1x16xf32>
    %16 = vector.broadcast %15 : vector<1x1x16xf32> to vector<16x16x16xf32>
    %17 = arith.addf %13, %16 : vector<16x16x16xf32>
    %18 = arith.mulf %17, %17 : vector<16x16x16xf32>
    %19 = arith.mulf %17, %18 : vector<16x16x16xf32>
    %cst_21 = arith.constant 4.471500e-02 : f32
    %20 = vector.broadcast %cst_21 : f32 to vector<16x16x16xf32>
    %21 = arith.mulf %20, %19 : vector<16x16x16xf32>
    %22 = arith.addf %17, %21 : vector<16x16x16xf32>
    %cst_22 = arith.constant 0.797884583 : f32
    %23 = vector.broadcast %cst_22 : f32 to vector<16x16x16xf32>
    %24 = arith.mulf %23, %22 : vector<16x16x16xf32>
    %25 = math.tanh %24 : vector<16x16x16xf32>
    %cst_23 = arith.constant 1.000000e+00 : f32
    %26 = vector.broadcast %cst_23 : f32 to vector<16x16x16xf32>
    %27 = arith.addf %26, %25 : vector<16x16x16xf32>
    %cst_24 = arith.constant 5.000000e-01 : f32
    %28 = vector.broadcast %cst_24 : f32 to vector<16x16x16xf32>
    %29 = arith.mulf %28, %27 : vector<16x16x16xf32>
    %30 = arith.mulf %17, %29 : vector<16x16x16xf32>
    %c3 = arith.constant 3 : index
    %c8 = arith.constant 8 : index
    %c0_25 = arith.constant 0 : index
    %31 = vector.load %arg7[%c3, %c8, %c0_25] : memref<22x27x16xf32, #tpu.memory_space<vmem>>, vector<16x16x16xf32>
    tpu.vector_store %arg7[%c3, %c8, %c0_25], %30 {strides = array<i32>} : memref<22x27x16xf32, #tpu.memory_space<vmem>>, vector<16x16x16xf32>,
    %c0_26 = arith.constant 0 : index
    %c0_27 = arith.constant 0 : index
    %c0_28 = arith.constant 0 : index
    %32 = vector.load %arg4[%c0_26, %c0_27, %c0_28] : memref<3x9x16xf32, #tpu.memory_space<vmem>>, vector<1x9x16xf32>
    %33 = vector.shape_cast %32 : vector<1x9x16xf32> to vector<9x16xf32>
    %c0_29 = arith.constant 0 : index
    %c7 = arith.constant 7 : index
    %c0_30 = arith.constant 0 : index
    %34 = vector.load %arg7[%c0_29, %c7, %c0_30] : memref<22x27x16xf32, #tpu.memory_space<vmem>>, vector<22x16x16xf32>
    %35 = vector.extract_strided_slice %34 {offsets = [2, 0, 0], sizes = [16, 16, 16], strides = [1, 1, 1]} : vector<22x16x16xf32> to vector<16x16x16xf32>
    %36 = vector.extract_strided_slice %33 {offsets = [0, 0], sizes = [1, 16], strides = [1, 1]} : vector<9x16xf32> to vector<1x16xf32>
    %37 = vector.shape_cast %36 : vector<1x16xf32> to vector<16xf32>
    %38 = vector.shape_cast %37 : vector<16xf32> to vector<1x1x16xf32>
    %39 = vector.broadcast %38 : vector<1x1x16xf32> to vector<16x16x16xf32>
    %40 = arith.mulf %35, %39 : vector<16x16x16xf32>
    %41 = vector.extract_strided_slice %34 {offsets = [3, 0, 0], sizes = [16, 16, 16], strides = [1, 1, 1]} : vector<22x16x16xf32> to vector<16x16x16xf32>
    %42 = vector.extract_strided_slice %33 {offsets = [3, 0], sizes = [1, 16], strides = [1, 1]} : vector<9x16xf32> to vector<1x16xf32>
    %43 = vector.shape_cast %42 : vector<1x16xf32> to vector<16xf32>
    %44 = vector.shape_cast %43 : vector<16xf32> to vector<1x1x16xf32>
    %45 = vector.broadcast %44 : vector<1x1x16xf32> to vector<16x16x16xf32>
    %46 = arith.mulf %41, %45 : vector<16x16x16xf32>
    %47 = arith.addf %40, %46 : vector<16x16x16xf32>
    %48 = vector.extract_strided_slice %34 {offsets = [4, 0, 0], sizes = [16, 16, 16], strides = [1, 1, 1]} : vector<22x16x16xf32> to vector<16x16x16xf32>
    %49 = vector.extract_strided_slice %33 {offsets = [6, 0], sizes = [1, 16], strides = [1, 1]} : vector<9x16xf32> to vector<1x16xf32>
    %50 = vector.shape_cast %49 : vector<1x16xf32> to vector<16xf32>
    %51 = vector.shape_cast %50 : vector<16xf32> to vector<1x1x16xf32>
    %52 = vector.broadcast %51 : vector<1x1x16xf32> to vector<16x16x16xf32>
    %53 = arith.mulf %48, %52 : vector<16x16x16xf32>
    %54 = arith.addf %47, %53 : vector<16x16x16xf32>
    %c0_31 = arith.constant 0 : index
    %c8_32 = arith.constant 8 : index
    %c0_33 = arith.constant 0 : index
    %55 = vector.load %arg7[%c0_31, %c8_32, %c0_33] : memref<22x27x16xf32, #tpu.memory_space<vmem>>, vector<22x16x16xf32>
    %56 = vector.extract_strided_slice %55 {offsets = [2, 0, 0], sizes = [16, 16, 16], strides = [1, 1, 1]} : vector<22x16x16xf32> to vector<16x16x16xf32>
    %57 = vector.extract_strided_slice %33 {offsets = [1, 0], sizes = [1, 16], strides = [1, 1]} : vector<9x16xf32> to vector<1x16xf32>
    %58 = vector.shape_cast %57 : vector<1x16xf32> to vector<16xf32>
    %59 = vector.shape_cast %58 : vector<16xf32> to vector<1x1x16xf32>
    %60 = vector.broadcast %59 : vector<1x1x16xf32> to vector<16x16x16xf32>
    %61 = arith.mulf %56, %60 : vector<16x16x16xf32>
    %62 = arith.addf %54, %61 : vector<16x16x16xf32>
    %63 = vector.extract_strided_slice %55 {offsets = [3, 0, 0], sizes = [16, 16, 16], strides = [1, 1, 1]} : vector<22x16x16xf32> to vector<16x16x16xf32>
    %64 = vector.extract_strided_slice %33 {offsets = [4, 0], sizes = [1, 16], strides = [1, 1]} : vector<9x16xf32> to vector<1x16xf32>
    %65 = vector.shape_cast %64 : vector<1x16xf32> to vector<16xf32>
    %66 = vector.shape_cast %65 : vector<16xf32> to vector<1x1x16xf32>
    %67 = vector.broadcast %66 : vector<1x1x16xf32> to vector<16x16x16xf32>
    %68 = arith.mulf %63, %67 : vector<16x16x16xf32>
    %69 = arith.addf %62, %68 : vector<16x16x16xf32>
    %70 = vector.extract_strided_slice %55 {offsets = [4, 0, 0], sizes = [16, 16, 16], strides = [1, 1, 1]} : vector<22x16x16xf32> to vector<16x16x16xf32>
    %71 = vector.extract_strided_slice %33 {offsets = [7, 0], sizes = [1, 16], strides = [1, 1]} : vector<9x16xf32> to vector<1x16xf32>
    %72 = vector.shape_cast %71 : vector<1x16xf32> to vector<16xf32>
    %73 = vector.shape_cast %72 : vector<16xf32> to vector<1x1x16xf32>
    %74 = vector.broadcast %73 : vector<1x1x16xf32> to vector<16x16x16xf32>
    %75 = arith.mulf %70, %74 : vector<16x16x16xf32>
    %76 = arith.addf %69, %75 : vector<16x16x16xf32>
    %c0_34 = arith.constant 0 : index
    %c9 = arith.constant 9 : index
    %c0_35 = arith.constant 0 : index
    %77 = vector.load %arg7[%c0_34, %c9, %c0_35] : memref<22x27x16xf32, #tpu.memory_space<vmem>>, vector<22x16x16xf32>
    %78 = vector.extract_strided_slice %77 {offsets = [2, 0, 0], sizes = [16, 16, 16], strides = [1, 1, 1]} : vector<22x16x16xf32> to vector<16x16x16xf32>
    %79 = vector.extract_strided_slice %33 {offsets = [2, 0], sizes = [1, 16], strides = [1, 1]} : vector<9x16xf32> to vector<1x16xf32>
    %80 = vector.shape_cast %79 : vector<1x16xf32> to vector<16xf32>
    %81 = vector.shape_cast %80 : vector<16xf32> to vector<1x1x16xf32>
    %82 = vector.broadcast %81 : vector<1x1x16xf32> to vector<16x16x16xf32>
    %83 = arith.mulf %78, %82 : vector<16x16x16xf32>
    %84 = arith.addf %76, %83 : vector<16x16x16xf32>
    %85 = vector.extract_strided_slice %77 {offsets = [3, 0, 0], sizes = [16, 16, 16], strides = [1, 1, 1]} : vector<22x16x16xf32> to vector<16x16x16xf32>
    %86 = vector.extract_strided_slice %33 {offsets = [5, 0], sizes = [1, 16], strides = [1, 1]} : vector<9x16xf32> to vector<1x16xf32>
    %87 = vector.shape_cast %86 : vector<1x16xf32> to vector<16xf32>
    %88 = vector.shape_cast %87 : vector<16xf32> to vector<1x1x16xf32>
    %89 = vector.broadcast %88 : vector<1x1x16xf32> to vector<16x16x16xf32>
    %90 = arith.mulf %85, %89 : vector<16x16x16xf32>
    %91 = arith.addf %84, %90 : vector<16x16x16xf32>
    %92 = vector.extract_strided_slice %77 {offsets = [4, 0, 0], sizes = [16, 16, 16], strides = [1, 1, 1]} : vector<22x16x16xf32> to vector<16x16x16xf32>
    %93 = vector.extract_strided_slice %33 {offsets = [8, 0], sizes = [1, 16], strides = [1, 1]} : vector<9x16xf32> to vector<1x16xf32>
    %94 = vector.shape_cast %93 : vector<1x16xf32> to vector<16xf32>
    %95 = vector.shape_cast %94 : vector<16xf32> to vector<1x1x16xf32>
    %96 = vector.broadcast %95 : vector<1x1x16xf32> to vector<16x16x16xf32>
    %97 = arith.mulf %92, %96 : vector<16x16x16xf32>
    %98 = arith.addf %91, %97 : vector<16x16x16xf32>
    %c0_36 = arith.constant 0 : index
    %c0_37 = arith.constant 0 : index
    %99 = vector.load %arg5[%c0_36, %c0_37] : memref<3x16xf32, #tpu.memory_space<vmem>>, vector<1x16xf32>
    %100 = vector.shape_cast %99 : vector<1x16xf32> to vector<16xf32>
    %101 = vector.shape_cast %100 : vector<16xf32> to vector<1x1x16xf32>
    %102 = vector.broadcast %101 : vector<1x1x16xf32> to vector<16x16x16xf32>
    %103 = arith.addf %98, %102 : vector<16x16x16xf32>
    %104 = arith.mulf %103, %103 : vector<16x16x16xf32>
    %105 = arith.mulf %103, %104 : vector<16x16x16xf32>
    %cst_38 = arith.constant 4.471500e-02 : f32
    %106 = vector.broadcast %cst_38 : f32 to vector<16x16x16xf32>
    %107 = arith.mulf %106, %105 : vector<16x16x16xf32>
    %108 = arith.addf %103, %107 : vector<16x16x16xf32>
    %cst_39 = arith.constant 0.797884583 : f32
    %109 = vector.broadcast %cst_39 : f32 to vector<16x16x16xf32>
    %110 = arith.mulf %109, %108 : vector<16x16x16xf32>
    %111 = math.tanh %110 : vector<16x16x16xf32>
    %cst_40 = arith.constant 1.000000e+00 : f32
    %112 = vector.broadcast %cst_40 : f32 to vector<16x16x16xf32>
    %113 = arith.addf %112, %111 : vector<16x16x16xf32>
    %cst_41 = arith.constant 5.000000e-01 : f32
    %114 = vector.broadcast %cst_41 : f32 to vector<16x16x16xf32>
    %115 = arith.mulf %114, %113 : vector<16x16x16xf32>
    %116 = arith.mulf %103, %115 : vector<16x16x16xf32>
    %c3_42 = arith.constant 3 : index
    %c8_43 = arith.constant 8 : index
    %c0_44 = arith.constant 0 : index
    %117 = vector.load %arg7[%c3_42, %c8_43, %c0_44] : memref<22x27x16xf32, #tpu.memory_space<vmem>>, vector<16x16x16xf32>
    tpu.vector_store %arg7[%c3_42, %c8_43, %c0_44], %116 {strides = array<i32>} : memref<22x27x16xf32, #tpu.memory_space<vmem>>, vector<16x16x16xf32>,
    %c1 = arith.constant 1 : index
    %c0_45 = arith.constant 0 : index
    %c0_46 = arith.constant 0 : index
    %118 = vector.load %arg4[%c1, %c0_45, %c0_46] : memref<3x9x16xf32, #tpu.memory_space<vmem>>, vector<1x9x16xf32>
    %119 = vector.shape_cast %118 : vector<1x9x16xf32> to vector<9x16xf32>
    %c0_47 = arith.constant 0 : index
    %c6 = arith.constant 6 : index
    %c0_48 = arith.constant 0 : index
    %120 = vector.load %arg7[%c0_47, %c6, %c0_48] : memref<22x27x16xf32, #tpu.memory_space<vmem>>, vector<22x16x16xf32>
    %121 = vector.extract_strided_slice %120 {offsets = [1, 0, 0], sizes = [16, 16, 16], strides = [1, 1, 1]} : vector<22x16x16xf32> to vector<16x16x16xf32>
    %122 = vector.extract_strided_slice %119 {offsets = [0, 0], sizes = [1, 16], strides = [1, 1]} : vector<9x16xf32> to vector<1x16xf32>
    %123 = vector.shape_cast %122 : vector<1x16xf32> to vector<16xf32>
    %124 = vector.shape_cast %123 : vector<16xf32> to vector<1x1x16xf32>
    %125 = vector.broadcast %124 : vector<1x1x16xf32> to vector<16x16x16xf32>
    %126 = arith.mulf %121, %125 : vector<16x16x16xf32>
    %127 = vector.extract_strided_slice %120 {offsets = [3, 0, 0], sizes = [16, 16, 16], strides = [1, 1, 1]} : vector<22x16x16xf32> to vector<16x16x16xf32>
    %128 = vector.extract_strided_slice %119 {offsets = [3, 0], sizes = [1, 16], strides = [1, 1]} : vector<9x16xf32> to vector<1x16xf32>
    %129 = vector.shape_cast %128 : vector<1x16xf32> to vector<16xf32>
    %130 = vector.shape_cast %129 : vector<16xf32> to vector<1x1x16xf32>
    %131 = vector.broadcast %130 : vector<1x1x16xf32> to vector<16x16x16xf32>
    %132 = arith.mulf %127, %131 : vector<16x16x16xf32>
    %133 = arith.addf %126, %132 : vector<16x16x16xf32>
    %134 = vector.extract_strided_slice %120 {offsets = [5, 0, 0], sizes = [16, 16, 16], strides = [1, 1, 1]} : vector<22x16x16xf32> to vector<16x16x16xf32>
    %135 = vector.extract_strided_slice %119 {offsets = [6, 0], sizes = [1, 16], strides = [1, 1]} : vector<9x16xf32> to vector<1x16xf32>
    %136 = vector.shape_cast %135 : vector<1x16xf32> to vector<16xf32>
    %137 = vector.shape_cast %136 : vector<16xf32> to vector<1x1x16xf32>
    %138 = vector.broadcast %137 : vector<1x1x16xf32> to vector<16x16x16xf32>
    %139 = arith.mulf %134, %138 : vector<16x16x16xf32>
    %140 = arith.addf %133, %139 : vector<16x16x16xf32>
    %c0_49 = arith.constant 0 : index
    %c8_50 = arith.constant 8 : index
    %c0_51 = arith.constant 0 : index
    %141 = vector.load %arg7[%c0_49, %c8_50, %c0_51] : memref<22x27x16xf32, #tpu.memory_space<vmem>>, vector<22x16x16xf32>
    %142 = vector.extract_strided_slice %141 {offsets = [1, 0, 0], sizes = [16, 16, 16], strides = [1, 1, 1]} : vector<22x16x16xf32> to vector<16x16x16xf32>
    %143 = vector.extract_strided_slice %119 {offsets = [1, 0], sizes = [1, 16], strides = [1, 1]} : vector<9x16xf32> to vector<1x16xf32>
    %144 = vector.shape_cast %143 : vector<1x16xf32> to vector<16xf32>
    %145 = vector.shape_cast %144 : vector<16xf32> to vector<1x1x16xf32>
    %146 = vector.broadcast %145 : vector<1x1x16xf32> to vector<16x16x16xf32>
    %147 = arith.mulf %142, %146 : vector<16x16x16xf32>
    %148 = arith.addf %140, %147 : vector<16x16x16xf32>
    %149 = vector.extract_strided_slice %141 {offsets = [3, 0, 0], sizes = [16, 16, 16], strides = [1, 1, 1]} : vector<22x16x16xf32> to vector<16x16x16xf32>
    %150 = vector.extract_strided_slice %119 {offsets = [4, 0], sizes = [1, 16], strides = [1, 1]} : vector<9x16xf32> to vector<1x16xf32>
    %151 = vector.shape_cast %150 : vector<1x16xf32> to vector<16xf32>
    %152 = vector.shape_cast %151 : vector<16xf32> to vector<1x1x16xf32>
    %153 = vector.broadcast %152 : vector<1x1x16xf32> to vector<16x16x16xf32>
    %154 = arith.mulf %149, %153 : vector<16x16x16xf32>
    %155 = arith.addf %148, %154 : vector<16x16x16xf32>
    %156 = vector.extract_strided_slice %141 {offsets = [5, 0, 0], sizes = [16, 16, 16], strides = [1, 1, 1]} : vector<22x16x16xf32> to vector<16x16x16xf32>
    %157 = vector.extract_strided_slice %119 {offsets = [7, 0], sizes = [1, 16], strides = [1, 1]} : vector<9x16xf32> to vector<1x16xf32>
    %158 = vector.shape_cast %157 : vector<1x16xf32> to vector<16xf32>
    %159 = vector.shape_cast %158 : vector<16xf32> to vector<1x1x16xf32>
    %160 = vector.broadcast %159 : vector<1x1x16xf32> to vector<16x16x16xf32>
    %161 = arith.mulf %156, %160 : vector<16x16x16xf32>
    %162 = arith.addf %155, %161 : vector<16x16x16xf32>
    %c0_52 = arith.constant 0 : index
    %c10 = arith.constant 10 : index
    %c0_53 = arith.constant 0 : index
    %163 = vector.load %arg7[%c0_52, %c10, %c0_53] : memref<22x27x16xf32, #tpu.memory_space<vmem>>, vector<22x16x16xf32>
    %164 = vector.extract_strided_slice %163 {offsets = [1, 0, 0], sizes = [16, 16, 16], strides = [1, 1, 1]} : vector<22x16x16xf32> to vector<16x16x16xf32>
    %165 = vector.extract_strided_slice %119 {offsets = [2, 0], sizes = [1, 16], strides = [1, 1]} : vector<9x16xf32> to vector<1x16xf32>
    %166 = vector.shape_cast %165 : vector<1x16xf32> to vector<16xf32>
    %167 = vector.shape_cast %166 : vector<16xf32> to vector<1x1x16xf32>
    %168 = vector.broadcast %167 : vector<1x1x16xf32> to vector<16x16x16xf32>
    %169 = arith.mulf %164, %168 : vector<16x16x16xf32>
    %170 = arith.addf %162, %169 : vector<16x16x16xf32>
    %171 = vector.extract_strided_slice %163 {offsets = [3, 0, 0], sizes = [16, 16, 16], strides = [1, 1, 1]} : vector<22x16x16xf32> to vector<16x16x16xf32>
    %172 = vector.extract_strided_slice %119 {offsets = [5, 0], sizes = [1, 16], strides = [1, 1]} : vector<9x16xf32> to vector<1x16xf32>
    %173 = vector.shape_cast %172 : vector<1x16xf32> to vector<16xf32>
    %174 = vector.shape_cast %173 : vector<16xf32> to vector<1x1x16xf32>
    %175 = vector.broadcast %174 : vector<1x1x16xf32> to vector<16x16x16xf32>
    %176 = arith.mulf %171, %175 : vector<16x16x16xf32>
    %177 = arith.addf %170, %176 : vector<16x16x16xf32>
    %178 = vector.extract_strided_slice %163 {offsets = [5, 0, 0], sizes = [16, 16, 16], strides = [1, 1, 1]} : vector<22x16x16xf32> to vector<16x16x16xf32>
    %179 = vector.extract_strided_slice %119 {offsets = [8, 0], sizes = [1, 16], strides = [1, 1]} : vector<9x16xf32> to vector<1x16xf32>
    %180 = vector.shape_cast %179 : vector<1x16xf32> to vector<16xf32>
    %181 = vector.shape_cast %180 : vector<16xf32> to vector<1x1x16xf32>
    %182 = vector.broadcast %181 : vector<1x1x16xf32> to vector<16x16x16xf32>
    %183 = arith.mulf %178, %182 : vector<16x16x16xf32>
    %184 = arith.addf %177, %183 : vector<16x16x16xf32>
    %c1_54 = arith.constant 1 : index
    %c0_55 = arith.constant 0 : index
    %185 = vector.load %arg5[%c1_54, %c0_55] : memref<3x16xf32, #tpu.memory_space<vmem>>, vector<1x16xf32>
    %186 = vector.shape_cast %185 : vector<1x16xf32> to vector<16xf32>
    %187 = vector.shape_cast %186 : vector<16xf32> to vector<1x1x16xf32>
    %188 = vector.broadcast %187 : vector<1x1x16xf32> to vector<16x16x16xf32>
    %189 = arith.addf %184, %188 : vector<16x16x16xf32>
    %190 = arith.mulf %189, %189 : vector<16x16x16xf32>
    %191 = arith.mulf %189, %190 : vector<16x16x16xf32>
    %cst_56 = arith.constant 4.471500e-02 : f32
    %192 = vector.broadcast %cst_56 : f32 to vector<16x16x16xf32>
    %193 = arith.mulf %192, %191 : vector<16x16x16xf32>
    %194 = arith.addf %189, %193 : vector<16x16x16xf32>
    %cst_57 = arith.constant 0.797884583 : f32
    %195 = vector.broadcast %cst_57 : f32 to vector<16x16x16xf32>
    %196 = arith.mulf %195, %194 : vector<16x16x16xf32>
    %197 = math.tanh %196 : vector<16x16x16xf32>
    %cst_58 = arith.constant 1.000000e+00 : f32
    %198 = vector.broadcast %cst_58 : f32 to vector<16x16x16xf32>
    %199 = arith.addf %198, %197 : vector<16x16x16xf32>
    %cst_59 = arith.constant 5.000000e-01 : f32
    %200 = vector.broadcast %cst_59 : f32 to vector<16x16x16xf32>
    %201 = arith.mulf %200, %199 : vector<16x16x16xf32>
    %202 = arith.mulf %189, %201 : vector<16x16x16xf32>
    %c3_60 = arith.constant 3 : index
    %c8_61 = arith.constant 8 : index
    %c0_62 = arith.constant 0 : index
    %203 = vector.load %arg7[%c3_60, %c8_61, %c0_62] : memref<22x27x16xf32, #tpu.memory_space<vmem>>, vector<16x16x16xf32>
    tpu.vector_store %arg7[%c3_60, %c8_61, %c0_62], %202 {strides = array<i32>} : memref<22x27x16xf32, #tpu.memory_space<vmem>>, vector<16x16x16xf32>,
    %c2 = arith.constant 2 : index
    %c0_63 = arith.constant 0 : index
    %c0_64 = arith.constant 0 : index
    %204 = vector.load %arg4[%c2, %c0_63, %c0_64] : memref<3x9x16xf32, #tpu.memory_space<vmem>>, vector<1x9x16xf32>
    %205 = vector.shape_cast %204 : vector<1x9x16xf32> to vector<9x16xf32>
    %c0_65 = arith.constant 0 : index
    %c5 = arith.constant 5 : index
    %c0_66 = arith.constant 0 : index
    %206 = vector.load %arg7[%c0_65, %c5, %c0_66] : memref<22x27x16xf32, #tpu.memory_space<vmem>>, vector<22x16x16xf32>
    %207 = vector.extract_strided_slice %206 {offsets = [0, 0, 0], sizes = [16, 16, 16], strides = [1, 1, 1]} : vector<22x16x16xf32> to vector<16x16x16xf32>
    %208 = vector.extract_strided_slice %205 {offsets = [0, 0], sizes = [1, 16], strides = [1, 1]} : vector<9x16xf32> to vector<1x16xf32>
    %209 = vector.shape_cast %208 : vector<1x16xf32> to vector<16xf32>
    %210 = vector.shape_cast %209 : vector<16xf32> to vector<1x1x16xf32>
    %211 = vector.broadcast %210 : vector<1x1x16xf32> to vector<16x16x16xf32>
    %212 = arith.mulf %207, %211 : vector<16x16x16xf32>
    %213 = vector.extract_strided_slice %206 {offsets = [3, 0, 0], sizes = [16, 16, 16], strides = [1, 1, 1]} : vector<22x16x16xf32> to vector<16x16x16xf32>
    %214 = vector.extract_strided_slice %205 {offsets = [3, 0], sizes = [1, 16], strides = [1, 1]} : vector<9x16xf32> to vector<1x16xf32>
    %215 = vector.shape_cast %214 : vector<1x16xf32> to vector<16xf32>
    %216 = vector.shape_cast %215 : vector<16xf32> to vector<1x1x16xf32>
    %217 = vector.broadcast %216 : vector<1x1x16xf32> to vector<16x16x16xf32>
    %218 = arith.mulf %213, %217 : vector<16x16x16xf32>
    %219 = arith.addf %212, %218 : vector<16x16x16xf32>
    %220 = vector.extract_strided_slice %206 {offsets = [6, 0, 0], sizes = [16, 16, 16], strides = [1, 1, 1]} : vector<22x16x16xf32> to vector<16x16x16xf32>
    %221 = vector.extract_strided_slice %205 {offsets = [6, 0], sizes = [1, 16], strides = [1, 1]} : vector<9x16xf32> to vector<1x16xf32>
    %222 = vector.shape_cast %221 : vector<1x16xf32> to vector<16xf32>
    %223 = vector.shape_cast %222 : vector<16xf32> to vector<1x1x16xf32>
    %224 = vector.broadcast %223 : vector<1x1x16xf32> to vector<16x16x16xf32>
    %225 = arith.mulf %220, %224 : vector<16x16x16xf32>
    %226 = arith.addf %219, %225 : vector<16x16x16xf32>
    %c0_67 = arith.constant 0 : index
    %c8_68 = arith.constant 8 : index
    %c0_69 = arith.constant 0 : index
    %227 = vector.load %arg7[%c0_67, %c8_68, %c0_69] : memref<22x27x16xf32, #tpu.memory_space<vmem>>, vector<22x16x16xf32>
    %228 = vector.extract_strided_slice %227 {offsets = [0, 0, 0], sizes = [16, 16, 16], strides = [1, 1, 1]} : vector<22x16x16xf32> to vector<16x16x16xf32>
    %229 = vector.extract_strided_slice %205 {offsets = [1, 0], sizes = [1, 16], strides = [1, 1]} : vector<9x16xf32> to vector<1x16xf32>
    %230 = vector.shape_cast %229 : vector<1x16xf32> to vector<16xf32>
    %231 = vector.shape_cast %230 : vector<16xf32> to vector<1x1x16xf32>
    %232 = vector.broadcast %231 : vector<1x1x16xf32> to vector<16x16x16xf32>
    %233 = arith.mulf %228, %232 : vector<16x16x16xf32>
    %234 = arith.addf %226, %233 : vector<16x16x16xf32>
    %235 = vector.extract_strided_slice %227 {offsets = [3, 0, 0], sizes = [16, 16, 16], strides = [1, 1, 1]} : vector<22x16x16xf32> to vector<16x16x16xf32>
    %236 = vector.extract_strided_slice %205 {offsets = [4, 0], sizes = [1, 16], strides = [1, 1]} : vector<9x16xf32> to vector<1x16xf32>
    %237 = vector.shape_cast %236 : vector<1x16xf32> to vector<16xf32>
    %238 = vector.shape_cast %237 : vector<16xf32> to vector<1x1x16xf32>
    %239 = vector.broadcast %238 : vector<1x1x16xf32> to vector<16x16x16xf32>
    %240 = arith.mulf %235, %239 : vector<16x16x16xf32>
    %241 = arith.addf %234, %240 : vector<16x16x16xf32>
    %242 = vector.extract_strided_slice %227 {offsets = [6, 0, 0], sizes = [16, 16, 16], strides = [1, 1, 1]} : vector<22x16x16xf32> to vector<16x16x16xf32>
    %243 = vector.extract_strided_slice %205 {offsets = [7, 0], sizes = [1, 16], strides = [1, 1]} : vector<9x16xf32> to vector<1x16xf32>
    %244 = vector.shape_cast %243 : vector<1x16xf32> to vector<16xf32>
    %245 = vector.shape_cast %244 : vector<16xf32> to vector<1x1x16xf32>
    %246 = vector.broadcast %245 : vector<1x1x16xf32> to vector<16x16x16xf32>
    %247 = arith.mulf %242, %246 : vector<16x16x16xf32>
    %248 = arith.addf %241, %247 : vector<16x16x16xf32>
    %c0_70 = arith.constant 0 : index
    %c11 = arith.constant 11 : index
    %c0_71 = arith.constant 0 : index
    %249 = vector.load %arg7[%c0_70, %c11, %c0_71] : memref<22x27x16xf32, #tpu.memory_space<vmem>>, vector<22x16x16xf32>
    %250 = vector.extract_strided_slice %249 {offsets = [0, 0, 0], sizes = [16, 16, 16], strides = [1, 1, 1]} : vector<22x16x16xf32> to vector<16x16x16xf32>
    %251 = vector.extract_strided_slice %205 {offsets = [2, 0], sizes = [1, 16], strides = [1, 1]} : vector<9x16xf32> to vector<1x16xf32>
    %252 = vector.shape_cast %251 : vector<1x16xf32> to vector<16xf32>
    %253 = vector.shape_cast %252 : vector<16xf32> to vector<1x1x16xf32>
    %254 = vector.broadcast %253 : vector<1x1x16xf32> to vector<16x16x16xf32>
    %255 = arith.mulf %250, %254 : vector<16x16x16xf32>
    %256 = arith.addf %248, %255 : vector<16x16x16xf32>
    %257 = vector.extract_strided_slice %249 {offsets = [3, 0, 0], sizes = [16, 16, 16], strides = [1, 1, 1]} : vector<22x16x16xf32> to vector<16x16x16xf32>
    %258 = vector.extract_strided_slice %205 {offsets = [5, 0], sizes = [1, 16], strides = [1, 1]} : vector<9x16xf32> to vector<1x16xf32>
    %259 = vector.shape_cast %258 : vector<1x16xf32> to vector<16xf32>
    %260 = vector.shape_cast %259 : vector<16xf32> to vector<1x1x16xf32>
    %261 = vector.broadcast %260 : vector<1x1x16xf32> to vector<16x16x16xf32>
    %262 = arith.mulf %257, %261 : vector<16x16x16xf32>
    %263 = arith.addf %256, %262 : vector<16x16x16xf32>
    %264 = vector.extract_strided_slice %249 {offsets = [6, 0, 0], sizes = [16, 16, 16], strides = [1, 1, 1]} : vector<22x16x16xf32> to vector<16x16x16xf32>
    %265 = vector.extract_strided_slice %205 {offsets = [8, 0], sizes = [1, 16], strides = [1, 1]} : vector<9x16xf32> to vector<1x16xf32>
    %266 = vector.shape_cast %265 : vector<1x16xf32> to vector<16xf32>
    %267 = vector.shape_cast %266 : vector<16xf32> to vector<1x1x16xf32>
    %268 = vector.broadcast %267 : vector<1x1x16xf32> to vector<16x16x16xf32>
    %269 = arith.mulf %264, %268 : vector<16x16x16xf32>
    %270 = arith.addf %263, %269 : vector<16x16x16xf32>
    %c2_72 = arith.constant 2 : index
    %c0_73 = arith.constant 0 : index
    %271 = vector.load %arg5[%c2_72, %c0_73] : memref<3x16xf32, #tpu.memory_space<vmem>>, vector<1x16xf32>
    %272 = vector.shape_cast %271 : vector<1x16xf32> to vector<16xf32>
    %273 = vector.shape_cast %272 : vector<16xf32> to vector<1x1x16xf32>
    %274 = vector.broadcast %273 : vector<1x1x16xf32> to vector<16x16x16xf32>
    %275 = arith.addf %270, %274 : vector<16x16x16xf32>
    %276 = arith.mulf %275, %275 : vector<16x16x16xf32>
    %277 = arith.mulf %275, %276 : vector<16x16x16xf32>
    %cst_74 = arith.constant 4.471500e-02 : f32
    %278 = vector.broadcast %cst_74 : f32 to vector<16x16x16xf32>
    %279 = arith.mulf %278, %277 : vector<16x16x16xf32>
    %280 = arith.addf %275, %279 : vector<16x16x16xf32>
    %cst_75 = arith.constant 0.797884583 : f32
    %281 = vector.broadcast %cst_75 : f32 to vector<16x16x16xf32>
    %282 = arith.mulf %281, %280 : vector<16x16x16xf32>
    %283 = math.tanh %282 : vector<16x16x16xf32>
    %cst_76 = arith.constant 1.000000e+00 : f32
    %284 = vector.broadcast %cst_76 : f32 to vector<16x16x16xf32>
    %285 = arith.addf %284, %283 : vector<16x16x16xf32>
    %cst_77 = arith.constant 5.000000e-01 : f32
    %286 = vector.broadcast %cst_77 : f32 to vector<16x16x16xf32>
    %287 = arith.mulf %286, %285 : vector<16x16x16xf32>
    %288 = arith.mulf %275, %287 : vector<16x16x16xf32>
    %289 = tpu.concatenate %116, %202, %288 in 2 : vector<16x16x16xf32>, vector<16x16x16xf32>, vector<16x16x16xf32> -> vector<16x16x48xf32>
    %c0_78 = arith.constant 0 : index
    %c0_79 = arith.constant 0 : index
    %c0_80 = arith.constant 0 : index
    %c0_81 = arith.constant 0 : index
    %290 = vector.load %arg6[%c0_78, %c0_79, %c0_80, %c0_81] : memref<1x16x16x48xf32, #tpu.memory_space<vmem>>, vector<1x16x16x48xf32>
    %291 = vector.shape_cast %290 : vector<1x16x16x48xf32> to vector<16x16x48xf32>
    %292 = vector.shape_cast %289 : vector<16x16x48xf32> to vector<1x16x16x48xf32>
    tpu.vector_store %arg6[%c0_78, %c0_79, %c0_80, %c0_81], %292 {strides = array<i32>} : memref<1x16x16x48xf32, #tpu.memory_space<vmem>>, vector<1x16x16x48xf32>,
    return
  }
  func.func @transform_0(%arg0: i32) -> (i32, i32, i32, i32) {
    %c0_i32 = arith.constant 0 : i32
    %c0_i32_0 = arith.constant 0 : i32
    %c0_i32_1 = arith.constant 0 : i32
    %c0_i32_2 = arith.constant 0 : i32
    return %arg0, %c0_i32, %c0_i32_0, %c0_i32_1 : i32, i32, i32, i32
  }
  func.func @transform_1(%arg0: i32) -> (i32, i32) {
    %c0_i32 = arith.constant 0 : i32
    %c0_i32_0 = arith.constant 0 : i32
    %c0_i32_1 = arith.constant 0 : i32
    return %c0_i32, %c0_i32_0 : i32, i32
  }
  func.func @transform_2(%arg0: i32) -> (i32, i32) {
    %c0_i32 = arith.constant 0 : i32
    %c0_i32_0 = arith.constant 0 : i32
    %c0_i32_1 = arith.constant 0 : i32
    return %c0_i32, %c0_i32_0 : i32, i32
  }
  func.func @transform_3(%arg0: i32) -> (i32, i32, i32) {
    %c0_i32 = arith.constant 0 : i32
    %c0_i32_0 = arith.constant 0 : i32
    %c0_i32_1 = arith.constant 0 : i32
    %c0_i32_2 = arith.constant 0 : i32
    return %c0_i32, %c0_i32_0, %c0_i32_1 : i32, i32, i32
  }
  func.func @transform_4(%arg0: i32) -> (i32, i32) {
    %c0_i32 = arith.constant 0 : i32
    %c0_i32_0 = arith.constant 0 : i32
    %c0_i32_1 = arith.constant 0 : i32
    return %c0_i32, %c0_i32_0 : i32, i32
  }
  func.func @transform_5(%arg0: i32) -> (i32, i32, i32, i32) {
    %c0_i32 = arith.constant 0 : i32
    %c0_i32_0 = arith.constant 0 : i32
    %c0_i32_1 = arith.constant 0 : i32
    %c0_i32_2 = arith.constant 0 : i32
    return %arg0, %c0_i32, %c0_i32_0, %c0_i32_1 : i32, i32, i32, i32
  }
}

</mosaic_0001>

<llo_original>
// kernel: tpu_custom_call.1
$region0: #{tpu_custom_call.1}
  #allocation0 [shape = 'u32[]', space=smem, size = 0x4, offset = 0x4, fixed_abs, tag = 'smem constant byte address 0x4 - core index']
  #allocation1 [shape = 'u32[72,128]{1,0:T(1,128)}', space=vmem, size = 0x9000, scoped, tag = 'internal scratch']
  #allocation2 [shape = 'f32[22,27,16]{2,1,0:T(8,128)}', space=vmem, size = 0x58000, scoped, tag = 'scratch operand']
  %s0 = inlined_call_operand.vmem [shape: f32[2,16,16,8], index: 0, kind: input, shape index: {}]
  %s1 = inlined_call_operand.vmem [shape: f32[8,16], index: 1, kind: input, shape index: {}]
  %s2 = inlined_call_operand.vmem [shape: f32[1,16], index: 2, kind: input, shape index: {}]
  %s3 = inlined_call_operand.vmem [shape: f32[3,9,16], index: 3, kind: input, shape index: {}]
  %s4 = inlined_call_operand.vmem [shape: f32[3,16], index: 4, kind: input, shape index: {}]
  %s5 = inlined_call_operand.hbm [shape: f32[2,16,16,48], index: 5, kind: output, shape index: {}]
  %s6 = sld [smem:[#allocation0]]
  $region53: #{tpu_custom_call.1} parent=0
    _
  %s8 = ssub.s32 1, %s6
  %s9 = scalar_select 0, %s8, %s6
  $region1: #{tpu_custom_call.1} parent=0
    #allocation3 [shape = 'u8[262144]{0}', space=vmem, size = 0x40000, scoped, tag = 'output window, operand 0']
    #allocation4 [shape = 's32[2]{0}', space=sflag, size = 0x8, scoped, tag = 'scoped memory for tpu_custom_call.1']
    %10 = vsyncpa [#allocation4], 0
    %s11 = scalar_lea.sflag [#allocation4], 1
    %12 = vsyncpa %s11, 0
    loop: start=0, step=1, limit=4
    $region2: #{tpu_custom_call.1} parent=1 // loop_pre_header
      _
    $region3: #{tpu_custom_call.1} parent=1 // loop_header
      %s14 = sphi 0, %s18
      %p15 = scmp.ge.s32.totalorder %s14, 4
      %s24 = sphi 0, %s26
      %s27 = sphi 0, %s24
      %s28 = sphi 0, %s27
      %s44 = sphi 0, %s28
      %s48 = sphi 0, %s48
      %s50 = sphi 0, %s48
      %s51 = sphi 0, %s50
      %s65 = sphi 0, %s51
      %s69 = sphi 0, %s69
      %s71 = sphi 0, %s69
      %s72 = sphi 0, %s71
      %s86 = sphi 0, %s72
      %s90 = sphi 0, %s90
      %s92 = sphi 0, %s90
      %s93 = sphi 0, %s92
      %s107 = sphi 0, %s93
      %s111 = sphi 0, %s111
      %s113 = sphi 0, %s111
      %s114 = sphi 0, %s113
      %s128 = sphi 0, %s114
      %s134 = sphi 0, %s136
      %s137 = sphi 0, %s134
      %s138 = sphi 0, %s137
      %s154 = sphi 0, %s138
    $region4: #{tpu_custom_call.1} parent=1 // loop_header_branch
      %17 = sbr.rel (%p15) target = $region8
    $region5: #{tpu_custom_call.1} parent=1 // loop_body
      %s19 = ssub.s32 %s14, 1
      %s20 = ssub.s32 %s14, 2
      %s21 = sadd.s32 %s14, 1
      %s22 = ssub.s32 %s14, %s21
      %p23 = scmp.eq.s32.totalorder %s22, 0
      %s25 = sadd.s32 %s24, 1
      %s26 = scalar_select %p23, %s24, %s25
      %p29 = pneg %p23
      %p30 = scmp.eq.s32.totalorder %s14, 1
      %p31 = por %p29, %p30
      %p32 = scmp.ne.s32.totalorder %s24, %s27
      %p33 = scmp.eq.s32.totalorder %s14, 0
      %p34 = por %p32, %p33
      %p35 = scmp.ne.s32.totalorder %s24, %s27
      %p36 = scmp.eq.s32.totalorder %s19, 1
      %p37 = por %p35, %p36
      %p38 = scmp.ne.s32.totalorder %s27, %s28
      %p39 = scmp.eq.s32.totalorder %s19, 0
      %p40 = por %p38, %p39
      %p41 = scmp.ne.s32.totalorder %s27, %s28
      %p42 = scmp.eq.s32.totalorder %s20, 1
      %p43 = por %p41, %p42
      %p45 = scmp.ne.s32.totalorder %s28, %s44
      %p46 = scmp.eq.s32.totalorder %s20, 0
      %p47 = por %p45, %p46
      %s49 = sadd.s32 %s48, 1
      %p52 = scmp.eq.s32.totalorder %s14, 1
      %p53 = scmp.ne.s32.totalorder %s48, %s50
      %p54 = scmp.eq.s32.totalorder %s14, 0
      %p55 = por %p53, %p54
      %p56 = scmp.ne.s32.totalorder %s48, %s50
      %p57 = scmp.eq.s32.totalorder %s19, 1
      %p58 = por %p56, %p57
      %p59 = scmp.ne.s32.totalorder %s50, %s51
      %p60 = scmp.eq.s32.totalorder %s19, 0
      %p61 = por %p59, %p60
      %p62 = scmp.ne.s32.totalorder %s50, %s51
      %p63 = scmp.eq.s32.totalorder %s20, 1
      %p64 = por %p62, %p63
      %p66 = scmp.ne.s32.totalorder %s51, %s65
      %p67 = scmp.eq.s32.totalorder %s20, 0
      %p68 = por %p66, %p67
      %s70 = sadd.s32 %s69, 1
      %p73 = scmp.eq.s32.totalorder %s14, 1
      %p74 = scmp.ne.s32.totalorder %s69, %s71
      %p75 = scmp.eq.s32.totalorder %s14, 0
      %p76 = por %p74, %p75
      %p77 = scmp.ne.s32.totalorder %s69, %s71
      %p78 = scmp.eq.s32.totalorder %s19, 1
      %p79 = por %p77, %p78
      %p80 = scmp.ne.s32.totalorder %s71, %s72
      %p81 = scmp.eq.s32.totalorder %s19, 0
      %p82 = por %p80, %p81
      %p83 = scmp.ne.s32.totalorder %s71, %s72
      %p84 = scmp.eq.s32.totalorder %s20, 1
      %p85 = por %p83, %p84
      %p87 = scmp.ne.s32.totalorder %s72, %s86
      %p88 = scmp.eq.s32.totalorder %s20, 0
      %p89 = por %p87, %p88
      %s91 = sadd.s32 %s90, 1
      %p94 = scmp.eq.s32.totalorder %s14, 1
      %p95 = scmp.ne.s32.totalorder %s90, %s92
      %p96 = scmp.eq.s32.totalorder %s14, 0
      %p97 = por %p95, %p96
      %p98 = scmp.ne.s32.totalorder %s90, %s92
      %p99 = scmp.eq.s32.totalorder %s19, 1
      %p100 = por %p98, %p99
      %p101 = scmp.ne.s32.totalorder %s92, %s93
      %p102 = scmp.eq.s32.totalorder %s19, 0
      %p103 = por %p101, %p102
      %p104 = scmp.ne.s32.totalorder %s92, %s93
      %p105 = scmp.eq.s32.totalorder %s20, 1
      %p106 = por %p104, %p105
      %p108 = scmp.ne.s32.totalorder %s93, %s107
      %p109 = scmp.eq.s32.totalorder %s20, 0
      %p110 = por %p108, %p109
      %s112 = sadd.s32 %s111, 1
      %p115 = scmp.eq.s32.totalorder %s14, 1
      %p116 = scmp.ne.s32.totalorder %s111, %s113
      %p117 = scmp.eq.s32.totalorder %s14, 0
      %p118 = por %p116, %p117
      %p119 = scmp.ne.s32.totalorder %s111, %s113
      %p120 = scmp.eq.s32.totalorder %s19, 1
      %p121 = por %p119, %p120
      %p122 = scmp.ne.s32.totalorder %s113, %s114
      %p123 = scmp.eq.s32.totalorder %s19, 0
      %p124 = por %p122, %p123
      %p125 = scmp.ne.s32.totalorder %s113, %s114
      %p126 = scmp.eq.s32.totalorder %s20, 1
      %p127 = por %p125, %p126
      %p129 = scmp.ne.s32.totalorder %s114, %s128
      %p130 = scmp.eq.s32.totalorder %s20, 0
      %p131 = por %p129, %p130
      %s132 = ssub.s32 %s14, %s21
      %p133 = scmp.eq.s32.totalorder %s132, 0
      %s135 = sadd.s32 %s134, 1
      %s136 = scalar_select %p133, %s134, %s135
      %p139 = pneg %p133
      %p140 = scmp.eq.s32.totalorder %s14, 1
      %p141 = por %p139, %p140
      %p142 = scmp.ne.s32.totalorder %s134, %s137
      %p143 = scmp.eq.s32.totalorder %s14, 0
      %p144 = por %p142, %p143
      %p145 = scmp.ne.s32.totalorder %s134, %s137
      %p146 = scmp.eq.s32.totalorder %s19, 1
      %p147 = por %p145, %p146
      %p148 = scmp.ne.s32.totalorder %s137, %s138
      %p149 = scmp.eq.s32.totalorder %s19, 0
      %p150 = por %p148, %p149
      %p151 = scmp.ne.s32.totalorder %s137, %s138
      %p152 = scmp.eq.s32.totalorder %s20, 1
      %p153 = por %p151, %p152
      %p155 = scmp.ne.s32.totalorder %s138, %s154
      %p156 = scmp.eq.s32.totalorder %s20, 0
      %p157 = por %p155, %p156
      %p158 = scmp.le.s32.totalorder 1, %s14
      %p159 = scmp.lt.s32.totalorder %s14, 3
      %p160 = pnand %p158, %p159
      %p161 = pneg %p160
      // Predicated region
      $region9: #{tpu_custom_call.1} parent=5 // pred_check
        _
      $region10: #{tpu_custom_call.1} parent=5 // pred_check_branch
        %163 = sbr.rel (%p160) target = $region12
      $region11: #{tpu_custom_call.1} parent=5 // pred_region
        %s164 = ssub.s32 %s14, 1
        // Predicated region
        $region13: #{tpu_custom_call.1} parent=11 // pred_check
          %p165 = pneg %p61
        $region14: #{tpu_custom_call.1} parent=11 // pred_check_branch
          %167 = sbr.rel (%p165) target = $region16
        $region15: #{tpu_custom_call.1} parent=11 // pred_region
          _
        $region16: #{tpu_custom_call.1} parent=11 // pred_fallthru
          _
        // Predicated region
        $region17: #{tpu_custom_call.1} parent=11 // pred_check
          %p168 = pneg %p82
        $region18: #{tpu_custom_call.1} parent=11 // pred_check_branch
          %170 = sbr.rel (%p168) target = $region20
        $region19: #{tpu_custom_call.1} parent=11 // pred_region
          _
        $region20: #{tpu_custom_call.1} parent=11 // pred_fallthru
          _
        // Predicated region
        $region21: #{tpu_custom_call.1} parent=11 // pred_check
          %p171 = pneg %p103
        $region22: #{tpu_custom_call.1} parent=11 // pred_check_branch
          %173 = sbr.rel (%p171) target = $region24
        $region23: #{tpu_custom_call.1} parent=11 // pred_region
          _
        $region24: #{tpu_custom_call.1} parent=11 // pred_fallthru
          _
        // Predicated region
        $region25: #{tpu_custom_call.1} parent=11 // pred_check
          %p174 = pneg %p124
        $region26: #{tpu_custom_call.1} parent=11 // pred_check_branch
          %176 = sbr.rel (%p174) target = $region28
        $region27: #{tpu_custom_call.1} parent=11 // pred_region
          _
        $region28: #{tpu_custom_call.1} parent=11 // pred_fallthru
          _
      $region12: #{tpu_custom_call.1} parent=5 // pred_fallthru
        _
      %p177 = scmp.lt.s32.totalorder %s14, 2
      // Predicated region
      $region29: #{tpu_custom_call.1} parent=5 // pred_check
        %p178 = pneg %p177
      $region30: #{tpu_custom_call.1} parent=5 // pred_check_branch
        %180 = sbr.rel (%p178) target = $region32
      $region31: #{tpu_custom_call.1} parent=5 // pred_region
        // Predicated region
        $region33: #{tpu_custom_call.1} parent=31 // pred_check
          %p181 = pneg %p34
        $region34: #{tpu_custom_call.1} parent=31 // pred_check_branch
          %183 = sbr.rel (%p181) target = $region36
        $region35: #{tpu_custom_call.1} parent=31 // pred_region
          %p184 = scmp.lt.s32.totalorder %s14, 1
          %s185 = scalar_select %p184, %s14, 1
          %s186 = smul.addr %s185, 32
          %s187 = smul.addr %s186, 8
          %s188 = scalar_lea.vmem %s0, %s187
        $region36: #{tpu_custom_call.1} parent=31 // pred_fallthru
          _
      $region32: #{tpu_custom_call.1} parent=5 // pred_fallthru
        _
      %p189 = scmp.le.s32.totalorder 1, %s14
      %p190 = scmp.lt.s32.totalorder %s14, 3
      %p191 = pnand %p189, %p190
      %p192 = pneg %p191
      // Predicated region
      $region37: #{tpu_custom_call.1} parent=5 // pred_check
        _
      $region38: #{tpu_custom_call.1} parent=5 // pred_check_branch
        %194 = sbr.rel (%p191) target = $region40
      $region39: #{tpu_custom_call.1} parent=5 // pred_region
        %s195 = ssub.s32 %s14, 1
        %p196 = scmp.lt.s32.totalorder %s19, 1
        %s197 = scalar_select %p196, %s19, 1
        %s198 = smul.addr %s197, 32
        %s199 = smul.addr %s198, 8
        %s200 = scalar_lea.vmem %s0, %s199
        %p201 = pneg %p40
        %p202 = pneg %p37
        %p203 = pneg %p61
        %p204 = pneg %p58
        %p205 = pneg %p82
        %p206 = pneg %p79
        %p207 = pneg %p103
        %p208 = pneg %p100
        %p209 = pneg %p124
        %p210 = pneg %p121
        %p211 = pneg %p150
        %p212 = pneg %p147
        %s213 = sand.u32 %s137, 1
        %s214 = scalar_lea.sflag [#allocation4], %s213
        %s215 = sand.u32 %s137, 1
        %s216 = smul.addr %s215, 256
        %s217 = scalar_lea.vmem [#allocation3], %s216
        %p218 = scmp.lt.s32.totalorder %s19, 1
        %s219 = scalar_select %p218, %s19, 1
        %s220 = smul.addr %s219, 32
        %s221 = smul.addr %s220, 8
        %s222 = scalar_lea.vmem %s0, %s221
        %vm223 = vcmask 130048
        %224 = vst.msk [vmem:[#allocation2] sm:$0xff] %vm223, 0.0
        %225 = vst.msk [vmem:[#allocation2 + $0x8] sm:$0xff] %vm223, 0.0
        %226 = vst.msk [vmem:[#allocation2 + $0x10] sm:$0xff] %vm223, 0.0
        %vm227 = vcmask 124928
        %228 = vst.msk [vmem:[#allocation2 + $0x18] sm:$0x7] %vm227, 0.0
        %229 = vst.msk [vmem:[#allocation2 + $0x20] sm:$0xff] %vm223, 0.0
        %230 = vst.msk [vmem:[#allocation2 + $0x28] sm:$0xff] %vm223, 0.0
        %231 = vst.msk [vmem:[#allocation2 + $0x30] sm:$0xff] %vm223, 0.0
        %232 = vst.msk [vmem:[#allocation2 + $0x38] sm:$0x7] %vm227, 0.0
        %233 = vst.msk [vmem:[#allocation2 + $0x40] sm:$0xff] %vm223, 0.0
        %234 = vst.msk [vmem:[#allocation2 + $0x48] sm:$0xff] %vm223, 0.0
        %235 = vst.msk [vmem:[#allocation2 + $0x50] sm:$0xff] %vm223, 0.0
        %236 = vst.msk [vmem:[#allocation2 + $0x58] sm:$0x7] %vm227, 0.0
        %s237 = scalar_lea.vmem [#allocation2], 608
        %238 = vst.msk [vmem:[%s237] sm:$0xff] %vm223, 0.0
        %239 = vst.msk [vmem:[%s237 + $0x8] sm:$0xff] %vm223, 0.0
        %240 = vst.msk [vmem:[%s237 + $0x10] sm:$0xff] %vm223, 0.0
        %241 = vst.msk [vmem:[%s237 + $0x18] sm:$0x7] %vm227, 0.0
        %242 = vst.msk [vmem:[%s237 + $0x20] sm:$0xff] %vm223, 0.0
        %243 = vst.msk [vmem:[%s237 + $0x28] sm:$0xff] %vm223, 0.0
        %244 = vst.msk [vmem:[%s237 + $0x30] sm:$0xff] %vm223, 0.0
        %245 = vst.msk [vmem:[%s237 + $0x38] sm:$0x7] %vm227, 0.0
        %246 = vst.msk [vmem:[%s237 + $0x40] sm:$0xff] %vm223, 0.0
        %247 = vst.msk [vmem:[%s237 + $0x48] sm:$0xff] %vm223, 0.0
        %248 = vst.msk [vmem:[%s237 + $0x50] sm:$0xff] %vm223, 0.0
        %249 = vst.msk [vmem:[%s237 + $0x58] sm:$0x7] %vm227, 0.0
        %250 = vst.msk [vmem:[#allocation2] sm:$0xff] %vm223, 0.0
        %251 = vst.msk [vmem:[#allocation2 + $0x20] sm:$0xff] %vm223, 0.0
        %252 = vst.msk [vmem:[#allocation2 + $0x40] sm:$0xff] %vm223, 0.0
        %253 = vst.msk [vmem:[#allocation2 + $0x60] sm:$0xff] %vm223, 0.0
        %254 = vst.msk [vmem:[#allocation2 + $0x80] sm:$0xff] %vm223, 0.0
        %255 = vst.msk [vmem:[#allocation2 + $0xa0] sm:$0xff] %vm223, 0.0
        %256 = vst.msk [vmem:[#allocation2 + $0xc0] sm:$0xff] %vm223, 0.0
        %257 = vst.msk [vmem:[#allocation2 + $0xe0] sm:$0xff] %vm223, 0.0
        %258 = vst.msk [vmem:[#allocation2 + $0x100] sm:$0xff] %vm223, 0.0
        %259 = vst.msk [vmem:[#allocation2 + $0x120] sm:$0xff] %vm223, 0.0
        %260 = vst.msk [vmem:[#allocation2 + $0x140] sm:$0xff] %vm223, 0.0
        %261 = vst.msk [vmem:[#allocation2 + $0x160] sm:$0xff] %vm223, 0.0
        %262 = vst.msk [vmem:[#allocation2 + $0x180] sm:$0xff] %vm223, 0.0
        %263 = vst.msk [vmem:[#allocation2 + $0x1a0] sm:$0xff] %vm223, 0.0
        %264 = vst.msk [vmem:[#allocation2 + $0x1c0] sm:$0xff] %vm223, 0.0
        %265 = vst.msk [vmem:[#allocation2 + $0x1e0] sm:$0xff] %vm223, 0.0
        %266 = vst.msk [vmem:[#allocation2 + $0x200] sm:$0xff] %vm223, 0.0
        %267 = vst.msk [vmem:[#allocation2 + $0x220] sm:$0xff] %vm223, 0.0
        %268 = vst.msk [vmem:[#allocation2 + $0x240] sm:$0xff] %vm223, 0.0
        %269 = vst.msk [vmem:[#allocation2 + $0x260] sm:$0xff] %vm223, 0.0
        %270 = vst.msk [vmem:[#allocation2 + $0x280] sm:$0xff] %vm223, 0.0
        %271 = vst.msk [vmem:[#allocation2 + $0x2a0] sm:$0xff] %vm223, 0.0
        %272 = vst.msk [vmem:[#allocation2 + $0x18] sm:$0x7] %vm227, 0.0
        %273 = vst.msk [vmem:[#allocation2 + $0x38] sm:$0x7] %vm227, 0.0
        %274 = vst.msk [vmem:[#allocation2 + $0x58] sm:$0x7] %vm227, 0.0
        %275 = vst.msk [vmem:[#allocation2 + $0x78] sm:$0x7] %vm227, 0.0
        %276 = vst.msk [vmem:[#allocation2 + $0x98] sm:$0x7] %vm227, 0.0
        %277 = vst.msk [vmem:[#allocation2 + $0xb8] sm:$0x7] %vm227, 0.0
        %278 = vst.msk [vmem:[#allocation2 + $0xd8] sm:$0x7] %vm227, 0.0
        %279 = vst.msk [vmem:[#allocation2 + $0xf8] sm:$0x7] %vm227, 0.0
        %280 = vst.msk [vmem:[#allocation2 + $0x118] sm:$0x7] %vm227, 0.0
        %281 = vst.msk [vmem:[#allocation2 + $0x138] sm:$0x7] %vm227, 0.0
        %282 = vst.msk [vmem:[#allocation2 + $0x158] sm:$0x7] %vm227, 0.0
        %283 = vst.msk [vmem:[#allocation2 + $0x178] sm:$0x7] %vm227, 0.0
        %284 = vst.msk [vmem:[#allocation2 + $0x198] sm:$0x7] %vm227, 0.0
        %285 = vst.msk [vmem:[#allocation2 + $0x1b8] sm:$0x7] %vm227, 0.0
        %286 = vst.msk [vmem:[#allocation2 + $0x1d8] sm:$0x7] %vm227, 0.0
        %287 = vst.msk [vmem:[#allocation2 + $0x1f8] sm:$0x7] %vm227, 0.0
        %288 = vst.msk [vmem:[#allocation2 + $0x218] sm:$0x7] %vm227, 0.0
        %289 = vst.msk [vmem:[#allocation2 + $0x238] sm:$0x7] %vm227, 0.0
        %290 = vst.msk [vmem:[#allocation2 + $0x258] sm:$0x7] %vm227, 0.0
        %291 = vst.msk [vmem:[#allocation2 + $0x278] sm:$0x7] %vm227, 0.0
        %292 = vst.msk [vmem:[#allocation2 + $0x298] sm:$0x7] %vm227, 0.0
        %293 = vst.msk [vmem:[#allocation2 + $0x2b8] sm:$0x7] %vm227, 0.0
        %v294 = vld [vmem:[%s222] sm:$0xff]
        %v295 = vld [vmem:[%s222 + $0x8] sm:$0xff]
        %v296 = vld [vmem:[%s222 + $0x10] sm:$0xff]
        %v297 = vld [vmem:[%s222 + $0x18] sm:$0xff]
        %v298 = vld [vmem:[%s222 + $0x20] sm:$0xff]
        %v299 = vld [vmem:[%s222 + $0x28] sm:$0xff]
        %v300 = vld [vmem:[%s222 + $0x30] sm:$0xff]
        %v301 = vld [vmem:[%s222 + $0x38] sm:$0xff]
        %v302 = vld [vmem:[%s222 + $0x40] sm:$0xff]
        %v303 = vld [vmem:[%s222 + $0x48] sm:$0xff]
        %v304 = vld [vmem:[%s222 + $0x50] sm:$0xff]
        %v305 = vld [vmem:[%s222 + $0x58] sm:$0xff]
        %v306 = vld [vmem:[%s222 + $0x60] sm:$0xff]
        %v307 = vld [vmem:[%s222 + $0x68] sm:$0xff]
        %v308 = vld [vmem:[%s222 + $0x70] sm:$0xff]
        %v309 = vld [vmem:[%s222 + $0x78] sm:$0xff]
        %v310 = vld [vmem:[%s222 + $0x80] sm:$0xff]
        %v311 = vld [vmem:[%s222 + $0x88] sm:$0xff]
        %v312 = vld [vmem:[%s222 + $0x90] sm:$0xff]
        %v313 = vld [vmem:[%s222 + $0x98] sm:$0xff]
        %v314 = vld [vmem:[%s222 + $0xa0] sm:$0xff]
        %v315 = vld [vmem:[%s222 + $0xa8] sm:$0xff]
        %v316 = vld [vmem:[%s222 + $0xb0] sm:$0xff]
        %v317 = vld [vmem:[%s222 + $0xb8] sm:$0xff]
        %v318 = vld [vmem:[%s222 + $0xc0] sm:$0xff]
        %v319 = vld [vmem:[%s222 + $0xc8] sm:$0xff]
        %v320 = vld [vmem:[%s222 + $0xd0] sm:$0xff]
        %v321 = vld [vmem:[%s222 + $0xd8] sm:$0xff]
        %v322 = vld [vmem:[%s222 + $0xe0] sm:$0xff]
        %v323 = vld [vmem:[%s222 + $0xe8] sm:$0xff]
        %v324 = vld [vmem:[%s222 + $0xf0] sm:$0xff]
        %v325 = vld [vmem:[%s222 + $0xf8] sm:$0xff]
        %v326 = vld [vmem:[%s1] sm:$0xff]
        %vm327 = vcmask 64512
        %v329 = vsel %vm327, %v294, 0
        %v332 = vsel %vm327, %v295, 0
        %v335 = vsel %vm327, %v296, 0
        %v338 = vsel %vm327, %v297, 0
        %v341 = vsel %vm327, %v298, 0
        %v344 = vsel %vm327, %v299, 0
        %v347 = vsel %vm327, %v300, 0
        %v350 = vsel %vm327, %v301, 0
        %v353 = vsel %vm327, %v302, 0
        %v356 = vsel %vm327, %v303, 0
        %v359 = vsel %vm327, %v304, 0
        %v362 = vsel %vm327, %v305, 0
        %v365 = vsel %vm327, %v306, 0
        %v368 = vsel %vm327, %v307, 0
        %v371 = vsel %vm327, %v308, 0
        %v374 = vsel %vm327, %v309, 0
        %v377 = vsel %vm327, %v310, 0
        %v380 = vsel %vm327, %v311, 0
        %v383 = vsel %vm327, %v312, 0
        %v386 = vsel %vm327, %v313, 0
        %v389 = vsel %vm327, %v314, 0
        %v392 = vsel %vm327, %v315, 0
        %v395 = vsel %vm327, %v316, 0
        %v398 = vsel %vm327, %v317, 0
        %v401 = vsel %vm327, %v318, 0
        %v404 = vsel %vm327, %v319, 0
        %v407 = vsel %vm327, %v320, 0
        %v410 = vsel %vm327, %v321, 0
        %v413 = vsel %vm327, %v322, 0
        %v416 = vsel %vm327, %v323, 0
        %v419 = vsel %vm327, %v324, 0
        %v422 = vsel %vm327, %v325, 0
        %424 = vmatpush.msra.mxu0 0.0
        %425 = vmatpush.msra.mxu0 0.0
        %426 = vmatpush.msra.mxu0 0.0
        %427 = vmatpush.msra.mxu0 0.0
        %428 = vmatpush.msra.mxu0 0.0
        %429 = vmatpush.msra.mxu0 0.0
        %430 = vmatpush.msra.mxu0 0.0
        %431 = vmatpush.msra.mxu0 0.0
        %432 = vmatpush.msra.mxu0 0.0
        %433 = vmatpush.msra.mxu0 0.0
        %434 = vmatpush.msra.mxu0 0.0
        %435 = vmatpush.msra.mxu0 0.0
        %436 = vmatpush.msra.mxu0 0.0
        %437 = vmatpush.msra.mxu0 0.0
        %438 = vmatpush.msra.mxu0 0.0
        %v439 = vand.u32 %v326, 4294901760
        %440 = vmatpush.msra.mxu0 %v439
        %v441 = vand.u32 %v329, 4294901760
        %v442 = vsub.f32 %v329, %v441
        %v443 = vand.u32 %v442, 4294901760
        %v444 = vsub.f32 %v442, %v443
        %v445 = vand.u32 %v444, 4294901760
        %446 = vmatmul.f32.gmra.mxu0 %v445
        %v447 = vpop.f32.mrf.mxu0
        %v448 = vadd.f32 0.0, %v447
        %v449 = vand.u32 %v332, 4294901760
        %v450 = vsub.f32 %v332, %v449
        %v451 = vand.u32 %v450, 4294901760
        %v452 = vsub.f32 %v450, %v451
        %v453 = vand.u32 %v452, 4294901760
        %454 = vmatmul.f32.gmra.mxu0 %v453
        %v455 = vpop.f32.mrf.mxu0
        %v456 = vadd.f32 0.0, %v455
        %v457 = vand.u32 %v335, 4294901760
        %v458 = vsub.f32 %v335, %v457
        %v459 = vand.u32 %v458, 4294901760
        %v460 = vsub.f32 %v458, %v459
        %v461 = vand.u32 %v460, 4294901760
        %462 = vmatmul.f32.gmra.mxu0 %v461
        %v463 = vpop.f32.mrf.mxu0
        %v464 = vadd.f32 0.0, %v463
        %v465 = vand.u32 %v338, 4294901760
        %v466 = vsub.f32 %v338, %v465
        %v467 = vand.u32 %v466, 4294901760
        %v468 = vsub.f32 %v466, %v467
        %v469 = vand.u32 %v468, 4294901760
        %470 = vmatmul.f32.gmra.mxu0 %v469
        %v471 = vpop.f32.mrf.mxu0
        %v472 = vadd.f32 0.0, %v471
        %v473 = vand.u32 %v341, 4294901760
        %v474 = vsub.f32 %v341, %v473
        %v475 = vand.u32 %v474, 4294901760
        %v476 = vsub.f32 %v474, %v475
        %v477 = vand.u32 %v476, 4294901760
        %478 = vmatmul.f32.gmra.mxu0 %v477
        %v479 = vpop.f32.mrf.mxu0
        %v480 = vadd.f32 0.0, %v479
        %v481 = vand.u32 %v344, 4294901760
        %v482 = vsub.f32 %v344, %v481
        %v483 = vand.u32 %v482, 4294901760
        %v484 = vsub.f32 %v482, %v483
        %v485 = vand.u32 %v484, 4294901760
        %486 = vmatmul.f32.gmra.mxu0 %v485
        %v487 = vpop.f32.mrf.mxu0
        %v488 = vadd.f32 0.0, %v487
        %v489 = vand.u32 %v347, 4294901760
        %v490 = vsub.f32 %v347, %v489
        %v491 = vand.u32 %v490, 4294901760
        %v492 = vsub.f32 %v490, %v491
        %v493 = vand.u32 %v492, 4294901760
        %494 = vmatmul.f32.gmra.mxu0 %v493
        %v495 = vpop.f32.mrf.mxu0
        %v496 = vadd.f32 0.0, %v495
        %v497 = vand.u32 %v350, 4294901760
        %v498 = vsub.f32 %v350, %v497
        %v499 = vand.u32 %v498, 4294901760
        %v500 = vsub.f32 %v498, %v499
        %v501 = vand.u32 %v500, 4294901760
        %502 = vmatmul.f32.gmra.mxu0 %v501
        %v503 = vpop.f32.mrf.mxu0
        %v504 = vadd.f32 0.0, %v503
        %v505 = vand.u32 %v353, 4294901760
        %v506 = vsub.f32 %v353, %v505
        %v507 = vand.u32 %v506, 4294901760
        %v508 = vsub.f32 %v506, %v507
        %v509 = vand.u32 %v508, 4294901760
        %510 = vmatmul.f32.gmra.mxu0 %v509
        %v511 = vpop.f32.mrf.mxu0
        %v512 = vadd.f32 0.0, %v511
        %v513 = vand.u32 %v356, 4294901760
        %v514 = vsub.f32 %v356, %v513
        %v515 = vand.u32 %v514, 4294901760
        %v516 = vsub.f32 %v514, %v515
        %v517 = vand.u32 %v516, 4294901760
        %518 = vmatmul.f32.gmra.mxu0 %v517
        %v519 = vpop.f32.mrf.mxu0
        %v520 = vadd.f32 0.0, %v519
        %v521 = vand.u32 %v359, 4294901760
        %v522 = vsub.f32 %v359, %v521
        %v523 = vand.u32 %v522, 4294901760
        %v524 = vsub.f32 %v522, %v523
        %v525 = vand.u32 %v524, 4294901760
        %526 = vmatmul.f32.gmra.mxu0 %v525
        %v527 = vpop.f32.mrf.mxu0
        %v528 = vadd.f32 0.0, %v527
        %v529 = vand.u32 %v362, 4294901760
        %v530 = vsub.f32 %v362, %v529
        %v531 = vand.u32 %v530, 4294901760
        %v532 = vsub.f32 %v530, %v531
        %v533 = vand.u32 %v532, 4294901760
        %534 = vmatmul.f32.gmra.mxu0 %v533
        %v535 = vpop.f32.mrf.mxu0
        %v536 = vadd.f32 0.0, %v535
        %v537 = vand.u32 %v365, 4294901760
        %v538 = vsub.f32 %v365, %v537
        %v539 = vand.u32 %v538, 4294901760
        %v540 = vsub.f32 %v538, %v539
        %v541 = vand.u32 %v540, 4294901760
        %542 = vmatmul.f32.gmra.mxu0 %v541
        %v543 = vpop.f32.mrf.mxu0
        %v544 = vadd.f32 0.0, %v543
        %v545 = vand.u32 %v368, 4294901760
        %v546 = vsub.f32 %v368, %v545
        %v547 = vand.u32 %v546, 4294901760
        %v548 = vsub.f32 %v546, %v547
        %v549 = vand.u32 %v548, 4294901760
        %550 = vmatmul.f32.gmra.mxu0 %v549
        %v551 = vpop.f32.mrf.mxu0
        %v552 = vadd.f32 0.0, %v551
        %v553 = vand.u32 %v371, 4294901760
        %v554 = vsub.f32 %v371, %v553
        %v555 = vand.u32 %v554, 4294901760
        %v556 = vsub.f32 %v554, %v555
        %v557 = vand.u32 %v556, 4294901760
        %558 = vmatmul.f32.gmra.mxu0 %v557
        %v559 = vpop.f32.mrf.mxu0
        %v560 = vadd.f32 0.0, %v559
        %v561 = vand.u32 %v374, 4294901760
        %v562 = vsub.f32 %v374, %v561
        %v563 = vand.u32 %v562, 4294901760
        %v564 = vsub.f32 %v562, %v563
        %v565 = vand.u32 %v564, 4294901760
        %566 = vmatmul.f32.gmra.mxu0 %v565
        %v567 = vpop.f32.mrf.mxu0
        %v568 = vadd.f32 0.0, %v567
        %v569 = vand.u32 %v377, 4294901760
        %v570 = vsub.f32 %v377, %v569
        %v571 = vand.u32 %v570, 4294901760
        %v572 = vsub.f32 %v570, %v571
        %v573 = vand.u32 %v572, 4294901760
        %574 = vmatmul.f32.gmra.mxu0 %v573
        %v575 = vpop.f32.mrf.mxu0
        %v576 = vadd.f32 0.0, %v575
        %v577 = vand.u32 %v380, 4294901760
        %v578 = vsub.f32 %v380, %v577
        %v579 = vand.u32 %v578, 4294901760
        %v580 = vsub.f32 %v578, %v579
        %v581 = vand.u32 %v580, 4294901760
        %582 = vmatmul.f32.gmra.mxu0 %v581
        %v583 = vpop.f32.mrf.mxu0
        %v584 = vadd.f32 0.0, %v583
        %v585 = vand.u32 %v383, 4294901760
        %v586 = vsub.f32 %v383, %v585
        %v587 = vand.u32 %v586, 4294901760
        %v588 = vsub.f32 %v586, %v587
        %v589 = vand.u32 %v588, 4294901760
        %590 = vmatmul.f32.gmra.mxu0 %v589
        %v591 = vpop.f32.mrf.mxu0
        %v592 = vadd.f32 0.0, %v591
        %v593 = vand.u32 %v386, 4294901760
        %v594 = vsub.f32 %v386, %v593
        %v595 = vand.u32 %v594, 4294901760
        %v596 = vsub.f32 %v594, %v595
        %v597 = vand.u32 %v596, 4294901760
        %598 = vmatmul.f32.gmra.mxu0 %v597
        %v599 = vpop.f32.mrf.mxu0
        %v600 = vadd.f32 0.0, %v599
        %v601 = vand.u32 %v389, 4294901760
        %v602 = vsub.f32 %v389, %v601
        %v603 = vand.u32 %v602, 4294901760
        %v604 = vsub.f32 %v602, %v603
        %v605 = vand.u32 %v604, 4294901760
        %606 = vmatmul.f32.gmra.mxu0 %v605
        %v607 = vpop.f32.mrf.mxu0
        %v608 = vadd.f32 0.0, %v607
        %v609 = vand.u32 %v392, 4294901760
        %v610 = vsub.f32 %v392, %v609
        %v611 = vand.u32 %v610, 4294901760
        %v612 = vsub.f32 %v610, %v611
        %v613 = vand.u32 %v612, 4294901760
        %614 = vmatmul.f32.gmra.mxu0 %v613
        %v615 = vpop.f32.mrf.mxu0
        %v616 = vadd.f32 0.0, %v615
        %v617 = vand.u32 %v395, 4294901760
        %v618 = vsub.f32 %v395, %v617
        %v619 = vand.u32 %v618, 4294901760
        %v620 = vsub.f32 %v618, %v619
        %v621 = vand.u32 %v620, 4294901760
        %622 = vmatmul.f32.gmra.mxu0 %v621
        %v623 = vpop.f32.mrf.mxu0
        %v624 = vadd.f32 0.0, %v623
        %v625 = vand.u32 %v398, 4294901760
        %v626 = vsub.f32 %v398, %v625
        %v627 = vand.u32 %v626, 4294901760
        %v628 = vsub.f32 %v626, %v627
        %v629 = vand.u32 %v628, 4294901760
        %630 = vmatmul.f32.gmra.mxu0 %v629
        %v631 = vpop.f32.mrf.mxu0
        %v632 = vadd.f32 0.0, %v631
        %v633 = vand.u32 %v401, 4294901760
        %v634 = vsub.f32 %v401, %v633
        %v635 = vand.u32 %v634, 4294901760
        %v636 = vsub.f32 %v634, %v635
        %v637 = vand.u32 %v636, 4294901760
        %638 = vmatmul.f32.gmra.mxu0 %v637
        %v639 = vpop.f32.mrf.mxu0
        %v640 = vadd.f32 0.0, %v639
        %v641 = vand.u32 %v404, 4294901760
        %v642 = vsub.f32 %v404, %v641
        %v643 = vand.u32 %v642, 4294901760
        %v644 = vsub.f32 %v642, %v643
        %v645 = vand.u32 %v644, 4294901760
        %646 = vmatmul.f32.gmra.mxu0 %v645
        %v647 = vpop.f32.mrf.mxu0
        %v648 = vadd.f32 0.0, %v647
        %v649 = vand.u32 %v407, 4294901760
        %v650 = vsub.f32 %v407, %v649
        %v651 = vand.u32 %v650, 4294901760
        %v652 = vsub.f32 %v650, %v651
        %v653 = vand.u32 %v652, 4294901760
        %654 = vmatmul.f32.gmra.mxu0 %v653
        %v655 = vpop.f32.mrf.mxu0
        %v656 = vadd.f32 0.0, %v655
        %v657 = vand.u32 %v410, 4294901760
        %v658 = vsub.f32 %v410, %v657
        %v659 = vand.u32 %v658, 4294901760
        %v660 = vsub.f32 %v658, %v659
        %v661 = vand.u32 %v660, 4294901760
        %662 = vmatmul.f32.gmra.mxu0 %v661
        %v663 = vpop.f32.mrf.mxu0
        %v664 = vadd.f32 0.0, %v663
        %v665 = vand.u32 %v413, 4294901760
        %v666 = vsub.f32 %v413, %v665
        %v667 = vand.u32 %v666, 4294901760
        %v668 = vsub.f32 %v666, %v667
        %v669 = vand.u32 %v668, 4294901760
        %670 = vmatmul.f32.gmra.mxu0 %v669
        %v671 = vpop.f32.mrf.mxu0
        %v672 = vadd.f32 0.0, %v671
        %v673 = vand.u32 %v416, 4294901760
        %v674 = vsub.f32 %v416, %v673
        %v675 = vand.u32 %v674, 4294901760
        %v676 = vsub.f32 %v674, %v675
        %v677 = vand.u32 %v676, 4294901760
        %678 = vmatmul.f32.gmra.mxu0 %v677
        %v679 = vpop.f32.mrf.mxu0
        %v680 = vadd.f32 0.0, %v679
        %v681 = vand.u32 %v419, 4294901760
        %v682 = vsub.f32 %v419, %v681
        %v683 = vand.u32 %v682, 4294901760
        %v684 = vsub.f32 %v682, %v683
        %v685 = vand.u32 %v684, 4294901760
        %686 = vmatmul.f32.gmra.mxu0 %v685
        %v687 = vpop.f32.mrf.mxu0
        %v688 = vadd.f32 0.0, %v687
        %v689 = vand.u32 %v422, 4294901760
        %v690 = vsub.f32 %v422, %v689
        %v691 = vand.u32 %v690, 4294901760
        %v692 = vsub.f32 %v690, %v691
        %v693 = vand.u32 %v692, 4294901760
        %694 = vmatmul.f32.gmra.mxu0 %v693
        %v695 = vpop.f32.mrf.mxu0
        %v696 = vadd.f32 0.0, %v695
        %697 = vdwg.mxu0
        %698 = vmatpush.msra.mxu0 0.0
        %699 = vmatpush.msra.mxu0 0.0
        %700 = vmatpush.msra.mxu0 0.0
        %701 = vmatpush.msra.mxu0 0.0
        %702 = vmatpush.msra.mxu0 0.0
        %703 = vmatpush.msra.mxu0 0.0
        %704 = vmatpush.msra.mxu0 0.0
        %705 = vmatpush.msra.mxu0 0.0
        %706 = vmatpush.msra.mxu0 0.0
        %707 = vmatpush.msra.mxu0 0.0
        %708 = vmatpush.msra.mxu0 0.0
        %709 = vmatpush.msra.mxu0 0.0
        %710 = vmatpush.msra.mxu0 0.0
        %711 = vmatpush.msra.mxu0 0.0
        %712 = vmatpush.msra.mxu0 0.0
        %v713 = vand.u32 %v326, 4294901760
        %v714 = vsub.f32 %v326, %v713
        %v715 = vand.u32 %v714, 4294901760
        %v716 = vsub.f32 %v714, %v715
        %v717 = vand.u32 %v716, 4294901760
        %718 = vmatpush.msra.mxu0 %v717
        %v719 = vand.u32 %v329, 4294901760
        %720 = vmatmul.f32.gmra.mxu0 %v719
        %v721 = vpop.f32.mrf.mxu0
        %v722 = vadd.f32 %v448, %v721
        %v723 = vand.u32 %v332, 4294901760
        %724 = vmatmul.f32.gmra.mxu0 %v723
        %v725 = vpop.f32.mrf.mxu0
        %v726 = vadd.f32 %v456, %v725
        %v727 = vand.u32 %v335, 4294901760
        %728 = vmatmul.f32.gmra.mxu0 %v727
        %v729 = vpop.f32.mrf.mxu0
        %v730 = vadd.f32 %v464, %v729
        %v731 = vand.u32 %v338, 4294901760
        %732 = vmatmul.f32.gmra.mxu0 %v731
        %v733 = vpop.f32.mrf.mxu0
        %v734 = vadd.f32 %v472, %v733
        %v735 = vand.u32 %v341, 4294901760
        %736 = vmatmul.f32.gmra.mxu0 %v735
        %v737 = vpop.f32.mrf.mxu0
        %v738 = vadd.f32 %v480, %v737
        %v739 = vand.u32 %v344, 4294901760
        %740 = vmatmul.f32.gmra.mxu0 %v739
        %v741 = vpop.f32.mrf.mxu0
        %v742 = vadd.f32 %v488, %v741
        %v743 = vand.u32 %v347, 4294901760
        %744 = vmatmul.f32.gmra.mxu0 %v743
        %v745 = vpop.f32.mrf.mxu0
        %v746 = vadd.f32 %v496, %v745
        %v747 = vand.u32 %v350, 4294901760
        %748 = vmatmul.f32.gmra.mxu0 %v747
        %v749 = vpop.f32.mrf.mxu0
        %v750 = vadd.f32 %v504, %v749
        %v751 = vand.u32 %v353, 4294901760
        %752 = vmatmul.f32.gmra.mxu0 %v751
        %v753 = vpop.f32.mrf.mxu0
        %v754 = vadd.f32 %v512, %v753
        %v755 = vand.u32 %v356, 4294901760
        %756 = vmatmul.f32.gmra.mxu0 %v755
        %v757 = vpop.f32.mrf.mxu0
        %v758 = vadd.f32 %v520, %v757
        %v759 = vand.u32 %v359, 4294901760
        %760 = vmatmul.f32.gmra.mxu0 %v759
        %v761 = vpop.f32.mrf.mxu0
        %v762 = vadd.f32 %v528, %v761
        %v763 = vand.u32 %v362, 4294901760
        %764 = vmatmul.f32.gmra.mxu0 %v763
        %v765 = vpop.f32.mrf.mxu0
        %v766 = vadd.f32 %v536, %v765
        %v767 = vand.u32 %v365, 4294901760
        %768 = vmatmul.f32.gmra.mxu0 %v767
        %v769 = vpop.f32.mrf.mxu0
        %v770 = vadd.f32 %v544, %v769
        %v771 = vand.u32 %v368, 4294901760
        %772 = vmatmul.f32.gmra.mxu0 %v771
        %v773 = vpop.f32.mrf.mxu0
        %v774 = vadd.f32 %v552, %v773
        %v775 = vand.u32 %v371, 4294901760
        %776 = vmatmul.f32.gmra.mxu0 %v775
        %v777 = vpop.f32.mrf.mxu0
        %v778 = vadd.f32 %v560, %v777
        %v779 = vand.u32 %v374, 4294901760
        %780 = vmatmul.f32.gmra.mxu0 %v779
        %v781 = vpop.f32.mrf.mxu0
        %v782 = vadd.f32 %v568, %v781
        %v783 = vand.u32 %v377, 4294901760
        %784 = vmatmul.f32.gmra.mxu0 %v783
        %v785 = vpop.f32.mrf.mxu0
        %v786 = vadd.f32 %v576, %v785
        %v787 = vand.u32 %v380, 4294901760
        %788 = vmatmul.f32.gmra.mxu0 %v787
        %v789 = vpop.f32.mrf.mxu0
        %v790 = vadd.f32 %v584, %v789
        %v791 = vand.u32 %v383, 4294901760
        %792 = vmatmul.f32.gmra.mxu0 %v791
        %v793 = vpop.f32.mrf.mxu0
        %v794 = vadd.f32 %v592, %v793
        %v795 = vand.u32 %v386, 4294901760
        %796 = vmatmul.f32.gmra.mxu0 %v795
        %v797 = vpop.f32.mrf.mxu0
        %v798 = vadd.f32 %v600, %v797
        %v799 = vand.u32 %v389, 4294901760
        %800 = vmatmul.f32.gmra.mxu0 %v799
        %v801 = vpop.f32.mrf.mxu0
        %v802 = vadd.f32 %v608, %v801
        %v803 = vand.u32 %v392, 4294901760
        %804 = vmatmul.f32.gmra.mxu0 %v803
        %v805 = vpop.f32.mrf.mxu0
        %v806 = vadd.f32 %v616, %v805
        %v807 = vand.u32 %v395, 4294901760
        %808 = vmatmul.f32.gmra.mxu0 %v807
        %v809 = vpop.f32.mrf.mxu0
        %v810 = vadd.f32 %v624, %v809
        %v811 = vand.u32 %v398, 4294901760
        %812 = vmatmul.f32.gmra.mxu0 %v811
        %v813 = vpop.f32.mrf.mxu0
        %v814 = vadd.f32 %v632, %v813
        %v815 = vand.u32 %v401, 4294901760
        %816 = vmatmul.f32.gmra.mxu0 %v815
        %v817 = vpop.f32.mrf.mxu0
        %v818 = vadd.f32 %v640, %v817
        %v819 = vand.u32 %v404, 4294901760
        %820 = vmatmul.f32.gmra.mxu0 %v819
        %v821 = vpop.f32.mrf.mxu0
        %v822 = vadd.f32 %v648, %v821
        %v823 = vand.u32 %v407, 4294901760
        %824 = vmatmul.f32.gmra.mxu0 %v823
        %v825 = vpop.f32.mrf.mxu0
        %v826 = vadd.f32 %v656, %v825
        %v827 = vand.u32 %v410, 4294901760
        %828 = vmatmul.f32.gmra.mxu0 %v827
        %v829 = vpop.f32.mrf.mxu0
        %v830 = vadd.f32 %v664, %v829
        %v831 = vand.u32 %v413, 4294901760
        %832 = vmatmul.f32.gmra.mxu0 %v831
        %v833 = vpop.f32.mrf.mxu0
        %v834 = vadd.f32 %v672, %v833
        %v835 = vand.u32 %v416, 4294901760
        %836 = vmatmul.f32.gmra.mxu0 %v835
        %v837 = vpop.f32.mrf.mxu0
        %v838 = vadd.f32 %v680, %v837
        %v839 = vand.u32 %v419, 4294901760
        %840 = vmatmul.f32.gmra.mxu0 %v839
        %v841 = vpop.f32.mrf.mxu0
        %v842 = vadd.f32 %v688, %v841
        %v843 = vand.u32 %v422, 4294901760
        %844 = vmatmul.f32.gmra.mxu0 %v843
        %v845 = vpop.f32.mrf.mxu0
        %v846 = vadd.f32 %v696, %v845
        %847 = vdwg.mxu0
        %848 = vmatpush.msra.mxu0 0.0
        %849 = vmatpush.msra.mxu0 0.0
        %850 = vmatpush.msra.mxu0 0.0
        %851 = vmatpush.msra.mxu0 0.0
        %852 = vmatpush.msra.mxu0 0.0
        %853 = vmatpush.msra.mxu0 0.0
        %854 = vmatpush.msra.mxu0 0.0
        %855 = vmatpush.msra.mxu0 0.0
        %856 = vmatpush.msra.mxu0 0.0
        %857 = vmatpush.msra.mxu0 0.0
        %858 = vmatpush.msra.mxu0 0.0
        %859 = vmatpush.msra.mxu0 0.0
        %860 = vmatpush.msra.mxu0 0.0
        %861 = vmatpush.msra.mxu0 0.0
        %862 = vmatpush.msra.mxu0 0.0
        %v863 = vand.u32 %v326, 4294901760
        %v864 = vsub.f32 %v326, %v863
        %865 = vmatpush.msra.mxu0 %v864
        %v866 = vand.u32 %v329, 4294901760
        %v867 = vsub.f32 %v329, %v866
        %868 = vmatmul.f32.gmra.mxu0 %v867
        %v869 = vpop.f32.mrf.mxu0
        %v870 = vadd.f32 %v722, %v869
        %v871 = vand.u32 %v332, 4294901760
        %v872 = vsub.f32 %v332, %v871
        %873 = vmatmul.f32.gmra.mxu0 %v872
        %v874 = vpop.f32.mrf.mxu0
        %v875 = vadd.f32 %v726, %v874
        %v876 = vand.u32 %v335, 4294901760
        %v877 = vsub.f32 %v335, %v876
        %878 = vmatmul.f32.gmra.mxu0 %v877
        %v879 = vpop.f32.mrf.mxu0
        %v880 = vadd.f32 %v730, %v879
        %v881 = vand.u32 %v338, 4294901760
        %v882 = vsub.f32 %v338, %v881
        %883 = vmatmul.f32.gmra.mxu0 %v882
        %v884 = vpop.f32.mrf.mxu0
        %v885 = vadd.f32 %v734, %v884
        %v886 = vand.u32 %v341, 4294901760
        %v887 = vsub.f32 %v341, %v886
        %888 = vmatmul.f32.gmra.mxu0 %v887
        %v889 = vpop.f32.mrf.mxu0
        %v890 = vadd.f32 %v738, %v889
        %v891 = vand.u32 %v344, 4294901760
        %v892 = vsub.f32 %v344, %v891
        %893 = vmatmul.f32.gmra.mxu0 %v892
        %v894 = vpop.f32.mrf.mxu0
        %v895 = vadd.f32 %v742, %v894
        %v896 = vand.u32 %v347, 4294901760
        %v897 = vsub.f32 %v347, %v896
        %898 = vmatmul.f32.gmra.mxu0 %v897
        %v899 = vpop.f32.mrf.mxu0
        %v900 = vadd.f32 %v746, %v899
        %v901 = vand.u32 %v350, 4294901760
        %v902 = vsub.f32 %v350, %v901
        %903 = vmatmul.f32.gmra.mxu0 %v902
        %v904 = vpop.f32.mrf.mxu0
        %v905 = vadd.f32 %v750, %v904
        %v906 = vand.u32 %v353, 4294901760
        %v907 = vsub.f32 %v353, %v906
        %908 = vmatmul.f32.gmra.mxu0 %v907
        %v909 = vpop.f32.mrf.mxu0
        %v910 = vadd.f32 %v754, %v909
        %v911 = vand.u32 %v356, 4294901760
        %v912 = vsub.f32 %v356, %v911
        %913 = vmatmul.f32.gmra.mxu0 %v912
        %v914 = vpop.f32.mrf.mxu0
        %v915 = vadd.f32 %v758, %v914
        %v916 = vand.u32 %v359, 4294901760
        %v917 = vsub.f32 %v359, %v916
        %918 = vmatmul.f32.gmra.mxu0 %v917
        %v919 = vpop.f32.mrf.mxu0
        %v920 = vadd.f32 %v762, %v919
        %v921 = vand.u32 %v362, 4294901760
        %v922 = vsub.f32 %v362, %v921
        %923 = vmatmul.f32.gmra.mxu0 %v922
        %v924 = vpop.f32.mrf.mxu0
        %v925 = vadd.f32 %v766, %v924
        %v926 = vand.u32 %v365, 4294901760
        %v927 = vsub.f32 %v365, %v926
        %928 = vmatmul.f32.gmra.mxu0 %v927
        %v929 = vpop.f32.mrf.mxu0
        %v930 = vadd.f32 %v770, %v929
        %v931 = vand.u32 %v368, 4294901760
        %v932 = vsub.f32 %v368, %v931
        %933 = vmatmul.f32.gmra.mxu0 %v932
        %v934 = vpop.f32.mrf.mxu0
        %v935 = vadd.f32 %v774, %v934
        %v936 = vand.u32 %v371, 4294901760
        %v937 = vsub.f32 %v371, %v936
        %938 = vmatmul.f32.gmra.mxu0 %v937
        %v939 = vpop.f32.mrf.mxu0
        %v940 = vadd.f32 %v778, %v939
        %v941 = vand.u32 %v374, 4294901760
        %v942 = vsub.f32 %v374, %v941
        %943 = vmatmul.f32.gmra.mxu0 %v942
        %v944 = vpop.f32.mrf.mxu0
        %v945 = vadd.f32 %v782, %v944
        %v946 = vand.u32 %v377, 4294901760
        %v947 = vsub.f32 %v377, %v946
        %948 = vmatmul.f32.gmra.mxu0 %v947
        %v949 = vpop.f32.mrf.mxu0
        %v950 = vadd.f32 %v786, %v949
        %v951 = vand.u32 %v380, 4294901760
        %v952 = vsub.f32 %v380, %v951
        %953 = vmatmul.f32.gmra.mxu0 %v952
        %v954 = vpop.f32.mrf.mxu0
        %v955 = vadd.f32 %v790, %v954
        %v956 = vand.u32 %v383, 4294901760
        %v957 = vsub.f32 %v383, %v956
        %958 = vmatmul.f32.gmra.mxu0 %v957
        %v959 = vpop.f32.mrf.mxu0
        %v960 = vadd.f32 %v794, %v959
        %v961 = vand.u32 %v386, 4294901760
        %v962 = vsub.f32 %v386, %v961
        %963 = vmatmul.f32.gmra.mxu0 %v962
        %v964 = vpop.f32.mrf.mxu0
        %v965 = vadd.f32 %v798, %v964
        %v966 = vand.u32 %v389, 4294901760
        %v967 = vsub.f32 %v389, %v966
        %968 = vmatmul.f32.gmra.mxu0 %v967
        %v969 = vpop.f32.mrf.mxu0
        %v970 = vadd.f32 %v802, %v969
        %v971 = vand.u32 %v392, 4294901760
        %v972 = vsub.f32 %v392, %v971
        %973 = vmatmul.f32.gmra.mxu0 %v972
        %v974 = vpop.f32.mrf.mxu0
        %v975 = vadd.f32 %v806, %v974
        %v976 = vand.u32 %v395, 4294901760
        %v977 = vsub.f32 %v395, %v976
        %978 = vmatmul.f32.gmra.mxu0 %v977
        %v979 = vpop.f32.mrf.mxu0
        %v980 = vadd.f32 %v810, %v979
        %v981 = vand.u32 %v398, 4294901760
        %v982 = vsub.f32 %v398, %v981
        %983 = vmatmul.f32.gmra.mxu0 %v982
        %v984 = vpop.f32.mrf.mxu0
        %v985 = vadd.f32 %v814, %v984
        %v986 = vand.u32 %v401, 4294901760
        %v987 = vsub.f32 %v401, %v986
        %988 = vmatmul.f32.gmra.mxu0 %v987
        %v989 = vpop.f32.mrf.mxu0
        %v990 = vadd.f32 %v818, %v989
        %v991 = vand.u32 %v404, 4294901760
        %v992 = vsub.f32 %v404, %v991
        %993 = vmatmul.f32.gmra.mxu0 %v992
        %v994 = vpop.f32.mrf.mxu0
        %v995 = vadd.f32 %v822, %v994
        %v996 = vand.u32 %v407, 4294901760
        %v997 = vsub.f32 %v407, %v996
        %998 = vmatmul.f32.gmra.mxu0 %v997
        %v999 = vpop.f32.mrf.mxu0
        %v1000 = vadd.f32 %v826, %v999
        %v1001 = vand.u32 %v410, 4294901760
        %v1002 = vsub.f32 %v410, %v1001
        %1003 = vmatmul.f32.gmra.mxu0 %v1002
        %v1004 = vpop.f32.mrf.mxu0
        %v1005 = vadd.f32 %v830, %v1004
        %v1006 = vand.u32 %v413, 4294901760
        %v1007 = vsub.f32 %v413, %v1006
        %1008 = vmatmul.f32.gmra.mxu0 %v1007
        %v1009 = vpop.f32.mrf.mxu0
        %v1010 = vadd.f32 %v834, %v1009
        %v1011 = vand.u32 %v416, 4294901760
        %v1012 = vsub.f32 %v416, %v1011
        %1013 = vmatmul.f32.gmra.mxu0 %v1012
        %v1014 = vpop.f32.mrf.mxu0
        %v1015 = vadd.f32 %v838, %v1014
        %v1016 = vand.u32 %v419, 4294901760
        %v1017 = vsub.f32 %v419, %v1016
        %1018 = vmatmul.f32.gmra.mxu0 %v1017
        %v1019 = vpop.f32.mrf.mxu0
        %v1020 = vadd.f32 %v842, %v1019
        %v1021 = vand.u32 %v422, 4294901760
        %v1022 = vsub.f32 %v422, %v1021
        %1023 = vmatmul.f32.gmra.mxu0 %v1022
        %v1024 = vpop.f32.mrf.mxu0
        %v1025 = vadd.f32 %v846, %v1024
        %1026 = vdwg.mxu0
        %1027 = vmatpush.msra.mxu0 0.0
        %1028 = vmatpush.msra.mxu0 0.0
        %1029 = vmatpush.msra.mxu0 0.0
        %1030 = vmatpush.msra.mxu0 0.0
        %1031 = vmatpush.msra.mxu0 0.0
        %1032 = vmatpush.msra.mxu0 0.0
        %1033 = vmatpush.msra.mxu0 0.0
        %1034 = vmatpush.msra.mxu0 0.0
        %1035 = vmatpush.msra.mxu0 0.0
        %1036 = vmatpush.msra.mxu0 0.0
        %1037 = vmatpush.msra.mxu0 0.0
        %1038 = vmatpush.msra.mxu0 0.0
        %1039 = vmatpush.msra.mxu0 0.0
        %1040 = vmatpush.msra.mxu0 0.0
        %1041 = vmatpush.msra.mxu0 0.0
        %v1042 = vand.u32 %v326, 4294901760
        %1043 = vmatpush.msra.mxu0 %v1042
        %v1044 = vand.u32 %v329, 4294901760
        %v1045 = vsub.f32 %v329, %v1044
        %v1046 = vand.u32 %v1045, 4294901760
        %1047 = vmatmul.f32.gmra.mxu0 %v1046
        %v1048 = vpop.f32.mrf.mxu0
        %v1049 = vadd.f32 %v870, %v1048
        %v1050 = vand.u32 %v332, 4294901760
        %v1051 = vsub.f32 %v332, %v1050
        %v1052 = vand.u32 %v1051, 4294901760
        %1053 = vmatmul.f32.gmra.mxu0 %v1052
        %v1054 = vpop.f32.mrf.mxu0
        %v1055 = vadd.f32 %v875, %v1054
        %v1056 = vand.u32 %v335, 4294901760
        %v1057 = vsub.f32 %v335, %v1056
        %v1058 = vand.u32 %v1057, 4294901760
        %1059 = vmatmul.f32.gmra.mxu0 %v1058
        %v1060 = vpop.f32.mrf.mxu0
        %v1061 = vadd.f32 %v880, %v1060
        %v1062 = vand.u32 %v338, 4294901760
        %v1063 = vsub.f32 %v338, %v1062
        %v1064 = vand.u32 %v1063, 4294901760
        %1065 = vmatmul.f32.gmra.mxu0 %v1064
        %v1066 = vpop.f32.mrf.mxu0
        %v1067 = vadd.f32 %v885, %v1066
        %v1068 = vand.u32 %v341, 4294901760
        %v1069 = vsub.f32 %v341, %v1068
        %v1070 = vand.u32 %v1069, 4294901760
        %1071 = vmatmul.f32.gmra.mxu0 %v1070
        %v1072 = vpop.f32.mrf.mxu0
        %v1073 = vadd.f32 %v890, %v1072
        %v1074 = vand.u32 %v344, 4294901760
        %v1075 = vsub.f32 %v344, %v1074
        %v1076 = vand.u32 %v1075, 4294901760
        %1077 = vmatmul.f32.gmra.mxu0 %v1076
        %v1078 = vpop.f32.mrf.mxu0
        %v1079 = vadd.f32 %v895, %v1078
        %v1080 = vand.u32 %v347, 4294901760
        %v1081 = vsub.f32 %v347, %v1080
        %v1082 = vand.u32 %v1081, 4294901760
        %1083 = vmatmul.f32.gmra.mxu0 %v1082
        %v1084 = vpop.f32.mrf.mxu0
        %v1085 = vadd.f32 %v900, %v1084
        %v1086 = vand.u32 %v350, 4294901760
        %v1087 = vsub.f32 %v350, %v1086
        %v1088 = vand.u32 %v1087, 4294901760
        %1089 = vmatmul.f32.gmra.mxu0 %v1088
        %v1090 = vpop.f32.mrf.mxu0
        %v1091 = vadd.f32 %v905, %v1090
        %v1092 = vand.u32 %v353, 4294901760
        %v1093 = vsub.f32 %v353, %v1092
        %v1094 = vand.u32 %v1093, 4294901760
        %1095 = vmatmul.f32.gmra.mxu0 %v1094
        %v1096 = vpop.f32.mrf.mxu0
        %v1097 = vadd.f32 %v910, %v1096
        %v1098 = vand.u32 %v356, 4294901760
        %v1099 = vsub.f32 %v356, %v1098
        %v1100 = vand.u32 %v1099, 4294901760
        %1101 = vmatmul.f32.gmra.mxu0 %v1100
        %v1102 = vpop.f32.mrf.mxu0
        %v1103 = vadd.f32 %v915, %v1102
        %v1104 = vand.u32 %v359, 4294901760
        %v1105 = vsub.f32 %v359, %v1104
        %v1106 = vand.u32 %v1105, 4294901760
        %1107 = vmatmul.f32.gmra.mxu0 %v1106
        %v1108 = vpop.f32.mrf.mxu0
        %v1109 = vadd.f32 %v920, %v1108
        %v1110 = vand.u32 %v362, 4294901760
        %v1111 = vsub.f32 %v362, %v1110
        %v1112 = vand.u32 %v1111, 4294901760
        %1113 = vmatmul.f32.gmra.mxu0 %v1112
        %v1114 = vpop.f32.mrf.mxu0
        %v1115 = vadd.f32 %v925, %v1114
        %v1116 = vand.u32 %v365, 4294901760
        %v1117 = vsub.f32 %v365, %v1116
        %v1118 = vand.u32 %v1117, 4294901760
        %1119 = vmatmul.f32.gmra.mxu0 %v1118
        %v1120 = vpop.f32.mrf.mxu0
        %v1121 = vadd.f32 %v930, %v1120
        %v1122 = vand.u32 %v368, 4294901760
        %v1123 = vsub.f32 %v368, %v1122
        %v1124 = vand.u32 %v1123, 4294901760
        %1125 = vmatmul.f32.gmra.mxu0 %v1124
        %v1126 = vpop.f32.mrf.mxu0
        %v1127 = vadd.f32 %v935, %v1126
        %v1128 = vand.u32 %v371, 4294901760
        %v1129 = vsub.f32 %v371, %v1128
        %v1130 = vand.u32 %v1129, 4294901760
        %1131 = vmatmul.f32.gmra.mxu0 %v1130
        %v1132 = vpop.f32.mrf.mxu0
        %v1133 = vadd.f32 %v940, %v1132
        %v1134 = vand.u32 %v374, 4294901760
        %v1135 = vsub.f32 %v374, %v1134
        %v1136 = vand.u32 %v1135, 4294901760
        %1137 = vmatmul.f32.gmra.mxu0 %v1136
        %v1138 = vpop.f32.mrf.mxu0
        %v1139 = vadd.f32 %v945, %v1138
        %v1140 = vand.u32 %v377, 4294901760
        %v1141 = vsub.f32 %v377, %v1140
        %v1142 = vand.u32 %v1141, 4294901760
        %1143 = vmatmul.f32.gmra.mxu0 %v1142
        %v1144 = vpop.f32.mrf.mxu0
        %v1145 = vadd.f32 %v950, %v1144
        %v1146 = vand.u32 %v380, 4294901760
        %v1147 = vsub.f32 %v380, %v1146
        %v1148 = vand.u32 %v1147, 4294901760
        %1149 = vmatmul.f32.gmra.mxu0 %v1148
        %v1150 = vpop.f32.mrf.mxu0
        %v1151 = vadd.f32 %v955, %v1150
        %v1152 = vand.u32 %v383, 4294901760
        %v1153 = vsub.f32 %v383, %v1152
        %v1154 = vand.u32 %v1153, 4294901760
        %1155 = vmatmul.f32.gmra.mxu0 %v1154
        %v1156 = vpop.f32.mrf.mxu0
        %v1157 = vadd.f32 %v960, %v1156
        %v1158 = vand.u32 %v386, 4294901760
        %v1159 = vsub.f32 %v386, %v1158
        %v1160 = vand.u32 %v1159, 4294901760
        %1161 = vmatmul.f32.gmra.mxu0 %v1160
        %v1162 = vpop.f32.mrf.mxu0
        %v1163 = vadd.f32 %v965, %v1162
        %v1164 = vand.u32 %v389, 4294901760
        %v1165 = vsub.f32 %v389, %v1164
        %v1166 = vand.u32 %v1165, 4294901760
        %1167 = vmatmul.f32.gmra.mxu0 %v1166
        %v1168 = vpop.f32.mrf.mxu0
        %v1169 = vadd.f32 %v970, %v1168
        %v1170 = vand.u32 %v392, 4294901760
        %v1171 = vsub.f32 %v392, %v1170
        %v1172 = vand.u32 %v1171, 4294901760
        %1173 = vmatmul.f32.gmra.mxu0 %v1172
        %v1174 = vpop.f32.mrf.mxu0
        %v1175 = vadd.f32 %v975, %v1174
        %v1176 = vand.u32 %v395, 4294901760
        %v1177 = vsub.f32 %v395, %v1176
        %v1178 = vand.u32 %v1177, 4294901760
        %1179 = vmatmul.f32.gmra.mxu0 %v1178
        %v1180 = vpop.f32.mrf.mxu0
        %v1181 = vadd.f32 %v980, %v1180
        %v1182 = vand.u32 %v398, 4294901760
        %v1183 = vsub.f32 %v398, %v1182
        %v1184 = vand.u32 %v1183, 4294901760
        %1185 = vmatmul.f32.gmra.mxu0 %v1184
        %v1186 = vpop.f32.mrf.mxu0
        %v1187 = vadd.f32 %v985, %v1186
        %v1188 = vand.u32 %v401, 4294901760
        %v1189 = vsub.f32 %v401, %v1188
        %v1190 = vand.u32 %v1189, 4294901760
        %1191 = vmatmul.f32.gmra.mxu0 %v1190
        %v1192 = vpop.f32.mrf.mxu0
        %v1193 = vadd.f32 %v990, %v1192
        %v1194 = vand.u32 %v404, 4294901760
        %v1195 = vsub.f32 %v404, %v1194
        %v1196 = vand.u32 %v1195, 4294901760
        %1197 = vmatmul.f32.gmra.mxu0 %v1196
        %v1198 = vpop.f32.mrf.mxu0
        %v1199 = vadd.f32 %v995, %v1198
        %v1200 = vand.u32 %v407, 4294901760
        %v1201 = vsub.f32 %v407, %v1200
        %v1202 = vand.u32 %v1201, 4294901760
        %1203 = vmatmul.f32.gmra.mxu0 %v1202
        %v1204 = vpop.f32.mrf.mxu0
        %v1205 = vadd.f32 %v1000, %v1204
        %v1206 = vand.u32 %v410, 4294901760
        %v1207 = vsub.f32 %v410, %v1206
        %v1208 = vand.u32 %v1207, 4294901760
        %1209 = vmatmul.f32.gmra.mxu0 %v1208
        %v1210 = vpop.f32.mrf.mxu0
        %v1211 = vadd.f32 %v1005, %v1210
        %v1212 = vand.u32 %v413, 4294901760
        %v1213 = vsub.f32 %v413, %v1212
        %v1214 = vand.u32 %v1213, 4294901760
        %1215 = vmatmul.f32.gmra.mxu0 %v1214
        %v1216 = vpop.f32.mrf.mxu0
        %v1217 = vadd.f32 %v1010, %v1216
        %v1218 = vand.u32 %v416, 4294901760
        %v1219 = vsub.f32 %v416, %v1218
        %v1220 = vand.u32 %v1219, 4294901760
        %1221 = vmatmul.f32.gmra.mxu0 %v1220
        %v1222 = vpop.f32.mrf.mxu0
        %v1223 = vadd.f32 %v1015, %v1222
        %v1224 = vand.u32 %v419, 4294901760
        %v1225 = vsub.f32 %v419, %v1224
        %v1226 = vand.u32 %v1225, 4294901760
        %1227 = vmatmul.f32.gmra.mxu0 %v1226
        %v1228 = vpop.f32.mrf.mxu0
        %v1229 = vadd.f32 %v1020, %v1228
        %v1230 = vand.u32 %v422, 4294901760
        %v1231 = vsub.f32 %v422, %v1230
        %v1232 = vand.u32 %v1231, 4294901760
        %1233 = vmatmul.f32.gmra.mxu0 %v1232
        %v1234 = vpop.f32.mrf.mxu0
        %v1235 = vadd.f32 %v1025, %v1234
        %1236 = vdwg.mxu0
        %1237 = vmatpush.msra.mxu0 0.0
        %1238 = vmatpush.msra.mxu0 0.0
        %1239 = vmatpush.msra.mxu0 0.0
        %1240 = vmatpush.msra.mxu0 0.0
        %1241 = vmatpush.msra.mxu0 0.0
        %1242 = vmatpush.msra.mxu0 0.0
        %1243 = vmatpush.msra.mxu0 0.0
        %1244 = vmatpush.msra.mxu0 0.0
        %1245 = vmatpush.msra.mxu0 0.0
        %1246 = vmatpush.msra.mxu0 0.0
        %1247 = vmatpush.msra.mxu0 0.0
        %1248 = vmatpush.msra.mxu0 0.0
        %1249 = vmatpush.msra.mxu0 0.0
        %1250 = vmatpush.msra.mxu0 0.0
        %1251 = vmatpush.msra.mxu0 0.0
        %v1252 = vand.u32 %v326, 4294901760
        %v1253 = vsub.f32 %v326, %v1252
        %v1254 = vand.u32 %v1253, 4294901760
        %1255 = vmatpush.msra.mxu0 %v1254
        %v1256 = vand.u32 %v329, 4294901760
        %1257 = vmatmul.f32.gmra.mxu0 %v1256
        %v1258 = vpop.f32.mrf.mxu0
        %v1259 = vadd.f32 %v1049, %v1258
        %v1260 = vand.u32 %v332, 4294901760
        %1261 = vmatmul.f32.gmra.mxu0 %v1260
        %v1262 = vpop.f32.mrf.mxu0
        %v1263 = vadd.f32 %v1055, %v1262
        %v1264 = vand.u32 %v335, 4294901760
        %1265 = vmatmul.f32.gmra.mxu0 %v1264
        %v1266 = vpop.f32.mrf.mxu0
        %v1267 = vadd.f32 %v1061, %v1266
        %v1268 = vand.u32 %v338, 4294901760
        %1269 = vmatmul.f32.gmra.mxu0 %v1268
        %v1270 = vpop.f32.mrf.mxu0
        %v1271 = vadd.f32 %v1067, %v1270
        %v1272 = vand.u32 %v341, 4294901760
        %1273 = vmatmul.f32.gmra.mxu0 %v1272
        %v1274 = vpop.f32.mrf.mxu0
        %v1275 = vadd.f32 %v1073, %v1274
        %v1276 = vand.u32 %v344, 4294901760
        %1277 = vmatmul.f32.gmra.mxu0 %v1276
        %v1278 = vpop.f32.mrf.mxu0
        %v1279 = vadd.f32 %v1079, %v1278
        %v1280 = vand.u32 %v347, 4294901760
        %1281 = vmatmul.f32.gmra.mxu0 %v1280
        %v1282 = vpop.f32.mrf.mxu0
        %v1283 = vadd.f32 %v1085, %v1282
        %v1284 = vand.u32 %v350, 4294901760
        %1285 = vmatmul.f32.gmra.mxu0 %v1284
        %v1286 = vpop.f32.mrf.mxu0
        %v1287 = vadd.f32 %v1091, %v1286
        %v1288 = vand.u32 %v353, 4294901760
        %1289 = vmatmul.f32.gmra.mxu0 %v1288
        %v1290 = vpop.f32.mrf.mxu0
        %v1291 = vadd.f32 %v1097, %v1290
        %v1292 = vand.u32 %v356, 4294901760
        %1293 = vmatmul.f32.gmra.mxu0 %v1292
        %v1294 = vpop.f32.mrf.mxu0
        %v1295 = vadd.f32 %v1103, %v1294
        %v1296 = vand.u32 %v359, 4294901760
        %1297 = vmatmul.f32.gmra.mxu0 %v1296
        %v1298 = vpop.f32.mrf.mxu0
        %v1299 = vadd.f32 %v1109, %v1298
        %v1300 = vand.u32 %v362, 4294901760
        %1301 = vmatmul.f32.gmra.mxu0 %v1300
        %v1302 = vpop.f32.mrf.mxu0
        %v1303 = vadd.f32 %v1115, %v1302
        %v1304 = vand.u32 %v365, 4294901760
        %1305 = vmatmul.f32.gmra.mxu0 %v1304
        %v1306 = vpop.f32.mrf.mxu0
        %v1307 = vadd.f32 %v1121, %v1306
        %v1308 = vand.u32 %v368, 4294901760
        %1309 = vmatmul.f32.gmra.mxu0 %v1308
        %v1310 = vpop.f32.mrf.mxu0
        %v1311 = vadd.f32 %v1127, %v1310
        %v1312 = vand.u32 %v371, 4294901760
        %1313 = vmatmul.f32.gmra.mxu0 %v1312
        %v1314 = vpop.f32.mrf.mxu0
        %v1315 = vadd.f32 %v1133, %v1314
        %v1316 = vand.u32 %v374, 4294901760
        %1317 = vmatmul.f32.gmra.mxu0 %v1316
        %v1318 = vpop.f32.mrf.mxu0
        %v1319 = vadd.f32 %v1139, %v1318
        %v1320 = vand.u32 %v377, 4294901760
        %1321 = vmatmul.f32.gmra.mxu0 %v1320
        %v1322 = vpop.f32.mrf.mxu0
        %v1323 = vadd.f32 %v1145, %v1322
        %v1324 = vand.u32 %v380, 4294901760
        %1325 = vmatmul.f32.gmra.mxu0 %v1324
        %v1326 = vpop.f32.mrf.mxu0
        %v1327 = vadd.f32 %v1151, %v1326
        %v1328 = vand.u32 %v383, 4294901760
        %1329 = vmatmul.f32.gmra.mxu0 %v1328
        %v1330 = vpop.f32.mrf.mxu0
        %v1331 = vadd.f32 %v1157, %v1330
        %v1332 = vand.u32 %v386, 4294901760
        %1333 = vmatmul.f32.gmra.mxu0 %v1332
        %v1334 = vpop.f32.mrf.mxu0
        %v1335 = vadd.f32 %v1163, %v1334
        %v1336 = vand.u32 %v389, 4294901760
        %1337 = vmatmul.f32.gmra.mxu0 %v1336
        %v1338 = vpop.f32.mrf.mxu0
        %v1339 = vadd.f32 %v1169, %v1338
        %v1340 = vand.u32 %v392, 4294901760
        %1341 = vmatmul.f32.gmra.mxu0 %v1340
        %v1342 = vpop.f32.mrf.mxu0
        %v1343 = vadd.f32 %v1175, %v1342
        %v1344 = vand.u32 %v395, 4294901760
        %1345 = vmatmul.f32.gmra.mxu0 %v1344
        %v1346 = vpop.f32.mrf.mxu0
        %v1347 = vadd.f32 %v1181, %v1346
        %v1348 = vand.u32 %v398, 4294901760
        %1349 = vmatmul.f32.gmra.mxu0 %v1348
        %v1350 = vpop.f32.mrf.mxu0
        %v1351 = vadd.f32 %v1187, %v1350
        %v1352 = vand.u32 %v401, 4294901760
        %1353 = vmatmul.f32.gmra.mxu0 %v1352
        %v1354 = vpop.f32.mrf.mxu0
        %v1355 = vadd.f32 %v1193, %v1354
        %v1356 = vand.u32 %v404, 4294901760
        %1357 = vmatmul.f32.gmra.mxu0 %v1356
        %v1358 = vpop.f32.mrf.mxu0
        %v1359 = vadd.f32 %v1199, %v1358
        %v1360 = vand.u32 %v407, 4294901760
        %1361 = vmatmul.f32.gmra.mxu0 %v1360
        %v1362 = vpop.f32.mrf.mxu0
        %v1363 = vadd.f32 %v1205, %v1362
        %v1364 = vand.u32 %v410, 4294901760
        %1365 = vmatmul.f32.gmra.mxu0 %v1364
        %v1366 = vpop.f32.mrf.mxu0
        %v1367 = vadd.f32 %v1211, %v1366
        %v1368 = vand.u32 %v413, 4294901760
        %1369 = vmatmul.f32.gmra.mxu0 %v1368
        %v1370 = vpop.f32.mrf.mxu0
        %v1371 = vadd.f32 %v1217, %v1370
        %v1372 = vand.u32 %v416, 4294901760
        %1373 = vmatmul.f32.gmra.mxu0 %v1372
        %v1374 = vpop.f32.mrf.mxu0
        %v1375 = vadd.f32 %v1223, %v1374
        %v1376 = vand.u32 %v419, 4294901760
        %1377 = vmatmul.f32.gmra.mxu0 %v1376
        %v1378 = vpop.f32.mrf.mxu0
        %v1379 = vadd.f32 %v1229, %v1378
        %v1380 = vand.u32 %v422, 4294901760
        %1381 = vmatmul.f32.gmra.mxu0 %v1380
        %v1382 = vpop.f32.mrf.mxu0
        %v1383 = vadd.f32 %v1235, %v1382
        %1384 = vdwg.mxu0
        %1385 = vmatpush.msra.mxu0 0.0
        %1386 = vmatpush.msra.mxu0 0.0
        %1387 = vmatpush.msra.mxu0 0.0
        %1388 = vmatpush.msra.mxu0 0.0
        %1389 = vmatpush.msra.mxu0 0.0
        %1390 = vmatpush.msra.mxu0 0.0
        %1391 = vmatpush.msra.mxu0 0.0
        %1392 = vmatpush.msra.mxu0 0.0
        %1393 = vmatpush.msra.mxu0 0.0
        %1394 = vmatpush.msra.mxu0 0.0
        %1395 = vmatpush.msra.mxu0 0.0
        %1396 = vmatpush.msra.mxu0 0.0
        %1397 = vmatpush.msra.mxu0 0.0
        %1398 = vmatpush.msra.mxu0 0.0
        %1399 = vmatpush.msra.mxu0 0.0
        %v1400 = vand.u32 %v326, 4294901760
        %1401 = vmatpush.msra.mxu0 %v1400
        %v1402 = vand.u32 %v329, 4294901760
        %1403 = vmatmul.f32.gmra.mxu0 %v1402
        %v1404 = vpop.f32.mrf.mxu0
        %v1405 = vadd.f32 %v1259, %v1404
        %v1406 = vand.u32 %v332, 4294901760
        %1407 = vmatmul.f32.gmra.mxu0 %v1406
        %v1408 = vpop.f32.mrf.mxu0
        %v1409 = vadd.f32 %v1263, %v1408
        %v1410 = vand.u32 %v335, 4294901760
        %1411 = vmatmul.f32.gmra.mxu0 %v1410
        %v1412 = vpop.f32.mrf.mxu0
        %v1413 = vadd.f32 %v1267, %v1412
        %v1414 = vand.u32 %v338, 4294901760
        %1415 = vmatmul.f32.gmra.mxu0 %v1414
        %v1416 = vpop.f32.mrf.mxu0
        %v1417 = vadd.f32 %v1271, %v1416
        %v1418 = vand.u32 %v341, 4294901760
        %1419 = vmatmul.f32.gmra.mxu0 %v1418
        %v1420 = vpop.f32.mrf.mxu0
        %v1421 = vadd.f32 %v1275, %v1420
        %v1422 = vand.u32 %v344, 4294901760
        %1423 = vmatmul.f32.gmra.mxu0 %v1422
        %v1424 = vpop.f32.mrf.mxu0
        %v1425 = vadd.f32 %v1279, %v1424
        %v1426 = vand.u32 %v347, 4294901760
        %1427 = vmatmul.f32.gmra.mxu0 %v1426
        %v1428 = vpop.f32.mrf.mxu0
        %v1429 = vadd.f32 %v1283, %v1428
        %v1430 = vand.u32 %v350, 4294901760
        %1431 = vmatmul.f32.gmra.mxu0 %v1430
        %v1432 = vpop.f32.mrf.mxu0
        %v1433 = vadd.f32 %v1287, %v1432
        %v1434 = vand.u32 %v353, 4294901760
        %1435 = vmatmul.f32.gmra.mxu0 %v1434
        %v1436 = vpop.f32.mrf.mxu0
        %v1437 = vadd.f32 %v1291, %v1436
        %v1438 = vand.u32 %v356, 4294901760
        %1439 = vmatmul.f32.gmra.mxu0 %v1438
        %v1440 = vpop.f32.mrf.mxu0
        %v1441 = vadd.f32 %v1295, %v1440
        %v1442 = vand.u32 %v359, 4294901760
        %1443 = vmatmul.f32.gmra.mxu0 %v1442
        %v1444 = vpop.f32.mrf.mxu0
        %v1445 = vadd.f32 %v1299, %v1444
        %v1446 = vand.u32 %v362, 4294901760
        %1447 = vmatmul.f32.gmra.mxu0 %v1446
        %v1448 = vpop.f32.mrf.mxu0
        %v1449 = vadd.f32 %v1303, %v1448
        %v1450 = vand.u32 %v365, 4294901760
        %1451 = vmatmul.f32.gmra.mxu0 %v1450
        %v1452 = vpop.f32.mrf.mxu0
        %v1453 = vadd.f32 %v1307, %v1452
        %v1454 = vand.u32 %v368, 4294901760
        %1455 = vmatmul.f32.gmra.mxu0 %v1454
        %v1456 = vpop.f32.mrf.mxu0
        %v1457 = vadd.f32 %v1311, %v1456
        %v1458 = vand.u32 %v371, 4294901760
        %1459 = vmatmul.f32.gmra.mxu0 %v1458
        %v1460 = vpop.f32.mrf.mxu0
        %v1461 = vadd.f32 %v1315, %v1460
        %v1462 = vand.u32 %v374, 4294901760
        %1463 = vmatmul.f32.gmra.mxu0 %v1462
        %v1464 = vpop.f32.mrf.mxu0
        %v1465 = vadd.f32 %v1319, %v1464
        %v1466 = vand.u32 %v377, 4294901760
        %1467 = vmatmul.f32.gmra.mxu0 %v1466
        %v1468 = vpop.f32.mrf.mxu0
        %v1469 = vadd.f32 %v1323, %v1468
        %v1470 = vand.u32 %v380, 4294901760
        %1471 = vmatmul.f32.gmra.mxu0 %v1470
        %v1472 = vpop.f32.mrf.mxu0
        %v1473 = vadd.f32 %v1327, %v1472
        %v1474 = vand.u32 %v383, 4294901760
        %1475 = vmatmul.f32.gmra.mxu0 %v1474
        %v1476 = vpop.f32.mrf.mxu0
        %v1477 = vadd.f32 %v1331, %v1476
        %v1478 = vand.u32 %v386, 4294901760
        %1479 = vmatmul.f32.gmra.mxu0 %v1478
        %v1480 = vpop.f32.mrf.mxu0
        %v1481 = vadd.f32 %v1335, %v1480
        %v1482 = vand.u32 %v389, 4294901760
        %1483 = vmatmul.f32.gmra.mxu0 %v1482
        %v1484 = vpop.f32.mrf.mxu0
        %v1485 = vadd.f32 %v1339, %v1484
        %v1486 = vand.u32 %v392, 4294901760
        %1487 = vmatmul.f32.gmra.mxu0 %v1486
        %v1488 = vpop.f32.mrf.mxu0
        %v1489 = vadd.f32 %v1343, %v1488
        %v1490 = vand.u32 %v395, 4294901760
        %1491 = vmatmul.f32.gmra.mxu0 %v1490
        %v1492 = vpop.f32.mrf.mxu0
        %v1493 = vadd.f32 %v1347, %v1492
        %v1494 = vand.u32 %v398, 4294901760
        %1495 = vmatmul.f32.gmra.mxu0 %v1494
        %v1496 = vpop.f32.mrf.mxu0
        %v1497 = vadd.f32 %v1351, %v1496
        %v1498 = vand.u32 %v401, 4294901760
        %1499 = vmatmul.f32.gmra.mxu0 %v1498
        %v1500 = vpop.f32.mrf.mxu0
        %v1501 = vadd.f32 %v1355, %v1500
        %v1502 = vand.u32 %v404, 4294901760
        %1503 = vmatmul.f32.gmra.mxu0 %v1502
        %v1504 = vpop.f32.mrf.mxu0
        %v1505 = vadd.f32 %v1359, %v1504
        %v1506 = vand.u32 %v407, 4294901760
        %1507 = vmatmul.f32.gmra.mxu0 %v1506
        %v1508 = vpop.f32.mrf.mxu0
        %v1509 = vadd.f32 %v1363, %v1508
        %v1510 = vand.u32 %v410, 4294901760
        %1511 = vmatmul.f32.gmra.mxu0 %v1510
        %v1512 = vpop.f32.mrf.mxu0
        %v1513 = vadd.f32 %v1367, %v1512
        %v1514 = vand.u32 %v413, 4294901760
        %1515 = vmatmul.f32.gmra.mxu0 %v1514
        %v1516 = vpop.f32.mrf.mxu0
        %v1517 = vadd.f32 %v1371, %v1516
        %v1518 = vand.u32 %v416, 4294901760
        %1519 = vmatmul.f32.gmra.mxu0 %v1518
        %v1520 = vpop.f32.mrf.mxu0
        %v1521 = vadd.f32 %v1375, %v1520
        %v1522 = vand.u32 %v419, 4294901760
        %1523 = vmatmul.f32.gmra.mxu0 %v1522
        %v1524 = vpop.f32.mrf.mxu0
        %v1525 = vadd.f32 %v1379, %v1524
        %v1526 = vand.u32 %v422, 4294901760
        %1527 = vmatmul.f32.gmra.mxu0 %v1526
        %v1528 = vpop.f32.mrf.mxu0
        %v1529 = vadd.f32 %v1383, %v1528
        %1530 = vdwg.mxu0
        %v1531 = vld [vmem:[%s2] sm:$0x1]
        %v1533 = vperm.slane %v1531, 0
        %v1535 = vadd.f32 %v1405, %v1533
        %v1536 = vadd.f32 %v1409, %v1533
        %v1537 = vadd.f32 %v1413, %v1533
        %v1538 = vadd.f32 %v1417, %v1533
        %v1539 = vadd.f32 %v1421, %v1533
        %v1540 = vadd.f32 %v1425, %v1533
        %v1541 = vadd.f32 %v1429, %v1533
        %v1542 = vadd.f32 %v1433, %v1533
        %v1543 = vadd.f32 %v1437, %v1533
        %v1544 = vadd.f32 %v1441, %v1533
        %v1545 = vadd.f32 %v1445, %v1533
        %v1546 = vadd.f32 %v1449, %v1533
        %v1547 = vadd.f32 %v1453, %v1533
        %v1548 = vadd.f32 %v1457, %v1533
        %v1549 = vadd.f32 %v1461, %v1533
        %v1550 = vadd.f32 %v1465, %v1533
        %v1551 = vadd.f32 %v1469, %v1533
        %v1552 = vadd.f32 %v1473, %v1533
        %v1553 = vadd.f32 %v1477, %v1533
        %v1554 = vadd.f32 %v1481, %v1533
        %v1555 = vadd.f32 %v1485, %v1533
        %v1556 = vadd.f32 %v1489, %v1533
        %v1557 = vadd.f32 %v1493, %v1533
        %v1558 = vadd.f32 %v1497, %v1533
        %v1559 = vadd.f32 %v1501, %v1533
        %v1560 = vadd.f32 %v1505, %v1533
        %v1561 = vadd.f32 %v1509, %v1533
        %v1562 = vadd.f32 %v1513, %v1533
        %v1563 = vadd.f32 %v1517, %v1533
        %v1564 = vadd.f32 %v1521, %v1533
        %v1565 = vadd.f32 %v1525, %v1533
        %v1566 = vadd.f32 %v1529, %v1533
        %v1567 = vmul.f32 %v1535, %v1535
        %v1568 = vmul.f32 %v1536, %v1536
        %v1569 = vmul.f32 %v1537, %v1537
        %v1570 = vmul.f32 %v1538, %v1538
        %v1571 = vmul.f32 %v1539, %v1539
        %v1572 = vmul.f32 %v1540, %v1540
        %v1573 = vmul.f32 %v1541, %v1541
        %v1574 = vmul.f32 %v1542, %v1542
        %v1575 = vmul.f32 %v1543, %v1543
        %v1576 = vmul.f32 %v1544, %v1544
        %v1577 = vmul.f32 %v1545, %v1545
        %v1578 = vmul.f32 %v1546, %v1546
        %v1579 = vmul.f32 %v1547, %v1547
        %v1580 = vmul.f32 %v1548, %v1548
        %v1581 = vmul.f32 %v1549, %v1549
        %v1582 = vmul.f32 %v1550, %v1550
        %v1583 = vmul.f32 %v1551, %v1551
        %v1584 = vmul.f32 %v1552, %v1552
        %v1585 = vmul.f32 %v1553, %v1553
        %v1586 = vmul.f32 %v1554, %v1554
        %v1587 = vmul.f32 %v1555, %v1555
        %v1588 = vmul.f32 %v1556, %v1556
        %v1589 = vmul.f32 %v1557, %v1557
        %v1590 = vmul.f32 %v1558, %v1558
        %v1591 = vmul.f32 %v1559, %v1559
        %v1592 = vmul.f32 %v1560, %v1560
        %v1593 = vmul.f32 %v1561, %v1561
        %v1594 = vmul.f32 %v1562, %v1562
        %v1595 = vmul.f32 %v1563, %v1563
        %v1596 = vmul.f32 %v1564, %v1564
        %v1597 = vmul.f32 %v1565, %v1565
        %v1598 = vmul.f32 %v1566, %v1566
        %v1599 = vmul.f32 %v1535, %v1567
        %v1600 = vmul.f32 %v1536, %v1568
        %v1601 = vmul.f32 %v1537, %v1569
        %v1602 = vmul.f32 %v1538, %v1570
        %v1603 = vmul.f32 %v1539, %v1571
        %v1604 = vmul.f32 %v1540, %v1572
        %v1605 = vmul.f32 %v1541, %v1573
        %v1606 = vmul.f32 %v1542, %v1574
        %v1607 = vmul.f32 %v1543, %v1575
        %v1608 = vmul.f32 %v1544, %v1576
        %v1609 = vmul.f32 %v1545, %v1577
        %v1610 = vmul.f32 %v1546, %v1578
        %v1611 = vmul.f32 %v1547, %v1579
        %v1612 = vmul.f32 %v1548, %v1580
        %v1613 = vmul.f32 %v1549, %v1581
        %v1614 = vmul.f32 %v1550, %v1582
        %v1615 = vmul.f32 %v1551, %v1583
        %v1616 = vmul.f32 %v1552, %v1584
        %v1617 = vmul.f32 %v1553, %v1585
        %v1618 = vmul.f32 %v1554, %v1586
        %v1619 = vmul.f32 %v1555, %v1587
        %v1620 = vmul.f32 %v1556, %v1588
        %v1621 = vmul.f32 %v1557, %v1589
        %v1622 = vmul.f32 %v1558, %v1590
        %v1623 = vmul.f32 %v1559, %v1591
        %v1624 = vmul.f32 %v1560, %v1592
        %v1625 = vmul.f32 %v1561, %v1593
        %v1626 = vmul.f32 %v1562, %v1594
        %v1627 = vmul.f32 %v1563, %v1595
        %v1628 = vmul.f32 %v1564, %v1596
        %v1629 = vmul.f32 %v1565, %v1597
        %v1630 = vmul.f32 %v1566, %v1598
        %v1631 = vmul.f32 %v1599, 0.044715
        %v1632 = vmul.f32 %v1600, 0.044715
        %v1633 = vmul.f32 %v1601, 0.044715
        %v1634 = vmul.f32 %v1602, 0.044715
        %v1635 = vmul.f32 %v1603, 0.044715
        %v1636 = vmul.f32 %v1604, 0.044715
        %v1637 = vmul.f32 %v1605, 0.044715
        %v1638 = vmul.f32 %v1606, 0.044715
        %v1639 = vmul.f32 %v1607, 0.044715
        %v1640 = vmul.f32 %v1608, 0.044715
        %v1641 = vmul.f32 %v1609, 0.044715
        %v1642 = vmul.f32 %v1610, 0.044715
        %v1643 = vmul.f32 %v1611, 0.044715
        %v1644 = vmul.f32 %v1612, 0.044715
        %v1645 = vmul.f32 %v1613, 0.044715
        %v1646 = vmul.f32 %v1614, 0.044715
        %v1647 = vmul.f32 %v1615, 0.044715
        %v1648 = vmul.f32 %v1616, 0.044715
        %v1649 = vmul.f32 %v1617, 0.044715
        %v1650 = vmul.f32 %v1618, 0.044715
        %v1651 = vmul.f32 %v1619, 0.044715
        %v1652 = vmul.f32 %v1620, 0.044715
        %v1653 = vmul.f32 %v1621, 0.044715
        %v1654 = vmul.f32 %v1622, 0.044715
        %v1655 = vmul.f32 %v1623, 0.044715
        %v1656 = vmul.f32 %v1624, 0.044715
        %v1657 = vmul.f32 %v1625, 0.044715
        %v1658 = vmul.f32 %v1626, 0.044715
        %v1659 = vmul.f32 %v1627, 0.044715
        %v1660 = vmul.f32 %v1628, 0.044715
        %v1661 = vmul.f32 %v1629, 0.044715
        %v1662 = vmul.f32 %v1630, 0.044715
        %v1663 = vadd.f32 %v1535, %v1631
        %v1664 = vadd.f32 %v1536, %v1632
        %v1665 = vadd.f32 %v1537, %v1633
        %v1666 = vadd.f32 %v1538, %v1634
        %v1667 = vadd.f32 %v1539, %v1635
        %v1668 = vadd.f32 %v1540, %v1636
        %v1669 = vadd.f32 %v1541, %v1637
        %v1670 = vadd.f32 %v1542, %v1638
        %v1671 = vadd.f32 %v1543, %v1639
        %v1672 = vadd.f32 %v1544, %v1640
        %v1673 = vadd.f32 %v1545, %v1641
        %v1674 = vadd.f32 %v1546, %v1642
        %v1675 = vadd.f32 %v1547, %v1643
        %v1676 = vadd.f32 %v1548, %v1644
        %v1677 = vadd.f32 %v1549, %v1645
        %v1678 = vadd.f32 %v1550, %v1646
        %v1679 = vadd.f32 %v1551, %v1647
        %v1680 = vadd.f32 %v1552, %v1648
        %v1681 = vadd.f32 %v1553, %v1649
        %v1682 = vadd.f32 %v1554, %v1650
        %v1683 = vadd.f32 %v1555, %v1651
        %v1684 = vadd.f32 %v1556, %v1652
        %v1685 = vadd.f32 %v1557, %v1653
        %v1686 = vadd.f32 %v1558, %v1654
        %v1687 = vadd.f32 %v1559, %v1655
        %v1688 = vadd.f32 %v1560, %v1656
        %v1689 = vadd.f32 %v1561, %v1657
        %v1690 = vadd.f32 %v1562, %v1658
        %v1691 = vadd.f32 %v1563, %v1659
        %v1692 = vadd.f32 %v1564, %v1660
        %v1693 = vadd.f32 %v1565, %v1661
        %v1694 = vadd.f32 %v1566, %v1662
        %v1695 = vmul.f32 %v1663, 0.7978846
        %v1696 = vmul.f32 %v1664, 0.7978846
        %v1697 = vmul.f32 %v1665, 0.7978846
        %v1698 = vmul.f32 %v1666, 0.7978846
        %v1699 = vmul.f32 %v1667, 0.7978846
        %v1700 = vmul.f32 %v1668, 0.7978846
        %v1701 = vmul.f32 %v1669, 0.7978846
        %v1702 = vmul.f32 %v1670, 0.7978846
        %v1703 = vmul.f32 %v1671, 0.7978846
        %v1704 = vmul.f32 %v1672, 0.7978846
        %v1705 = vmul.f32 %v1673, 0.7978846
        %v1706 = vmul.f32 %v1674, 0.7978846
        %v1707 = vmul.f32 %v1675, 0.7978846
        %v1708 = vmul.f32 %v1676, 0.7978846
        %v1709 = vmul.f32 %v1677, 0.7978846
        %v1710 = vmul.f32 %v1678, 0.7978846
        %v1711 = vmul.f32 %v1679, 0.7978846
        %v1712 = vmul.f32 %v1680, 0.7978846
        %v1713 = vmul.f32 %v1681, 0.7978846
        %v1714 = vmul.f32 %v1682, 0.7978846
        %v1715 = vmul.f32 %v1683, 0.7978846
        %v1716 = vmul.f32 %v1684, 0.7978846
        %v1717 = vmul.f32 %v1685, 0.7978846
        %v1718 = vmul.f32 %v1686, 0.7978846
        %v1719 = vmul.f32 %v1687, 0.7978846
        %v1720 = vmul.f32 %v1688, 0.7978846
        %v1721 = vmul.f32 %v1689, 0.7978846
        %v1722 = vmul.f32 %v1690, 0.7978846
        %v1723 = vmul.f32 %v1691, 0.7978846
        %v1724 = vmul.f32 %v1692, 0.7978846
        %v1725 = vmul.f32 %v1693, 0.7978846
        %v1726 = vmul.f32 %v1694, 0.7978846
        %v1727 = vtanh.pop %v1695
        %v1728 = vtanh.pop %v1696
        %v1729 = vtanh.pop %v1697
        %v1730 = vtanh.pop %v1698
        %v1731 = vtanh.pop %v1699
        %v1732 = vtanh.pop %v1700
        %v1733 = vtanh.pop %v1701
        %v1734 = vtanh.pop %v1702
        %v1735 = vtanh.pop %v1703
        %v1736 = vtanh.pop %v1704
        %v1737 = vtanh.pop %v1705
        %v1738 = vtanh.pop %v1706
        %v1739 = vtanh.pop %v1707
        %v1740 = vtanh.pop %v1708
        %v1741 = vtanh.pop %v1709
        %v1742 = vtanh.pop %v1710
        %v1743 = vtanh.pop %v1711
        %v1744 = vtanh.pop %v1712
        %v1745 = vtanh.pop %v1713
        %v1746 = vtanh.pop %v1714
        %v1747 = vtanh.pop %v1715
        %v1748 = vtanh.pop %v1716
        %v1749 = vtanh.pop %v1717
        %v1750 = vtanh.pop %v1718
        %v1751 = vtanh.pop %v1719
        %v1752 = vtanh.pop %v1720
        %v1753 = vtanh.pop %v1721
        %v1754 = vtanh.pop %v1722
        %v1755 = vtanh.pop %v1723
        %v1756 = vtanh.pop %v1724
        %v1757 = vtanh.pop %v1725
        %v1758 = vtanh.pop %v1726
        %v1759 = vadd.f32 %v1727, 1.0
        %v1760 = vadd.f32 %v1728, 1.0
        %v1761 = vadd.f32 %v1729, 1.0
        %v1762 = vadd.f32 %v1730, 1.0
        %v1763 = vadd.f32 %v1731, 1.0
        %v1764 = vadd.f32 %v1732, 1.0
        %v1765 = vadd.f32 %v1733, 1.0
        %v1766 = vadd.f32 %v1734, 1.0
        %v1767 = vadd.f32 %v1735, 1.0
        %v1768 = vadd.f32 %v1736, 1.0
        %v1769 = vadd.f32 %v1737, 1.0
        %v1770 = vadd.f32 %v1738, 1.0
        %v1771 = vadd.f32 %v1739, 1.0
        %v1772 = vadd.f32 %v1740, 1.0
        %v1773 = vadd.f32 %v1741, 1.0
        %v1774 = vadd.f32 %v1742, 1.0
        %v1775 = vadd.f32 %v1743, 1.0
        %v1776 = vadd.f32 %v1744, 1.0
        %v1777 = vadd.f32 %v1745, 1.0
        %v1778 = vadd.f32 %v1746, 1.0
        %v1779 = vadd.f32 %v1747, 1.0
        %v1780 = vadd.f32 %v1748, 1.0
        %v1781 = vadd.f32 %v1749, 1.0
        %v1782 = vadd.f32 %v1750, 1.0
        %v1783 = vadd.f32 %v1751, 1.0
        %v1784 = vadd.f32 %v1752, 1.0
        %v1785 = vadd.f32 %v1753, 1.0
        %v1786 = vadd.f32 %v1754, 1.0
        %v1787 = vadd.f32 %v1755, 1.0
        %v1788 = vadd.f32 %v1756, 1.0
        %v1789 = vadd.f32 %v1757, 1.0
        %v1790 = vadd.f32 %v1758, 1.0
        %v1791 = vmul.f32 %v1759, 0.5
        %v1792 = vmul.f32 %v1760, 0.5
        %v1793 = vmul.f32 %v1761, 0.5
        %v1794 = vmul.f32 %v1762, 0.5
        %v1795 = vmul.f32 %v1763, 0.5
        %v1796 = vmul.f32 %v1764, 0.5
        %v1797 = vmul.f32 %v1765, 0.5
        %v1798 = vmul.f32 %v1766, 0.5
        %v1799 = vmul.f32 %v1767, 0.5
        %v1800 = vmul.f32 %v1768, 0.5
        %v1801 = vmul.f32 %v1769, 0.5
        %v1802 = vmul.f32 %v1770, 0.5
        %v1803 = vmul.f32 %v1771, 0.5
        %v1804 = vmul.f32 %v1772, 0.5
        %v1805 = vmul.f32 %v1773, 0.5
        %v1806 = vmul.f32 %v1774, 0.5
        %v1807 = vmul.f32 %v1775, 0.5
        %v1808 = vmul.f32 %v1776, 0.5
        %v1809 = vmul.f32 %v1777, 0.5
        %v1810 = vmul.f32 %v1778, 0.5
        %v1811 = vmul.f32 %v1779, 0.5
        %v1812 = vmul.f32 %v1780, 0.5
        %v1813 = vmul.f32 %v1781, 0.5
        %v1814 = vmul.f32 %v1782, 0.5
        %v1815 = vmul.f32 %v1783, 0.5
        %v1816 = vmul.f32 %v1784, 0.5
        %v1817 = vmul.f32 %v1785, 0.5
        %v1818 = vmul.f32 %v1786, 0.5
        %v1819 = vmul.f32 %v1787, 0.5
        %v1820 = vmul.f32 %v1788, 0.5
        %v1821 = vmul.f32 %v1789, 0.5
        %v1822 = vmul.f32 %v1790, 0.5
        %v1823 = vmul.f32 %v1535, %v1791
        %v1824 = vmul.f32 %v1536, %v1792
        %v1825 = vmul.f32 %v1537, %v1793
        %v1826 = vmul.f32 %v1538, %v1794
        %v1827 = vmul.f32 %v1539, %v1795
        %v1828 = vmul.f32 %v1540, %v1796
        %v1829 = vmul.f32 %v1541, %v1797
        %v1830 = vmul.f32 %v1542, %v1798
        %v1831 = vmul.f32 %v1543, %v1799
        %v1832 = vmul.f32 %v1544, %v1800
        %v1833 = vmul.f32 %v1545, %v1801
        %v1834 = vmul.f32 %v1546, %v1802
        %v1835 = vmul.f32 %v1547, %v1803
        %v1836 = vmul.f32 %v1548, %v1804
        %v1837 = vmul.f32 %v1549, %v1805
        %v1838 = vmul.f32 %v1550, %v1806
        %v1839 = vmul.f32 %v1551, %v1807
        %v1840 = vmul.f32 %v1552, %v1808
        %v1841 = vmul.f32 %v1553, %v1809
        %v1842 = vmul.f32 %v1554, %v1810
        %v1843 = vmul.f32 %v1555, %v1811
        %v1844 = vmul.f32 %v1556, %v1812
        %v1845 = vmul.f32 %v1557, %v1813
        %v1846 = vmul.f32 %v1558, %v1814
        %v1847 = vmul.f32 %v1559, %v1815
        %v1848 = vmul.f32 %v1560, %v1816
        %v1849 = vmul.f32 %v1561, %v1817
        %v1850 = vmul.f32 %v1562, %v1818
        %v1851 = vmul.f32 %v1563, %v1819
        %v1852 = vmul.f32 %v1564, %v1820
        %v1853 = vmul.f32 %v1565, %v1821
        %v1854 = vmul.f32 %v1566, %v1822
        %s1855 = scalar_lea.vmem [#allocation2], 96
        %1856 = vst.msk [vmem:[%s1855 + $0x8] sm:$0xff] %vm223, %v1823
        %1857 = vst.msk [vmem:[%s1855 + $0x10] sm:$0xff] %vm223, %v1824
        %1858 = vst.msk [vmem:[%s1855 + $0x28] sm:$0xff] %vm223, %v1825
        %1859 = vst.msk [vmem:[%s1855 + $0x30] sm:$0xff] %vm223, %v1826
        %1860 = vst.msk [vmem:[%s1855 + $0x48] sm:$0xff] %vm223, %v1827
        %1861 = vst.msk [vmem:[%s1855 + $0x50] sm:$0xff] %vm223, %v1828
        %1862 = vst.msk [vmem:[%s1855 + $0x68] sm:$0xff] %vm223, %v1829
        %1863 = vst.msk [vmem:[%s1855 + $0x70] sm:$0xff] %vm223, %v1830
        %1864 = vst.msk [vmem:[%s1855 + $0x88] sm:$0xff] %vm223, %v1831
        %1865 = vst.msk [vmem:[%s1855 + $0x90] sm:$0xff] %vm223, %v1832
        %1866 = vst.msk [vmem:[%s1855 + $0xa8] sm:$0xff] %vm223, %v1833
        %1867 = vst.msk [vmem:[%s1855 + $0xb0] sm:$0xff] %vm223, %v1834
        %1868 = vst.msk [vmem:[%s1855 + $0xc8] sm:$0xff] %vm223, %v1835
        %1869 = vst.msk [vmem:[%s1855 + $0xd0] sm:$0xff] %vm223, %v1836
        %1870 = vst.msk [vmem:[%s1855 + $0xe8] sm:$0xff] %vm223, %v1837
        %1871 = vst.msk [vmem:[%s1855 + $0xf0] sm:$0xff] %vm223, %v1838
        %1872 = vst.msk [vmem:[%s1855 + $0x108] sm:$0xff] %vm223, %v1839
        %1873 = vst.msk [vmem:[%s1855 + $0x110] sm:$0xff] %vm223, %v1840
        %1874 = vst.msk [vmem:[%s1855 + $0x128] sm:$0xff] %vm223, %v1841
        %1875 = vst.msk [vmem:[%s1855 + $0x130] sm:$0xff] %vm223, %v1842
        %1876 = vst.msk [vmem:[%s1855 + $0x148] sm:$0xff] %vm223, %v1843
        %1877 = vst.msk [vmem:[%s1855 + $0x150] sm:$0xff] %vm223, %v1844
        %1878 = vst.msk [vmem:[%s1855 + $0x168] sm:$0xff] %vm223, %v1845
        %1879 = vst.msk [vmem:[%s1855 + $0x170] sm:$0xff] %vm223, %v1846
        %1880 = vst.msk [vmem:[%s1855 + $0x188] sm:$0xff] %vm223, %v1847
        %1881 = vst.msk [vmem:[%s1855 + $0x190] sm:$0xff] %vm223, %v1848
        %1882 = vst.msk [vmem:[%s1855 + $0x1a8] sm:$0xff] %vm223, %v1849
        %1883 = vst.msk [vmem:[%s1855 + $0x1b0] sm:$0xff] %vm223, %v1850
        %1884 = vst.msk [vmem:[%s1855 + $0x1c8] sm:$0xff] %vm223, %v1851
        %1885 = vst.msk [vmem:[%s1855 + $0x1d0] sm:$0xff] %vm223, %v1852
        %1886 = vst.msk [vmem:[%s1855 + $0x1e8] sm:$0xff] %vm223, %v1853
        %1887 = vst.msk [vmem:[%s1855 + $0x1f0] sm:$0xff] %vm223, %v1854
        %v1888 = vld [vmem:[%s3] sm:$0xff]
        %v1889 = vld [vmem:[%s3 + $0x8] sm:$0x1]
        %v1890 = vld [vmem:[#allocation2 + $0x47] sm:$0xff]
        %v1891 = vld [vmem:[#allocation2 + $0x4f] sm:$0xff]
        %v1892 = vld [vmem:[#allocation2 + $0x67] sm:$0xff]
        %v1893 = vld [vmem:[#allocation2 + $0x6f] sm:$0xff]
        %v1894 = vld [vmem:[#allocation2 + $0x87] sm:$0xff]
        %v1895 = vld [vmem:[#allocation2 + $0x8f] sm:$0xff]
        %v1896 = vld [vmem:[#allocation2 + $0xa7] sm:$0xff]
        %v1897 = vld [vmem:[#allocation2 + $0xaf] sm:$0xff]
        %v1898 = vld [vmem:[#allocation2 + $0xc7] sm:$0xff]
        %v1899 = vld [vmem:[#allocation2 + $0xcf] sm:$0xff]
        %v1900 = vld [vmem:[#allocation2 + $0xe7] sm:$0xff]
        %v1901 = vld [vmem:[#allocation2 + $0xef] sm:$0xff]
        %v1902 = vld [vmem:[#allocation2 + $0x107] sm:$0xff]
        %v1903 = vld [vmem:[#allocation2 + $0x10f] sm:$0xff]
        %v1904 = vld [vmem:[#allocation2 + $0x127] sm:$0xff]
        %v1905 = vld [vmem:[#allocation2 + $0x12f] sm:$0xff]
        %v1906 = vld [vmem:[#allocation2 + $0x147] sm:$0xff]
        %v1907 = vld [vmem:[#allocation2 + $0x14f] sm:$0xff]
        %v1908 = vld [vmem:[#allocation2 + $0x167] sm:$0xff]
        %v1909 = vld [vmem:[#allocation2 + $0x16f] sm:$0xff]
        %v1910 = vld [vmem:[#allocation2 + $0x187] sm:$0xff]
        %v1911 = vld [vmem:[#allocation2 + $0x18f] sm:$0xff]
        %v1912 = vld [vmem:[#allocation2 + $0x1a7] sm:$0xff]
        %v1913 = vld [vmem:[#allocation2 + $0x1af] sm:$0xff]
        %v1914 = vld [vmem:[#allocation2 + $0x1c7] sm:$0xff]
        %v1915 = vld [vmem:[#allocation2 + $0x1cf] sm:$0xff]
        %v1916 = vld [vmem:[#allocation2 + $0x1e7] sm:$0xff]
        %v1917 = vld [vmem:[#allocation2 + $0x1ef] sm:$0xff]
        %v1918 = vld [vmem:[#allocation2 + $0x207] sm:$0xff]
        %v1919 = vld [vmem:[#allocation2 + $0x20f] sm:$0xff]
        %v1920 = vld [vmem:[#allocation2 + $0x227] sm:$0xff]
        %v1921 = vld [vmem:[#allocation2 + $0x22f] sm:$0xff]
        %v1922 = vld [vmem:[#allocation2 + $0x247] sm:$0xff]
        %v1923 = vld [vmem:[#allocation2 + $0x24f] sm:$0xff]
        %v1924 = vld [vmem:[#allocation2 + $0x267] sm:$0xff]
        %v1925 = vld [vmem:[#allocation2 + $0x26f] sm:$0xff]
        %v1926 = vperm.slane %v1888, 0
        %v1927 = vmul.f32 %v1890, %v1926
        %v1928 = vmul.f32 %v1891, %v1926
        %v1929 = vmul.f32 %v1892, %v1926
        %v1930 = vmul.f32 %v1893, %v1926
        %v1931 = vmul.f32 %v1894, %v1926
        %v1932 = vmul.f32 %v1895, %v1926
        %v1933 = vmul.f32 %v1896, %v1926
        %v1934 = vmul.f32 %v1897, %v1926
        %v1935 = vmul.f32 %v1898, %v1926
        %v1936 = vmul.f32 %v1899, %v1926
        %v1937 = vmul.f32 %v1900, %v1926
        %v1938 = vmul.f32 %v1901, %v1926
        %v1939 = vmul.f32 %v1902, %v1926
        %v1940 = vmul.f32 %v1903, %v1926
        %v1941 = vmul.f32 %v1904, %v1926
        %v1942 = vmul.f32 %v1905, %v1926
        %v1943 = vmul.f32 %v1906, %v1926
        %v1944 = vmul.f32 %v1907, %v1926
        %v1945 = vmul.f32 %v1908, %v1926
        %v1946 = vmul.f32 %v1909, %v1926
        %v1947 = vmul.f32 %v1910, %v1926
        %v1948 = vmul.f32 %v1911, %v1926
        %v1949 = vmul.f32 %v1912, %v1926
        %v1950 = vmul.f32 %v1913, %v1926
        %v1951 = vmul.f32 %v1914, %v1926
        %v1952 = vmul.f32 %v1915, %v1926
        %v1953 = vmul.f32 %v1916, %v1926
        %v1954 = vmul.f32 %v1917, %v1926
        %v1955 = vmul.f32 %v1918, %v1926
        %v1956 = vmul.f32 %v1919, %v1926
        %v1957 = vmul.f32 %v1920, %v1926
        %v1958 = vmul.f32 %v1921, %v1926
        %v1959 = vperm.slane %v1888, 3
        %v1960 = vmul.f32 %v1892, %v1959
        %v1961 = vmul.f32 %v1893, %v1959
        %v1962 = vmul.f32 %v1894, %v1959
        %v1963 = vmul.f32 %v1895, %v1959
        %v1964 = vmul.f32 %v1896, %v1959
        %v1965 = vmul.f32 %v1897, %v1959
        %v1966 = vmul.f32 %v1898, %v1959
        %v1967 = vmul.f32 %v1899, %v1959
        %v1968 = vmul.f32 %v1900, %v1959
        %v1969 = vmul.f32 %v1901, %v1959
        %v1970 = vmul.f32 %v1902, %v1959
        %v1971 = vmul.f32 %v1903, %v1959
        %v1972 = vmul.f32 %v1904, %v1959
        %v1973 = vmul.f32 %v1905, %v1959
        %v1974 = vmul.f32 %v1906, %v1959
        %v1975 = vmul.f32 %v1907, %v1959
        %v1976 = vmul.f32 %v1908, %v1959
        %v1977 = vmul.f32 %v1909, %v1959
        %v1978 = vmul.f32 %v1910, %v1959
        %v1979 = vmul.f32 %v1911, %v1959
        %v1980 = vmul.f32 %v1912, %v1959
        %v1981 = vmul.f32 %v1913, %v1959
        %v1982 = vmul.f32 %v1914, %v1959
        %v1983 = vmul.f32 %v1915, %v1959
        %v1984 = vmul.f32 %v1916, %v1959
        %v1985 = vmul.f32 %v1917, %v1959
        %v1986 = vmul.f32 %v1918, %v1959
        %v1987 = vmul.f32 %v1919, %v1959
        %v1988 = vmul.f32 %v1920, %v1959
        %v1989 = vmul.f32 %v1921, %v1959
        %v1990 = vmul.f32 %v1922, %v1959
        %v1991 = vmul.f32 %v1923, %v1959
        %v1992 = vadd.f32 %v1927, %v1960
        %v1993 = vadd.f32 %v1928, %v1961
        %v1994 = vadd.f32 %v1929, %v1962
        %v1995 = vadd.f32 %v1930, %v1963
        %v1996 = vadd.f32 %v1931, %v1964
        %v1997 = vadd.f32 %v1932, %v1965
        %v1998 = vadd.f32 %v1933, %v1966
        %v1999 = vadd.f32 %v1934, %v1967
        %v2000 = vadd.f32 %v1935, %v1968
        %v2001 = vadd.f32 %v1936, %v1969
        %v2002 = vadd.f32 %v1937, %v1970
        %v2003 = vadd.f32 %v1938, %v1971
        %v2004 = vadd.f32 %v1939, %v1972
        %v2005 = vadd.f32 %v1940, %v1973
        %v2006 = vadd.f32 %v1941, %v1974
        %v2007 = vadd.f32 %v1942, %v1975
        %v2008 = vadd.f32 %v1943, %v1976
        %v2009 = vadd.f32 %v1944, %v1977
        %v2010 = vadd.f32 %v1945, %v1978
        %v2011 = vadd.f32 %v1946, %v1979
        %v2012 = vadd.f32 %v1947, %v1980
        %v2013 = vadd.f32 %v1948, %v1981
        %v2014 = vadd.f32 %v1949, %v1982
        %v2015 = vadd.f32 %v1950, %v1983
        %v2016 = vadd.f32 %v1951, %v1984
        %v2017 = vadd.f32 %v1952, %v1985
        %v2018 = vadd.f32 %v1953, %v1986
        %v2019 = vadd.f32 %v1954, %v1987
        %v2020 = vadd.f32 %v1955, %v1988
        %v2021 = vadd.f32 %v1956, %v1989
        %v2022 = vadd.f32 %v1957, %v1990
        %v2023 = vadd.f32 %v1958, %v1991
        %v2024 = vperm.slane %v1888, 6
        %v2025 = vmul.f32 %v1894, %v2024
        %v2026 = vmul.f32 %v1895, %v2024
        %v2027 = vmul.f32 %v1896, %v2024
        %v2028 = vmul.f32 %v1897, %v2024
        %v2029 = vmul.f32 %v1898, %v2024
        %v2030 = vmul.f32 %v1899, %v2024
        %v2031 = vmul.f32 %v1900, %v2024
        %v2032 = vmul.f32 %v1901, %v2024
        %v2033 = vmul.f32 %v1902, %v2024
        %v2034 = vmul.f32 %v1903, %v2024
        %v2035 = vmul.f32 %v1904, %v2024
        %v2036 = vmul.f32 %v1905, %v2024
        %v2037 = vmul.f32 %v1906, %v2024
        %v2038 = vmul.f32 %v1907, %v2024
        %v2039 = vmul.f32 %v1908, %v2024
        %v2040 = vmul.f32 %v1909, %v2024
        %v2041 = vmul.f32 %v1910, %v2024
        %v2042 = vmul.f32 %v1911, %v2024
        %v2043 = vmul.f32 %v1912, %v2024
        %v2044 = vmul.f32 %v1913, %v2024
        %v2045 = vmul.f32 %v1914, %v2024
        %v2046 = vmul.f32 %v1915, %v2024
        %v2047 = vmul.f32 %v1916, %v2024
        %v2048 = vmul.f32 %v1917, %v2024
        %v2049 = vmul.f32 %v1918, %v2024
        %v2050 = vmul.f32 %v1919, %v2024
        %v2051 = vmul.f32 %v1920, %v2024
        %v2052 = vmul.f32 %v1921, %v2024
        %v2053 = vmul.f32 %v1922, %v2024
        %v2054 = vmul.f32 %v1923, %v2024
        %v2055 = vmul.f32 %v1924, %v2024
        %v2056 = vmul.f32 %v1925, %v2024
        %v2057 = vadd.f32 %v1992, %v2025
        %v2058 = vadd.f32 %v1993, %v2026
        %v2059 = vadd.f32 %v1994, %v2027
        %v2060 = vadd.f32 %v1995, %v2028
        %v2061 = vadd.f32 %v1996, %v2029
        %v2062 = vadd.f32 %v1997, %v2030
        %v2063 = vadd.f32 %v1998, %v2031
        %v2064 = vadd.f32 %v1999, %v2032
        %v2065 = vadd.f32 %v2000, %v2033
        %v2066 = vadd.f32 %v2001, %v2034
        %v2067 = vadd.f32 %v2002, %v2035
        %v2068 = vadd.f32 %v2003, %v2036
        %v2069 = vadd.f32 %v2004, %v2037
        %v2070 = vadd.f32 %v2005, %v2038
        %v2071 = vadd.f32 %v2006, %v2039
        %v2072 = vadd.f32 %v2007, %v2040
        %v2073 = vadd.f32 %v2008, %v2041
        %v2074 = vadd.f32 %v2009, %v2042
        %v2075 = vadd.f32 %v2010, %v2043
        %v2076 = vadd.f32 %v2011, %v2044
        %v2077 = vadd.f32 %v2012, %v2045
        %v2078 = vadd.f32 %v2013, %v2046
        %v2079 = vadd.f32 %v2014, %v2047
        %v2080 = vadd.f32 %v2015, %v2048
        %v2081 = vadd.f32 %v2016, %v2049
        %v2082 = vadd.f32 %v2017, %v2050
        %v2083 = vadd.f32 %v2018, %v2051
        %v2084 = vadd.f32 %v2019, %v2052
        %v2085 = vadd.f32 %v2020, %v2053
        %v2086 = vadd.f32 %v2021, %v2054
        %v2087 = vadd.f32 %v2022, %v2055
        %v2088 = vadd.f32 %v2023, %v2056
        %v2089 = vld [vmem:[#allocation2 + $0x48] sm:$0xff]
        %v2090 = vld [vmem:[#allocation2 + $0x50] sm:$0xff]
        %v2091 = vld [vmem:[#allocation2 + $0x68] sm:$0xff]
        %v2092 = vld [vmem:[#allocation2 + $0x70] sm:$0xff]
        %v2093 = vld [vmem:[#allocation2 + $0x88] sm:$0xff]
        %v2094 = vld [vmem:[#allocation2 + $0x90] sm:$0xff]
        %v2095 = vld [vmem:[#allocation2 + $0xa8] sm:$0xff]
        %v2096 = vld [vmem:[#allocation2 + $0xb0] sm:$0xff]
        %v2097 = vld [vmem:[#allocation2 + $0xc8] sm:$0xff]
        %v2098 = vld [vmem:[#allocation2 + $0xd0] sm:$0xff]
        %v2099 = vld [vmem:[#allocation2 + $0xe8] sm:$0xff]
        %v2100 = vld [vmem:[#allocation2 + $0xf0] sm:$0xff]
        %v2101 = vld [vmem:[#allocation2 + $0x108] sm:$0xff]
        %v2102 = vld [vmem:[#allocation2 + $0x110] sm:$0xff]
        %v2103 = vld [vmem:[#allocation2 + $0x128] sm:$0xff]
        %v2104 = vld [vmem:[#allocation2 + $0x130] sm:$0xff]
        %v2105 = vld [vmem:[#allocation2 + $0x148] sm:$0xff]
        %v2106 = vld [vmem:[#allocation2 + $0x150] sm:$0xff]
        %v2107 = vld [vmem:[#allocation2 + $0x168] sm:$0xff]
        %v2108 = vld [vmem:[#allocation2 + $0x170] sm:$0xff]
        %v2109 = vld [vmem:[#allocation2 + $0x188] sm:$0xff]
        %v2110 = vld [vmem:[#allocation2 + $0x190] sm:$0xff]
        %v2111 = vld [vmem:[#allocation2 + $0x1a8] sm:$0xff]
        %v2112 = vld [vmem:[#allocation2 + $0x1b0] sm:$0xff]
        %v2113 = vld [vmem:[#allocation2 + $0x1c8] sm:$0xff]
        %v2114 = vld [vmem:[#allocation2 + $0x1d0] sm:$0xff]
        %v2115 = vld [vmem:[#allocation2 + $0x1e8] sm:$0xff]
        %v2116 = vld [vmem:[#allocation2 + $0x1f0] sm:$0xff]
        %v2117 = vld [vmem:[#allocation2 + $0x208] sm:$0xff]
        %v2118 = vld [vmem:[#allocation2 + $0x210] sm:$0xff]
        %v2119 = vld [vmem:[#allocation2 + $0x228] sm:$0xff]
        %v2120 = vld [vmem:[#allocation2 + $0x230] sm:$0xff]
        %v2121 = vld [vmem:[#allocation2 + $0x248] sm:$0xff]
        %v2122 = vld [vmem:[#allocation2 + $0x250] sm:$0xff]
        %v2123 = vld [vmem:[#allocation2 + $0x268] sm:$0xff]
        %v2124 = vld [vmem:[#allocation2 + $0x270] sm:$0xff]
        %v2125 = vperm.slane %v1888, 1
        %v2126 = vmul.f32 %v2089, %v2125
        %v2127 = vmul.f32 %v2090, %v2125
        %v2128 = vmul.f32 %v2091, %v2125
        %v2129 = vmul.f32 %v2092, %v2125
        %v2130 = vmul.f32 %v2093, %v2125
        %v2131 = vmul.f32 %v2094, %v2125
        %v2132 = vmul.f32 %v2095, %v2125
        %v2133 = vmul.f32 %v2096, %v2125
        %v2134 = vmul.f32 %v2097, %v2125
        %v2135 = vmul.f32 %v2098, %v2125
        %v2136 = vmul.f32 %v2099, %v2125
        %v2137 = vmul.f32 %v2100, %v2125
        %v2138 = vmul.f32 %v2101, %v2125
        %v2139 = vmul.f32 %v2102, %v2125
        %v2140 = vmul.f32 %v2103, %v2125
        %v2141 = vmul.f32 %v2104, %v2125
        %v2142 = vmul.f32 %v2105, %v2125
        %v2143 = vmul.f32 %v2106, %v2125
        %v2144 = vmul.f32 %v2107, %v2125
        %v2145 = vmul.f32 %v2108, %v2125
        %v2146 = vmul.f32 %v2109, %v2125
        %v2147 = vmul.f32 %v2110, %v2125
        %v2148 = vmul.f32 %v2111, %v2125
        %v2149 = vmul.f32 %v2112, %v2125
        %v2150 = vmul.f32 %v2113, %v2125
        %v2151 = vmul.f32 %v2114, %v2125
        %v2152 = vmul.f32 %v2115, %v2125
        %v2153 = vmul.f32 %v2116, %v2125
        %v2154 = vmul.f32 %v2117, %v2125
        %v2155 = vmul.f32 %v2118, %v2125
        %v2156 = vmul.f32 %v2119, %v2125
        %v2157 = vmul.f32 %v2120, %v2125
        %v2158 = vadd.f32 %v2057, %v2126
        %v2159 = vadd.f32 %v2058, %v2127
        %v2160 = vadd.f32 %v2059, %v2128
        %v2161 = vadd.f32 %v2060, %v2129
        %v2162 = vadd.f32 %v2061, %v2130
        %v2163 = vadd.f32 %v2062, %v2131
        %v2164 = vadd.f32 %v2063, %v2132
        %v2165 = vadd.f32 %v2064, %v2133
        %v2166 = vadd.f32 %v2065, %v2134
        %v2167 = vadd.f32 %v2066, %v2135
        %v2168 = vadd.f32 %v2067, %v2136
        %v2169 = vadd.f32 %v2068, %v2137
        %v2170 = vadd.f32 %v2069, %v2138
        %v2171 = vadd.f32 %v2070, %v2139
        %v2172 = vadd.f32 %v2071, %v2140
        %v2173 = vadd.f32 %v2072, %v2141
        %v2174 = vadd.f32 %v2073, %v2142
        %v2175 = vadd.f32 %v2074, %v2143
        %v2176 = vadd.f32 %v2075, %v2144
        %v2177 = vadd.f32 %v2076, %v2145
        %v2178 = vadd.f32 %v2077, %v2146
        %v2179 = vadd.f32 %v2078, %v2147
        %v2180 = vadd.f32 %v2079, %v2148
        %v2181 = vadd.f32 %v2080, %v2149
        %v2182 = vadd.f32 %v2081, %v2150
        %v2183 = vadd.f32 %v2082, %v2151
        %v2184 = vadd.f32 %v2083, %v2152
        %v2185 = vadd.f32 %v2084, %v2153
        %v2186 = vadd.f32 %v2085, %v2154
        %v2187 = vadd.f32 %v2086, %v2155
        %v2188 = vadd.f32 %v2087, %v2156
        %v2189 = vadd.f32 %v2088, %v2157
        %v2190 = vperm.slane %v1888, 4
        %v2191 = vmul.f32 %v2091, %v2190
        %v2192 = vmul.f32 %v2092, %v2190
        %v2193 = vmul.f32 %v2093, %v2190
        %v2194 = vmul.f32 %v2094, %v2190
        %v2195 = vmul.f32 %v2095, %v2190
        %v2196 = vmul.f32 %v2096, %v2190
        %v2197 = vmul.f32 %v2097, %v2190
        %v2198 = vmul.f32 %v2098, %v2190
        %v2199 = vmul.f32 %v2099, %v2190
        %v2200 = vmul.f32 %v2100, %v2190
        %v2201 = vmul.f32 %v2101, %v2190
        %v2202 = vmul.f32 %v2102, %v2190
        %v2203 = vmul.f32 %v2103, %v2190
        %v2204 = vmul.f32 %v2104, %v2190
        %v2205 = vmul.f32 %v2105, %v2190
        %v2206 = vmul.f32 %v2106, %v2190
        %v2207 = vmul.f32 %v2107, %v2190
        %v2208 = vmul.f32 %v2108, %v2190
        %v2209 = vmul.f32 %v2109, %v2190
        %v2210 = vmul.f32 %v2110, %v2190
        %v2211 = vmul.f32 %v2111, %v2190
        %v2212 = vmul.f32 %v2112, %v2190
        %v2213 = vmul.f32 %v2113, %v2190
        %v2214 = vmul.f32 %v2114, %v2190
        %v2215 = vmul.f32 %v2115, %v2190
        %v2216 = vmul.f32 %v2116, %v2190
        %v2217 = vmul.f32 %v2117, %v2190
        %v2218 = vmul.f32 %v2118, %v2190
        %v2219 = vmul.f32 %v2119, %v2190
        %v2220 = vmul.f32 %v2120, %v2190
        %v2221 = vmul.f32 %v2121, %v2190
        %v2222 = vmul.f32 %v2122, %v2190
        %v2223 = vadd.f32 %v2158, %v2191
        %v2224 = vadd.f32 %v2159, %v2192
        %v2225 = vadd.f32 %v2160, %v2193
        %v2226 = vadd.f32 %v2161, %v2194
        %v2227 = vadd.f32 %v2162, %v2195
        %v2228 = vadd.f32 %v2163, %v2196
        %v2229 = vadd.f32 %v2164, %v2197
        %v2230 = vadd.f32 %v2165, %v2198
        %v2231 = vadd.f32 %v2166, %v2199
        %v2232 = vadd.f32 %v2167, %v2200
        %v2233 = vadd.f32 %v2168, %v2201
        %v2234 = vadd.f32 %v2169, %v2202
        %v2235 = vadd.f32 %v2170, %v2203
        %v2236 = vadd.f32 %v2171, %v2204
        %v2237 = vadd.f32 %v2172, %v2205
        %v2238 = vadd.f32 %v2173, %v2206
        %v2239 = vadd.f32 %v2174, %v2207
        %v2240 = vadd.f32 %v2175, %v2208
        %v2241 = vadd.f32 %v2176, %v2209
        %v2242 = vadd.f32 %v2177, %v2210
        %v2243 = vadd.f32 %v2178, %v2211
        %v2244 = vadd.f32 %v2179, %v2212
        %v2245 = vadd.f32 %v2180, %v2213
        %v2246 = vadd.f32 %v2181, %v2214
        %v2247 = vadd.f32 %v2182, %v2215
        %v2248 = vadd.f32 %v2183, %v2216
        %v2249 = vadd.f32 %v2184, %v2217
        %v2250 = vadd.f32 %v2185, %v2218
        %v2251 = vadd.f32 %v2186, %v2219
        %v2252 = vadd.f32 %v2187, %v2220
        %v2253 = vadd.f32 %v2188, %v2221
        %v2254 = vadd.f32 %v2189, %v2222
        %v2255 = vperm.slane %v1888, 7
        %v2256 = vmul.f32 %v2093, %v2255
        %v2257 = vmul.f32 %v2094, %v2255
        %v2258 = vmul.f32 %v2095, %v2255
        %v2259 = vmul.f32 %v2096, %v2255
        %v2260 = vmul.f32 %v2097, %v2255
        %v2261 = vmul.f32 %v2098, %v2255
        %v2262 = vmul.f32 %v2099, %v2255
        %v2263 = vmul.f32 %v2100, %v2255
        %v2264 = vmul.f32 %v2101, %v2255
        %v2265 = vmul.f32 %v2102, %v2255
        %v2266 = vmul.f32 %v2103, %v2255
        %v2267 = vmul.f32 %v2104, %v2255
        %v2268 = vmul.f32 %v2105, %v2255
        %v2269 = vmul.f32 %v2106, %v2255
        %v2270 = vmul.f32 %v2107, %v2255
        %v2271 = vmul.f32 %v2108, %v2255
        %v2272 = vmul.f32 %v2109, %v2255
        %v2273 = vmul.f32 %v2110, %v2255
        %v2274 = vmul.f32 %v2111, %v2255
        %v2275 = vmul.f32 %v2112, %v2255
        %v2276 = vmul.f32 %v2113, %v2255
        %v2277 = vmul.f32 %v2114, %v2255
        %v2278 = vmul.f32 %v2115, %v2255
        %v2279 = vmul.f32 %v2116, %v2255
        %v2280 = vmul.f32 %v2117, %v2255
        %v2281 = vmul.f32 %v2118, %v2255
        %v2282 = vmul.f32 %v2119, %v2255
        %v2283 = vmul.f32 %v2120, %v2255
        %v2284 = vmul.f32 %v2121, %v2255
        %v2285 = vmul.f32 %v2122, %v2255
        %v2286 = vmul.f32 %v2123, %v2255
        %v2287 = vmul.f32 %v2124, %v2255
        %v2288 = vadd.f32 %v2223, %v2256
        %v2289 = vadd.f32 %v2224, %v2257
        %v2290 = vadd.f32 %v2225, %v2258
        %v2291 = vadd.f32 %v2226, %v2259
        %v2292 = vadd.f32 %v2227, %v2260
        %v2293 = vadd.f32 %v2228, %v2261
        %v2294 = vadd.f32 %v2229, %v2262
        %v2295 = vadd.f32 %v2230, %v2263
        %v2296 = vadd.f32 %v2231, %v2264
        %v2297 = vadd.f32 %v2232, %v2265
        %v2298 = vadd.f32 %v2233, %v2266
        %v2299 = vadd.f32 %v2234, %v2267
        %v2300 = vadd.f32 %v2235, %v2268
        %v2301 = vadd.f32 %v2236, %v2269
        %v2302 = vadd.f32 %v2237, %v2270
        %v2303 = vadd.f32 %v2238, %v2271
        %v2304 = vadd.f32 %v2239, %v2272
        %v2305 = vadd.f32 %v2240, %v2273
        %v2306 = vadd.f32 %v2241, %v2274
        %v2307 = vadd.f32 %v2242, %v2275
        %v2308 = vadd.f32 %v2243, %v2276
        %v2309 = vadd.f32 %v2244, %v2277
        %v2310 = vadd.f32 %v2245, %v2278
        %v2311 = vadd.f32 %v2246, %v2279
        %v2312 = vadd.f32 %v2247, %v2280
        %v2313 = vadd.f32 %v2248, %v2281
        %v2314 = vadd.f32 %v2249, %v2282
        %v2315 = vadd.f32 %v2250, %v2283
        %v2316 = vadd.f32 %v2251, %v2284
        %v2317 = vadd.f32 %v2252, %v2285
        %v2318 = vadd.f32 %v2253, %v2286
        %v2319 = vadd.f32 %v2254, %v2287
        %v2320 = vld [vmem:[#allocation2 + $0x49] sm:$0xff]
        %v2321 = vld [vmem:[#allocation2 + $0x51] sm:$0xff]
        %v2322 = vld [vmem:[#allocation2 + $0x69] sm:$0xff]
        %v2323 = vld [vmem:[#allocation2 + $0x71] sm:$0xff]
        %v2324 = vld [vmem:[#allocation2 + $0x89] sm:$0xff]
        %v2325 = vld [vmem:[#allocation2 + $0x91] sm:$0xff]
        %v2326 = vld [vmem:[#allocation2 + $0xa9] sm:$0xff]
        %v2327 = vld [vmem:[#allocation2 + $0xb1] sm:$0xff]
        %v2328 = vld [vmem:[#allocation2 + $0xc9] sm:$0xff]
        %v2329 = vld [vmem:[#allocation2 + $0xd1] sm:$0xff]
        %v2330 = vld [vmem:[#allocation2 + $0xe9] sm:$0xff]
        %v2331 = vld [vmem:[#allocation2 + $0xf1] sm:$0xff]
        %v2332 = vld [vmem:[#allocation2 + $0x109] sm:$0xff]
        %v2333 = vld [vmem:[#allocation2 + $0x111] sm:$0xff]
        %v2334 = vld [vmem:[#allocation2 + $0x129] sm:$0xff]
        %v2335 = vld [vmem:[#allocation2 + $0x131] sm:$0xff]
        %v2336 = vld [vmem:[#allocation2 + $0x149] sm:$0xff]
        %v2337 = vld [vmem:[#allocation2 + $0x151] sm:$0xff]
        %v2338 = vld [vmem:[#allocation2 + $0x169] sm:$0xff]
        %v2339 = vld [vmem:[#allocation2 + $0x171] sm:$0xff]
        %v2340 = vld [vmem:[#allocation2 + $0x189] sm:$0xff]
        %v2341 = vld [vmem:[#allocation2 + $0x191] sm:$0xff]
        %v2342 = vld [vmem:[#allocation2 + $0x1a9] sm:$0xff]
        %v2343 = vld [vmem:[#allocation2 + $0x1b1] sm:$0xff]
        %v2344 = vld [vmem:[#allocation2 + $0x1c9] sm:$0xff]
        %v2345 = vld [vmem:[#allocation2 + $0x1d1] sm:$0xff]
        %v2346 = vld [vmem:[#allocation2 + $0x1e9] sm:$0xff]
        %v2347 = vld [vmem:[#allocation2 + $0x1f1] sm:$0xff]
        %v2348 = vld [vmem:[#allocation2 + $0x209] sm:$0xff]
        %v2349 = vld [vmem:[#allocation2 + $0x211] sm:$0xff]
        %v2350 = vld [vmem:[#allocation2 + $0x229] sm:$0xff]
        %v2351 = vld [vmem:[#allocation2 + $0x231] sm:$0xff]
        %v2352 = vld [vmem:[#allocation2 + $0x249] sm:$0xff]
        %v2353 = vld [vmem:[#allocation2 + $0x251] sm:$0xff]
        %v2354 = vld [vmem:[#allocation2 + $0x269] sm:$0xff]
        %v2355 = vld [vmem:[#allocation2 + $0x271] sm:$0xff]
        %v2356 = vperm.slane %v1888, 2
        %v2357 = vmul.f32 %v2320, %v2356
        %v2358 = vmul.f32 %v2321, %v2356
        %v2359 = vmul.f32 %v2322, %v2356
        %v2360 = vmul.f32 %v2323, %v2356
        %v2361 = vmul.f32 %v2324, %v2356
        %v2362 = vmul.f32 %v2325, %v2356
        %v2363 = vmul.f32 %v2326, %v2356
        %v2364 = vmul.f32 %v2327, %v2356
        %v2365 = vmul.f32 %v2328, %v2356
        %v2366 = vmul.f32 %v2329, %v2356
        %v2367 = vmul.f32 %v2330, %v2356
        %v2368 = vmul.f32 %v2331, %v2356
        %v2369 = vmul.f32 %v2332, %v2356
        %v2370 = vmul.f32 %v2333, %v2356
        %v2371 = vmul.f32 %v2334, %v2356
        %v2372 = vmul.f32 %v2335, %v2356
        %v2373 = vmul.f32 %v2336, %v2356
        %v2374 = vmul.f32 %v2337, %v2356
        %v2375 = vmul.f32 %v2338, %v2356
        %v2376 = vmul.f32 %v2339, %v2356
        %v2377 = vmul.f32 %v2340, %v2356
        %v2378 = vmul.f32 %v2341, %v2356
        %v2379 = vmul.f32 %v2342, %v2356
        %v2380 = vmul.f32 %v2343, %v2356
        %v2381 = vmul.f32 %v2344, %v2356
        %v2382 = vmul.f32 %v2345, %v2356
        %v2383 = vmul.f32 %v2346, %v2356
        %v2384 = vmul.f32 %v2347, %v2356
        %v2385 = vmul.f32 %v2348, %v2356
        %v2386 = vmul.f32 %v2349, %v2356
        %v2387 = vmul.f32 %v2350, %v2356
        %v2388 = vmul.f32 %v2351, %v2356
        %v2389 = vadd.f32 %v2288, %v2357
        %v2390 = vadd.f32 %v2289, %v2358
        %v2391 = vadd.f32 %v2290, %v2359
        %v2392 = vadd.f32 %v2291, %v2360
        %v2393 = vadd.f32 %v2292, %v2361
        %v2394 = vadd.f32 %v2293, %v2362
        %v2395 = vadd.f32 %v2294, %v2363
        %v2396 = vadd.f32 %v2295, %v2364
        %v2397 = vadd.f32 %v2296, %v2365
        %v2398 = vadd.f32 %v2297, %v2366
        %v2399 = vadd.f32 %v2298, %v2367
        %v2400 = vadd.f32 %v2299, %v2368
        %v2401 = vadd.f32 %v2300, %v2369
        %v2402 = vadd.f32 %v2301, %v2370
        %v2403 = vadd.f32 %v2302, %v2371
        %v2404 = vadd.f32 %v2303, %v2372
        %v2405 = vadd.f32 %v2304, %v2373
        %v2406 = vadd.f32 %v2305, %v2374
        %v2407 = vadd.f32 %v2306, %v2375
        %v2408 = vadd.f32 %v2307, %v2376
        %v2409 = vadd.f32 %v2308, %v2377
        %v2410 = vadd.f32 %v2309, %v2378
        %v2411 = vadd.f32 %v2310, %v2379
        %v2412 = vadd.f32 %v2311, %v2380
        %v2413 = vadd.f32 %v2312, %v2381
        %v2414 = vadd.f32 %v2313, %v2382
        %v2415 = vadd.f32 %v2314, %v2383
        %v2416 = vadd.f32 %v2315, %v2384
        %v2417 = vadd.f32 %v2316, %v2385
        %v2418 = vadd.f32 %v2317, %v2386
        %v2419 = vadd.f32 %v2318, %v2387
        %v2420 = vadd.f32 %v2319, %v2388
        %v2421 = vperm.slane %v1888, 5
        %v2422 = vmul.f32 %v2322, %v2421
        %v2423 = vmul.f32 %v2323, %v2421
        %v2424 = vmul.f32 %v2324, %v2421
        %v2425 = vmul.f32 %v2325, %v2421
        %v2426 = vmul.f32 %v2326, %v2421
        %v2427 = vmul.f32 %v2327, %v2421
        %v2428 = vmul.f32 %v2328, %v2421
        %v2429 = vmul.f32 %v2329, %v2421
        %v2430 = vmul.f32 %v2330, %v2421
        %v2431 = vmul.f32 %v2331, %v2421
        %v2432 = vmul.f32 %v2332, %v2421
        %v2433 = vmul.f32 %v2333, %v2421
        %v2434 = vmul.f32 %v2334, %v2421
        %v2435 = vmul.f32 %v2335, %v2421
        %v2436 = vmul.f32 %v2336, %v2421
        %v2437 = vmul.f32 %v2337, %v2421
        %v2438 = vmul.f32 %v2338, %v2421
        %v2439 = vmul.f32 %v2339, %v2421
        %v2440 = vmul.f32 %v2340, %v2421
        %v2441 = vmul.f32 %v2341, %v2421
        %v2442 = vmul.f32 %v2342, %v2421
        %v2443 = vmul.f32 %v2343, %v2421
        %v2444 = vmul.f32 %v2344, %v2421
        %v2445 = vmul.f32 %v2345, %v2421
        %v2446 = vmul.f32 %v2346, %v2421
        %v2447 = vmul.f32 %v2347, %v2421
        %v2448 = vmul.f32 %v2348, %v2421
        %v2449 = vmul.f32 %v2349, %v2421
        %v2450 = vmul.f32 %v2350, %v2421
        %v2451 = vmul.f32 %v2351, %v2421
        %v2452 = vmul.f32 %v2352, %v2421
        %v2453 = vmul.f32 %v2353, %v2421
        %v2454 = vadd.f32 %v2389, %v2422
        %v2455 = vadd.f32 %v2390, %v2423
        %v2456 = vadd.f32 %v2391, %v2424
        %v2457 = vadd.f32 %v2392, %v2425
        %v2458 = vadd.f32 %v2393, %v2426
        %v2459 = vadd.f32 %v2394, %v2427
        %v2460 = vadd.f32 %v2395, %v2428
        %v2461 = vadd.f32 %v2396, %v2429
        %v2462 = vadd.f32 %v2397, %v2430
        %v2463 = vadd.f32 %v2398, %v2431
        %v2464 = vadd.f32 %v2399, %v2432
        %v2465 = vadd.f32 %v2400, %v2433
        %v2466 = vadd.f32 %v2401, %v2434
        %v2467 = vadd.f32 %v2402, %v2435
        %v2468 = vadd.f32 %v2403, %v2436
        %v2469 = vadd.f32 %v2404, %v2437
        %v2470 = vadd.f32 %v2405, %v2438
        %v2471 = vadd.f32 %v2406, %v2439
        %v2472 = vadd.f32 %v2407, %v2440
        %v2473 = vadd.f32 %v2408, %v2441
        %v2474 = vadd.f32 %v2409, %v2442
        %v2475 = vadd.f32 %v2410, %v2443
        %v2476 = vadd.f32 %v2411, %v2444
        %v2477 = vadd.f32 %v2412, %v2445
        %v2478 = vadd.f32 %v2413, %v2446
        %v2479 = vadd.f32 %v2414, %v2447
        %v2480 = vadd.f32 %v2415, %v2448
        %v2481 = vadd.f32 %v2416, %v2449
        %v2482 = vadd.f32 %v2417, %v2450
        %v2483 = vadd.f32 %v2418, %v2451
        %v2484 = vadd.f32 %v2419, %v2452
        %v2485 = vadd.f32 %v2420, %v2453
        %v2486 = vperm.slane %v1889, 0
        %v2487 = vmul.f32 %v2324, %v2486
        %v2488 = vmul.f32 %v2325, %v2486
        %v2489 = vmul.f32 %v2326, %v2486
        %v2490 = vmul.f32 %v2327, %v2486
        %v2491 = vmul.f32 %v2328, %v2486
        %v2492 = vmul.f32 %v2329, %v2486
        %v2493 = vmul.f32 %v2330, %v2486
        %v2494 = vmul.f32 %v2331, %v2486
        %v2495 = vmul.f32 %v2332, %v2486
        %v2496 = vmul.f32 %v2333, %v2486
        %v2497 = vmul.f32 %v2334, %v2486
        %v2498 = vmul.f32 %v2335, %v2486
        %v2499 = vmul.f32 %v2336, %v2486
        %v2500 = vmul.f32 %v2337, %v2486
        %v2501 = vmul.f32 %v2338, %v2486
        %v2502 = vmul.f32 %v2339, %v2486
        %v2503 = vmul.f32 %v2340, %v2486
        %v2504 = vmul.f32 %v2341, %v2486
        %v2505 = vmul.f32 %v2342, %v2486
        %v2506 = vmul.f32 %v2343, %v2486
        %v2507 = vmul.f32 %v2344, %v2486
        %v2508 = vmul.f32 %v2345, %v2486
        %v2509 = vmul.f32 %v2346, %v2486
        %v2510 = vmul.f32 %v2347, %v2486
        %v2511 = vmul.f32 %v2348, %v2486
        %v2512 = vmul.f32 %v2349, %v2486
        %v2513 = vmul.f32 %v2350, %v2486
        %v2514 = vmul.f32 %v2351, %v2486
        %v2515 = vmul.f32 %v2352, %v2486
        %v2516 = vmul.f32 %v2353, %v2486
        %v2517 = vmul.f32 %v2354, %v2486
        %v2518 = vmul.f32 %v2355, %v2486
        %v2519 = vadd.f32 %v2454, %v2487
        %v2520 = vadd.f32 %v2455, %v2488
        %v2521 = vadd.f32 %v2456, %v2489
        %v2522 = vadd.f32 %v2457, %v2490
        %v2523 = vadd.f32 %v2458, %v2491
        %v2524 = vadd.f32 %v2459, %v2492
        %v2525 = vadd.f32 %v2460, %v2493
        %v2526 = vadd.f32 %v2461, %v2494
        %v2527 = vadd.f32 %v2462, %v2495
        %v2528 = vadd.f32 %v2463, %v2496
        %v2529 = vadd.f32 %v2464, %v2497
        %v2530 = vadd.f32 %v2465, %v2498
        %v2531 = vadd.f32 %v2466, %v2499
        %v2532 = vadd.f32 %v2467, %v2500
        %v2533 = vadd.f32 %v2468, %v2501
        %v2534 = vadd.f32 %v2469, %v2502
        %v2535 = vadd.f32 %v2470, %v2503
        %v2536 = vadd.f32 %v2471, %v2504
        %v2537 = vadd.f32 %v2472, %v2505
        %v2538 = vadd.f32 %v2473, %v2506
        %v2539 = vadd.f32 %v2474, %v2507
        %v2540 = vadd.f32 %v2475, %v2508
        %v2541 = vadd.f32 %v2476, %v2509
        %v2542 = vadd.f32 %v2477, %v2510
        %v2543 = vadd.f32 %v2478, %v2511
        %v2544 = vadd.f32 %v2479, %v2512
        %v2545 = vadd.f32 %v2480, %v2513
        %v2546 = vadd.f32 %v2481, %v2514
        %v2547 = vadd.f32 %v2482, %v2515
        %v2548 = vadd.f32 %v2483, %v2516
        %v2549 = vadd.f32 %v2484, %v2517
        %v2550 = vadd.f32 %v2485, %v2518
        %v2551 = vld [vmem:[%s4] sm:$0x1]
        %v2552 = vperm.slane %v2551, 0
        %v2553 = vadd.f32 %v2519, %v2552
        %v2554 = vadd.f32 %v2520, %v2552
        %v2555 = vadd.f32 %v2521, %v2552
        %v2556 = vadd.f32 %v2522, %v2552
        %v2557 = vadd.f32 %v2523, %v2552
        %v2558 = vadd.f32 %v2524, %v2552
        %v2559 = vadd.f32 %v2525, %v2552
        %v2560 = vadd.f32 %v2526, %v2552
        %v2561 = vadd.f32 %v2527, %v2552
        %v2562 = vadd.f32 %v2528, %v2552
        %v2563 = vadd.f32 %v2529, %v2552
        %v2564 = vadd.f32 %v2530, %v2552
        %v2565 = vadd.f32 %v2531, %v2552
        %v2566 = vadd.f32 %v2532, %v2552
        %v2567 = vadd.f32 %v2533, %v2552
        %v2568 = vadd.f32 %v2534, %v2552
        %v2569 = vadd.f32 %v2535, %v2552
        %v2570 = vadd.f32 %v2536, %v2552
        %v2571 = vadd.f32 %v2537, %v2552
        %v2572 = vadd.f32 %v2538, %v2552
        %v2573 = vadd.f32 %v2539, %v2552
        %v2574 = vadd.f32 %v2540, %v2552
        %v2575 = vadd.f32 %v2541, %v2552
        %v2576 = vadd.f32 %v2542, %v2552
        %v2577 = vadd.f32 %v2543, %v2552
        %v2578 = vadd.f32 %v2544, %v2552
        %v2579 = vadd.f32 %v2545, %v2552
        %v2580 = vadd.f32 %v2546, %v2552
        %v2581 = vadd.f32 %v2547, %v2552
        %v2582 = vadd.f32 %v2548, %v2552
        %v2583 = vadd.f32 %v2549, %v2552
        %v2584 = vadd.f32 %v2550, %v2552
        %v2585 = vmul.f32 %v2553, %v2553
        %v2586 = vmul.f32 %v2554, %v2554
        %v2587 = vmul.f32 %v2555, %v2555
        %v2588 = vmul.f32 %v2556, %v2556
        %v2589 = vmul.f32 %v2557, %v2557
        %v2590 = vmul.f32 %v2558, %v2558
        %v2591 = vmul.f32 %v2559, %v2559
        %v2592 = vmul.f32 %v2560, %v2560
        %v2593 = vmul.f32 %v2561, %v2561
        %v2594 = vmul.f32 %v2562, %v2562
        %v2595 = vmul.f32 %v2563, %v2563
        %v2596 = vmul.f32 %v2564, %v2564
        %v2597 = vmul.f32 %v2565, %v2565
        %v2598 = vmul.f32 %v2566, %v2566
        %v2599 = vmul.f32 %v2567, %v2567
        %v2600 = vmul.f32 %v2568, %v2568
        %v2601 = vmul.f32 %v2569, %v2569
        %v2602 = vmul.f32 %v2570, %v2570
        %v2603 = vmul.f32 %v2571, %v2571
        %v2604 = vmul.f32 %v2572, %v2572
        %v2605 = vmul.f32 %v2573, %v2573
        %v2606 = vmul.f32 %v2574, %v2574
        %v2607 = vmul.f32 %v2575, %v2575
        %v2608 = vmul.f32 %v2576, %v2576
        %v2609 = vmul.f32 %v2577, %v2577
        %v2610 = vmul.f32 %v2578, %v2578
        %v2611 = vmul.f32 %v2579, %v2579
        %v2612 = vmul.f32 %v2580, %v2580
        %v2613 = vmul.f32 %v2581, %v2581
        %v2614 = vmul.f32 %v2582, %v2582
        %v2615 = vmul.f32 %v2583, %v2583
        %v2616 = vmul.f32 %v2584, %v2584
        %v2617 = vmul.f32 %v2553, %v2585
        %v2618 = vmul.f32 %v2554, %v2586
        %v2619 = vmul.f32 %v2555, %v2587
        %v2620 = vmul.f32 %v2556, %v2588
        %v2621 = vmul.f32 %v2557, %v2589
        %v2622 = vmul.f32 %v2558, %v2590
        %v2623 = vmul.f32 %v2559, %v2591
        %v2624 = vmul.f32 %v2560, %v2592
        %v2625 = vmul.f32 %v2561, %v2593
        %v2626 = vmul.f32 %v2562, %v2594
        %v2627 = vmul.f32 %v2563, %v2595
        %v2628 = vmul.f32 %v2564, %v2596
        %v2629 = vmul.f32 %v2565, %v2597
        %v2630 = vmul.f32 %v2566, %v2598
        %v2631 = vmul.f32 %v2567, %v2599
        %v2632 = vmul.f32 %v2568, %v2600
        %v2633 = vmul.f32 %v2569, %v2601
        %v2634 = vmul.f32 %v2570, %v2602
        %v2635 = vmul.f32 %v2571, %v2603
        %v2636 = vmul.f32 %v2572, %v2604
        %v2637 = vmul.f32 %v2573, %v2605
        %v2638 = vmul.f32 %v2574, %v2606
        %v2639 = vmul.f32 %v2575, %v2607
        %v2640 = vmul.f32 %v2576, %v2608
        %v2641 = vmul.f32 %v2577, %v2609
        %v2642 = vmul.f32 %v2578, %v2610
        %v2643 = vmul.f32 %v2579, %v2611
        %v2644 = vmul.f32 %v2580, %v2612
        %v2645 = vmul.f32 %v2581, %v2613
        %v2646 = vmul.f32 %v2582, %v2614
        %v2647 = vmul.f32 %v2583, %v2615
        %v2648 = vmul.f32 %v2584, %v2616
        %v2649 = vmul.f32 %v2617, 0.044715
        %v2650 = vmul.f32 %v2618, 0.044715
        %v2651 = vmul.f32 %v2619, 0.044715
        %v2652 = vmul.f32 %v2620, 0.044715
        %v2653 = vmul.f32 %v2621, 0.044715
        %v2654 = vmul.f32 %v2622, 0.044715
        %v2655 = vmul.f32 %v2623, 0.044715
        %v2656 = vmul.f32 %v2624, 0.044715
        %v2657 = vmul.f32 %v2625, 0.044715
        %v2658 = vmul.f32 %v2626, 0.044715
        %v2659 = vmul.f32 %v2627, 0.044715
        %v2660 = vmul.f32 %v2628, 0.044715
        %v2661 = vmul.f32 %v2629, 0.044715
        %v2662 = vmul.f32 %v2630, 0.044715
        %v2663 = vmul.f32 %v2631, 0.044715
        %v2664 = vmul.f32 %v2632, 0.044715
        %v2665 = vmul.f32 %v2633, 0.044715
        %v2666 = vmul.f32 %v2634, 0.044715
        %v2667 = vmul.f32 %v2635, 0.044715
        %v2668 = vmul.f32 %v2636, 0.044715
        %v2669 = vmul.f32 %v2637, 0.044715
        %v2670 = vmul.f32 %v2638, 0.044715
        %v2671 = vmul.f32 %v2639, 0.044715
        %v2672 = vmul.f32 %v2640, 0.044715
        %v2673 = vmul.f32 %v2641, 0.044715
        %v2674 = vmul.f32 %v2642, 0.044715
        %v2675 = vmul.f32 %v2643, 0.044715
        %v2676 = vmul.f32 %v2644, 0.044715
        %v2677 = vmul.f32 %v2645, 0.044715
        %v2678 = vmul.f32 %v2646, 0.044715
        %v2679 = vmul.f32 %v2647, 0.044715
        %v2680 = vmul.f32 %v2648, 0.044715
        %v2681 = vadd.f32 %v2553, %v2649
        %v2682 = vadd.f32 %v2554, %v2650
        %v2683 = vadd.f32 %v2555, %v2651
        %v2684 = vadd.f32 %v2556, %v2652
        %v2685 = vadd.f32 %v2557, %v2653
        %v2686 = vadd.f32 %v2558, %v2654
        %v2687 = vadd.f32 %v2559, %v2655
        %v2688 = vadd.f32 %v2560, %v2656
        %v2689 = vadd.f32 %v2561, %v2657
        %v2690 = vadd.f32 %v2562, %v2658
        %v2691 = vadd.f32 %v2563, %v2659
        %v2692 = vadd.f32 %v2564, %v2660
        %v2693 = vadd.f32 %v2565, %v2661
        %v2694 = vadd.f32 %v2566, %v2662
        %v2695 = vadd.f32 %v2567, %v2663
        %v2696 = vadd.f32 %v2568, %v2664
        %v2697 = vadd.f32 %v2569, %v2665
        %v2698 = vadd.f32 %v2570, %v2666
        %v2699 = vadd.f32 %v2571, %v2667
        %v2700 = vadd.f32 %v2572, %v2668
        %v2701 = vadd.f32 %v2573, %v2669
        %v2702 = vadd.f32 %v2574, %v2670
        %v2703 = vadd.f32 %v2575, %v2671
        %v2704 = vadd.f32 %v2576, %v2672
        %v2705 = vadd.f32 %v2577, %v2673
        %v2706 = vadd.f32 %v2578, %v2674
        %v2707 = vadd.f32 %v2579, %v2675
        %v2708 = vadd.f32 %v2580, %v2676
        %v2709 = vadd.f32 %v2581, %v2677
        %v2710 = vadd.f32 %v2582, %v2678
        %v2711 = vadd.f32 %v2583, %v2679
        %v2712 = vadd.f32 %v2584, %v2680
        %v2713 = vmul.f32 %v2681, 0.7978846
        %v2714 = vmul.f32 %v2682, 0.7978846
        %v2715 = vmul.f32 %v2683, 0.7978846
        %v2716 = vmul.f32 %v2684, 0.7978846
        %v2717 = vmul.f32 %v2685, 0.7978846
        %v2718 = vmul.f32 %v2686, 0.7978846
        %v2719 = vmul.f32 %v2687, 0.7978846
        %v2720 = vmul.f32 %v2688, 0.7978846
        %v2721 = vmul.f32 %v2689, 0.7978846
        %v2722 = vmul.f32 %v2690, 0.7978846
        %v2723 = vmul.f32 %v2691, 0.7978846
        %v2724 = vmul.f32 %v2692, 0.7978846
        %v2725 = vmul.f32 %v2693, 0.7978846
        %v2726 = vmul.f32 %v2694, 0.7978846
        %v2727 = vmul.f32 %v2695, 0.7978846
        %v2728 = vmul.f32 %v2696, 0.7978846
        %v2729 = vmul.f32 %v2697, 0.7978846
        %v2730 = vmul.f32 %v2698, 0.7978846
        %v2731 = vmul.f32 %v2699, 0.7978846
        %v2732 = vmul.f32 %v2700, 0.7978846
        %v2733 = vmul.f32 %v2701, 0.7978846
        %v2734 = vmul.f32 %v2702, 0.7978846
        %v2735 = vmul.f32 %v2703, 0.7978846
        %v2736 = vmul.f32 %v2704, 0.7978846
        %v2737 = vmul.f32 %v2705, 0.7978846
        %v2738 = vmul.f32 %v2706, 0.7978846
        %v2739 = vmul.f32 %v2707, 0.7978846
        %v2740 = vmul.f32 %v2708, 0.7978846
        %v2741 = vmul.f32 %v2709, 0.7978846
        %v2742 = vmul.f32 %v2710, 0.7978846
        %v2743 = vmul.f32 %v2711, 0.7978846
        %v2744 = vmul.f32 %v2712, 0.7978846
        %v2745 = vtanh.pop %v2713
        %v2746 = vtanh.pop %v2714
        %v2747 = vtanh.pop %v2715
        %v2748 = vtanh.pop %v2716
        %v2749 = vtanh.pop %v2717
        %v2750 = vtanh.pop %v2718
        %v2751 = vtanh.pop %v2719
        %v2752 = vtanh.pop %v2720
        %v2753 = vtanh.pop %v2721
        %v2754 = vtanh.pop %v2722
        %v2755 = vtanh.pop %v2723
        %v2756 = vtanh.pop %v2724
        %v2757 = vtanh.pop %v2725
        %v2758 = vtanh.pop %v2726
        %v2759 = vtanh.pop %v2727
        %v2760 = vtanh.pop %v2728
        %v2761 = vtanh.pop %v2729
        %v2762 = vtanh.pop %v2730
        %v2763 = vtanh.pop %v2731
        %v2764 = vtanh.pop %v2732
        %v2765 = vtanh.pop %v2733
        %v2766 = vtanh.pop %v2734
        %v2767 = vtanh.pop %v2735
        %v2768 = vtanh.pop %v2736
        %v2769 = vtanh.pop %v2737
        %v2770 = vtanh.pop %v2738
        %v2771 = vtanh.pop %v2739
        %v2772 = vtanh.pop %v2740
        %v2773 = vtanh.pop %v2741
        %v2774 = vtanh.pop %v2742
        %v2775 = vtanh.pop %v2743
        %v2776 = vtanh.pop %v2744
        %v2777 = vadd.f32 %v2745, 1.0
        %v2778 = vadd.f32 %v2746, 1.0
        %v2779 = vadd.f32 %v2747, 1.0
        %v2780 = vadd.f32 %v2748, 1.0
        %v2781 = vadd.f32 %v2749, 1.0
        %v2782 = vadd.f32 %v2750, 1.0
        %v2783 = vadd.f32 %v2751, 1.0
        %v2784 = vadd.f32 %v2752, 1.0
        %v2785 = vadd.f32 %v2753, 1.0
        %v2786 = vadd.f32 %v2754, 1.0
        %v2787 = vadd.f32 %v2755, 1.0
        %v2788 = vadd.f32 %v2756, 1.0
        %v2789 = vadd.f32 %v2757, 1.0
        %v2790 = vadd.f32 %v2758, 1.0
        %v2791 = vadd.f32 %v2759, 1.0
        %v2792 = vadd.f32 %v2760, 1.0
        %v2793 = vadd.f32 %v2761, 1.0
        %v2794 = vadd.f32 %v2762, 1.0
        %v2795 = vadd.f32 %v2763, 1.0
        %v2796 = vadd.f32 %v2764, 1.0
        %v2797 = vadd.f32 %v2765, 1.0
        %v2798 = vadd.f32 %v2766, 1.0
        %v2799 = vadd.f32 %v2767, 1.0
        %v2800 = vadd.f32 %v2768, 1.0
        %v2801 = vadd.f32 %v2769, 1.0
        %v2802 = vadd.f32 %v2770, 1.0
        %v2803 = vadd.f32 %v2771, 1.0
        %v2804 = vadd.f32 %v2772, 1.0
        %v2805 = vadd.f32 %v2773, 1.0
        %v2806 = vadd.f32 %v2774, 1.0
        %v2807 = vadd.f32 %v2775, 1.0
        %v2808 = vadd.f32 %v2776, 1.0
        %v2809 = vmul.f32 %v2777, 0.5
        %v2810 = vmul.f32 %v2778, 0.5
        %v2811 = vmul.f32 %v2779, 0.5
        %v2812 = vmul.f32 %v2780, 0.5
        %v2813 = vmul.f32 %v2781, 0.5
        %v2814 = vmul.f32 %v2782, 0.5
        %v2815 = vmul.f32 %v2783, 0.5
        %v2816 = vmul.f32 %v2784, 0.5
        %v2817 = vmul.f32 %v2785, 0.5
        %v2818 = vmul.f32 %v2786, 0.5
        %v2819 = vmul.f32 %v2787, 0.5
        %v2820 = vmul.f32 %v2788, 0.5
        %v2821 = vmul.f32 %v2789, 0.5
        %v2822 = vmul.f32 %v2790, 0.5
        %v2823 = vmul.f32 %v2791, 0.5
        %v2824 = vmul.f32 %v2792, 0.5
        %v2825 = vmul.f32 %v2793, 0.5
        %v2826 = vmul.f32 %v2794, 0.5
        %v2827 = vmul.f32 %v2795, 0.5
        %v2828 = vmul.f32 %v2796, 0.5
        %v2829 = vmul.f32 %v2797, 0.5
        %v2830 = vmul.f32 %v2798, 0.5
        %v2831 = vmul.f32 %v2799, 0.5
        %v2832 = vmul.f32 %v2800, 0.5
        %v2833 = vmul.f32 %v2801, 0.5
        %v2834 = vmul.f32 %v2802, 0.5
        %v2835 = vmul.f32 %v2803, 0.5
        %v2836 = vmul.f32 %v2804, 0.5
        %v2837 = vmul.f32 %v2805, 0.5
        %v2838 = vmul.f32 %v2806, 0.5
        %v2839 = vmul.f32 %v2807, 0.5
        %v2840 = vmul.f32 %v2808, 0.5
        %v2841 = vmul.f32 %v2553, %v2809
        %v2842 = vmul.f32 %v2554, %v2810
        %v2843 = vmul.f32 %v2555, %v2811
        %v2844 = vmul.f32 %v2556, %v2812
        %v2845 = vmul.f32 %v2557, %v2813
        %v2846 = vmul.f32 %v2558, %v2814
        %v2847 = vmul.f32 %v2559, %v2815
        %v2848 = vmul.f32 %v2560, %v2816
        %v2849 = vmul.f32 %v2561, %v2817
        %v2850 = vmul.f32 %v2562, %v2818
        %v2851 = vmul.f32 %v2563, %v2819
        %v2852 = vmul.f32 %v2564, %v2820
        %v2853 = vmul.f32 %v2565, %v2821
        %v2854 = vmul.f32 %v2566, %v2822
        %v2855 = vmul.f32 %v2567, %v2823
        %v2856 = vmul.f32 %v2568, %v2824
        %v2857 = vmul.f32 %v2569, %v2825
        %v2858 = vmul.f32 %v2570, %v2826
        %v2859 = vmul.f32 %v2571, %v2827
        %v2860 = vmul.f32 %v2572, %v2828
        %v2861 = vmul.f32 %v2573, %v2829
        %v2862 = vmul.f32 %v2574, %v2830
        %v2863 = vmul.f32 %v2575, %v2831
        %v2864 = vmul.f32 %v2576, %v2832
        %v2865 = vmul.f32 %v2577, %v2833
        %v2866 = vmul.f32 %v2578, %v2834
        %v2867 = vmul.f32 %v2579, %v2835
        %v2868 = vmul.f32 %v2580, %v2836
        %v2869 = vmul.f32 %v2581, %v2837
        %v2870 = vmul.f32 %v2582, %v2838
        %v2871 = vmul.f32 %v2583, %v2839
        %v2872 = vmul.f32 %v2584, %v2840
        %2873 = vst.msk [vmem:[%s1855 + $0x8] sm:$0xff] %vm223, %v2841
        %2874 = vst.msk [vmem:[%s1855 + $0x10] sm:$0xff] %vm223, %v2842
        %2875 = vst.msk [vmem:[%s1855 + $0x28] sm:$0xff] %vm223, %v2843
        %2876 = vst.msk [vmem:[%s1855 + $0x30] sm:$0xff] %vm223, %v2844
        %2877 = vst.msk [vmem:[%s1855 + $0x48] sm:$0xff] %vm223, %v2845
        %2878 = vst.msk [vmem:[%s1855 + $0x50] sm:$0xff] %vm223, %v2846
        %2879 = vst.msk [vmem:[%s1855 + $0x68] sm:$0xff] %vm223, %v2847
        %2880 = vst.msk [vmem:[%s1855 + $0x70] sm:$0xff] %vm223, %v2848
        %2881 = vst.msk [vmem:[%s1855 + $0x88] sm:$0xff] %vm223, %v2849
        %2882 = vst.msk [vmem:[%s1855 + $0x90] sm:$0xff] %vm223, %v2850
        %2883 = vst.msk [vmem:[%s1855 + $0xa8] sm:$0xff] %vm223, %v2851
        %2884 = vst.msk [vmem:[%s1855 + $0xb0] sm:$0xff] %vm223, %v2852
        %2885 = vst.msk [vmem:[%s1855 + $0xc8] sm:$0xff] %vm223, %v2853
        %2886 = vst.msk [vmem:[%s1855 + $0xd0] sm:$0xff] %vm223, %v2854
        %2887 = vst.msk [vmem:[%s1855 + $0xe8] sm:$0xff] %vm223, %v2855
        %2888 = vst.msk [vmem:[%s1855 + $0xf0] sm:$0xff] %vm223, %v2856
        %2889 = vst.msk [vmem:[%s1855 + $0x108] sm:$0xff] %vm223, %v2857
        %2890 = vst.msk [vmem:[%s1855 + $0x110] sm:$0xff] %vm223, %v2858
        %2891 = vst.msk [vmem:[%s1855 + $0x128] sm:$0xff] %vm223, %v2859
        %2892 = vst.msk [vmem:[%s1855 + $0x130] sm:$0xff] %vm223, %v2860
        %2893 = vst.msk [vmem:[%s1855 + $0x148] sm:$0xff] %vm223, %v2861
        %2894 = vst.msk [vmem:[%s1855 + $0x150] sm:$0xff] %vm223, %v2862
        %2895 = vst.msk [vmem:[%s1855 + $0x168] sm:$0xff] %vm223, %v2863
        %2896 = vst.msk [vmem:[%s1855 + $0x170] sm:$0xff] %vm223, %v2864
        %2897 = vst.msk [vmem:[%s1855 + $0x188] sm:$0xff] %vm223, %v2865
        %2898 = vst.msk [vmem:[%s1855 + $0x190] sm:$0xff] %vm223, %v2866
        %2899 = vst.msk [vmem:[%s1855 + $0x1a8] sm:$0xff] %vm223, %v2867
        %2900 = vst.msk [vmem:[%s1855 + $0x1b0] sm:$0xff] %vm223, %v2868
        %2901 = vst.msk [vmem:[%s1855 + $0x1c8] sm:$0xff] %vm223, %v2869
        %2902 = vst.msk [vmem:[%s1855 + $0x1d0] sm:$0xff] %vm223, %v2870
        %2903 = vst.msk [vmem:[%s1855 + $0x1e8] sm:$0xff] %vm223, %v2871
        %2904 = vst.msk [vmem:[%s1855 + $0x1f0] sm:$0xff] %vm223, %v2872
        %s2905 = scalar_lea.vmem %s3, 16
        %v2906 = vld [vmem:[%s2905] sm:$0xff]
        %v2907 = vld [vmem:[%s2905 + $0x8] sm:$0x1]
        %v2908 = vld [vmem:[#allocation2 + $0x26] sm:$0xff]
        %v2909 = vld [vmem:[#allocation2 + $0x2e] sm:$0xff]
        %v2910 = vld [vmem:[#allocation2 + $0x46] sm:$0xff]
        %v2911 = vld [vmem:[#allocation2 + $0x4e] sm:$0xff]
        %v2912 = vld [vmem:[#allocation2 + $0x66] sm:$0xff]
        %v2913 = vld [vmem:[#allocation2 + $0x6e] sm:$0xff]
        %v2914 = vld [vmem:[#allocation2 + $0x86] sm:$0xff]
        %v2915 = vld [vmem:[#allocation2 + $0x8e] sm:$0xff]
        %v2916 = vld [vmem:[#allocation2 + $0xa6] sm:$0xff]
        %v2917 = vld [vmem:[#allocation2 + $0xae] sm:$0xff]
        %v2918 = vld [vmem:[#allocation2 + $0xc6] sm:$0xff]
        %v2919 = vld [vmem:[#allocation2 + $0xce] sm:$0xff]
        %v2920 = vld [vmem:[#allocation2 + $0xe6] sm:$0xff]
        %v2921 = vld [vmem:[#allocation2 + $0xee] sm:$0xff]
        %v2922 = vld [vmem:[#allocation2 + $0x106] sm:$0xff]
        %v2923 = vld [vmem:[#allocation2 + $0x10e] sm:$0xff]
        %v2924 = vld [vmem:[#allocation2 + $0x126] sm:$0xff]
        %v2925 = vld [vmem:[#allocation2 + $0x12e] sm:$0xff]
        %v2926 = vld [vmem:[#allocation2 + $0x146] sm:$0xff]
        %v2927 = vld [vmem:[#allocation2 + $0x14e] sm:$0xff]
        %v2928 = vld [vmem:[#allocation2 + $0x166] sm:$0xff]
        %v2929 = vld [vmem:[#allocation2 + $0x16e] sm:$0xff]
        %v2930 = vld [vmem:[#allocation2 + $0x186] sm:$0xff]
        %v2931 = vld [vmem:[#allocation2 + $0x18e] sm:$0xff]
        %v2932 = vld [vmem:[#allocation2 + $0x1a6] sm:$0xff]
        %v2933 = vld [vmem:[#allocation2 + $0x1ae] sm:$0xff]
        %v2934 = vld [vmem:[#allocation2 + $0x1c6] sm:$0xff]
        %v2935 = vld [vmem:[#allocation2 + $0x1ce] sm:$0xff]
        %v2936 = vld [vmem:[#allocation2 + $0x1e6] sm:$0xff]
        %v2937 = vld [vmem:[#allocation2 + $0x1ee] sm:$0xff]
        %v2938 = vld [vmem:[#allocation2 + $0x206] sm:$0xff]
        %v2939 = vld [vmem:[#allocation2 + $0x20e] sm:$0xff]
        %v2940 = vld [vmem:[#allocation2 + $0x226] sm:$0xff]
        %v2941 = vld [vmem:[#allocation2 + $0x22e] sm:$0xff]
        %v2942 = vld [vmem:[#allocation2 + $0x246] sm:$0xff]
        %v2943 = vld [vmem:[#allocation2 + $0x24e] sm:$0xff]
        %v2944 = vld [vmem:[#allocation2 + $0x266] sm:$0xff]
        %v2945 = vld [vmem:[#allocation2 + $0x26e] sm:$0xff]
        %v2946 = vld [vmem:[#allocation2 + $0x286] sm:$0xff]
        %v2947 = vld [vmem:[#allocation2 + $0x28e] sm:$0xff]
        %v2948 = vperm.slane %v2906, 0
        %v2949 = vmul.f32 %v2908, %v2948
        %v2950 = vmul.f32 %v2909, %v2948
        %v2951 = vmul.f32 %v2910, %v2948
        %v2952 = vmul.f32 %v2911, %v2948
        %v2953 = vmul.f32 %v2912, %v2948
        %v2954 = vmul.f32 %v2913, %v2948
        %v2955 = vmul.f32 %v2914, %v2948
        %v2956 = vmul.f32 %v2915, %v2948
        %v2957 = vmul.f32 %v2916, %v2948
        %v2958 = vmul.f32 %v2917, %v2948
        %v2959 = vmul.f32 %v2918, %v2948
        %v2960 = vmul.f32 %v2919, %v2948
        %v2961 = vmul.f32 %v2920, %v2948
        %v2962 = vmul.f32 %v2921, %v2948
        %v2963 = vmul.f32 %v2922, %v2948
        %v2964 = vmul.f32 %v2923, %v2948
        %v2965 = vmul.f32 %v2924, %v2948
        %v2966 = vmul.f32 %v2925, %v2948
        %v2967 = vmul.f32 %v2926, %v2948
        %v2968 = vmul.f32 %v2927, %v2948
        %v2969 = vmul.f32 %v2928, %v2948
        %v2970 = vmul.f32 %v2929, %v2948
        %v2971 = vmul.f32 %v2930, %v2948
        %v2972 = vmul.f32 %v2931, %v2948
        %v2973 = vmul.f32 %v2932, %v2948
        %v2974 = vmul.f32 %v2933, %v2948
        %v2975 = vmul.f32 %v2934, %v2948
        %v2976 = vmul.f32 %v2935, %v2948
        %v2977 = vmul.f32 %v2936, %v2948
        %v2978 = vmul.f32 %v2937, %v2948
        %v2979 = vmul.f32 %v2938, %v2948
        %v2980 = vmul.f32 %v2939, %v2948
        %v2981 = vperm.slane %v2906, 3
        %v2982 = vmul.f32 %v2912, %v2981
        %v2983 = vmul.f32 %v2913, %v2981
        %v2984 = vmul.f32 %v2914, %v2981
        %v2985 = vmul.f32 %v2915, %v2981
        %v2986 = vmul.f32 %v2916, %v2981
        %v2987 = vmul.f32 %v2917, %v2981
        %v2988 = vmul.f32 %v2918, %v2981
        %v2989 = vmul.f32 %v2919, %v2981
        %v2990 = vmul.f32 %v2920, %v2981
        %v2991 = vmul.f32 %v2921, %v2981
        %v2992 = vmul.f32 %v2922, %v2981
        %v2993 = vmul.f32 %v2923, %v2981
        %v2994 = vmul.f32 %v2924, %v2981
        %v2995 = vmul.f32 %v2925, %v2981
        %v2996 = vmul.f32 %v2926, %v2981
        %v2997 = vmul.f32 %v2927, %v2981
        %v2998 = vmul.f32 %v2928, %v2981
        %v2999 = vmul.f32 %v2929, %v2981
        %v3000 = vmul.f32 %v2930, %v2981
        %v3001 = vmul.f32 %v2931, %v2981
        %v3002 = vmul.f32 %v2932, %v2981
        %v3003 = vmul.f32 %v2933, %v2981
        %v3004 = vmul.f32 %v2934, %v2981
        %v3005 = vmul.f32 %v2935, %v2981
        %v3006 = vmul.f32 %v2936, %v2981
        %v3007 = vmul.f32 %v2937, %v2981
        %v3008 = vmul.f32 %v2938, %v2981
        %v3009 = vmul.f32 %v2939, %v2981
        %v3010 = vmul.f32 %v2940, %v2981
        %v3011 = vmul.f32 %v2941, %v2981
        %v3012 = vmul.f32 %v2942, %v2981
        %v3013 = vmul.f32 %v2943, %v2981
        %v3014 = vadd.f32 %v2949, %v2982
        %v3015 = vadd.f32 %v2950, %v2983
        %v3016 = vadd.f32 %v2951, %v2984
        %v3017 = vadd.f32 %v2952, %v2985
        %v3018 = vadd.f32 %v2953, %v2986
        %v3019 = vadd.f32 %v2954, %v2987
        %v3020 = vadd.f32 %v2955, %v2988
        %v3021 = vadd.f32 %v2956, %v2989
        %v3022 = vadd.f32 %v2957, %v2990
        %v3023 = vadd.f32 %v2958, %v2991
        %v3024 = vadd.f32 %v2959, %v2992
        %v3025 = vadd.f32 %v2960, %v2993
        %v3026 = vadd.f32 %v2961, %v2994
        %v3027 = vadd.f32 %v2962, %v2995
        %v3028 = vadd.f32 %v2963, %v2996
        %v3029 = vadd.f32 %v2964, %v2997
        %v3030 = vadd.f32 %v2965, %v2998
        %v3031 = vadd.f32 %v2966, %v2999
        %v3032 = vadd.f32 %v2967, %v3000
        %v3033 = vadd.f32 %v2968, %v3001
        %v3034 = vadd.f32 %v2969, %v3002
        %v3035 = vadd.f32 %v2970, %v3003
        %v3036 = vadd.f32 %v2971, %v3004
        %v3037 = vadd.f32 %v2972, %v3005
        %v3038 = vadd.f32 %v2973, %v3006
        %v3039 = vadd.f32 %v2974, %v3007
        %v3040 = vadd.f32 %v2975, %v3008
        %v3041 = vadd.f32 %v2976, %v3009
        %v3042 = vadd.f32 %v2977, %v3010
        %v3043 = vadd.f32 %v2978, %v3011
        %v3044 = vadd.f32 %v2979, %v3012
        %v3045 = vadd.f32 %v2980, %v3013
        %v3046 = vperm.slane %v2906, 6
        %v3047 = vmul.f32 %v2916, %v3046
        %v3048 = vmul.f32 %v2917, %v3046
        %v3049 = vmul.f32 %v2918, %v3046
        %v3050 = vmul.f32 %v2919, %v3046
        %v3051 = vmul.f32 %v2920, %v3046
        %v3052 = vmul.f32 %v2921, %v3046
        %v3053 = vmul.f32 %v2922, %v3046
        %v3054 = vmul.f32 %v2923, %v3046
        %v3055 = vmul.f32 %v2924, %v3046
        %v3056 = vmul.f32 %v2925, %v3046
        %v3057 = vmul.f32 %v2926, %v3046
        %v3058 = vmul.f32 %v2927, %v3046
        %v3059 = vmul.f32 %v2928, %v3046
        %v3060 = vmul.f32 %v2929, %v3046
        %v3061 = vmul.f32 %v2930, %v3046
        %v3062 = vmul.f32 %v2931, %v3046
        %v3063 = vmul.f32 %v2932, %v3046
        %v3064 = vmul.f32 %v2933, %v3046
        %v3065 = vmul.f32 %v2934, %v3046
        %v3066 = vmul.f32 %v2935, %v3046
        %v3067 = vmul.f32 %v2936, %v3046
        %v3068 = vmul.f32 %v2937, %v3046
        %v3069 = vmul.f32 %v2938, %v3046
        %v3070 = vmul.f32 %v2939, %v3046
        %v3071 = vmul.f32 %v2940, %v3046
        %v3072 = vmul.f32 %v2941, %v3046
        %v3073 = vmul.f32 %v2942, %v3046
        %v3074 = vmul.f32 %v2943, %v3046
        %v3075 = vmul.f32 %v2944, %v3046
        %v3076 = vmul.f32 %v2945, %v3046
        %v3077 = vmul.f32 %v2946, %v3046
        %v3078 = vmul.f32 %v2947, %v3046
        %v3079 = vadd.f32 %v3014, %v3047
        %v3080 = vadd.f32 %v3015, %v3048
        %v3081 = vadd.f32 %v3016, %v3049
        %v3082 = vadd.f32 %v3017, %v3050
        %v3083 = vadd.f32 %v3018, %v3051
        %v3084 = vadd.f32 %v3019, %v3052
        %v3085 = vadd.f32 %v3020, %v3053
        %v3086 = vadd.f32 %v3021, %v3054
        %v3087 = vadd.f32 %v3022, %v3055
        %v3088 = vadd.f32 %v3023, %v3056
        %v3089 = vadd.f32 %v3024, %v3057
        %v3090 = vadd.f32 %v3025, %v3058
        %v3091 = vadd.f32 %v3026, %v3059
        %v3092 = vadd.f32 %v3027, %v3060
        %v3093 = vadd.f32 %v3028, %v3061
        %v3094 = vadd.f32 %v3029, %v3062
        %v3095 = vadd.f32 %v3030, %v3063
        %v3096 = vadd.f32 %v3031, %v3064
        %v3097 = vadd.f32 %v3032, %v3065
        %v3098 = vadd.f32 %v3033, %v3066
        %v3099 = vadd.f32 %v3034, %v3067
        %v3100 = vadd.f32 %v3035, %v3068
        %v3101 = vadd.f32 %v3036, %v3069
        %v3102 = vadd.f32 %v3037, %v3070
        %v3103 = vadd.f32 %v3038, %v3071
        %v3104 = vadd.f32 %v3039, %v3072
        %v3105 = vadd.f32 %v3040, %v3073
        %v3106 = vadd.f32 %v3041, %v3074
        %v3107 = vadd.f32 %v3042, %v3075
        %v3108 = vadd.f32 %v3043, %v3076
        %v3109 = vadd.f32 %v3044, %v3077
        %v3110 = vadd.f32 %v3045, %v3078
        %v3111 = vld [vmem:[#allocation2 + $0x28] sm:$0xff]
        %v3112 = vld [vmem:[#allocation2 + $0x30] sm:$0xff]
        %v3113 = vld [vmem:[#allocation2 + $0x48] sm:$0xff]
        %v3114 = vld [vmem:[#allocation2 + $0x50] sm:$0xff]
        %v3115 = vld [vmem:[#allocation2 + $0x68] sm:$0xff]
        %v3116 = vld [vmem:[#allocation2 + $0x70] sm:$0xff]
        %v3117 = vld [vmem:[#allocation2 + $0x88] sm:$0xff]
        %v3118 = vld [vmem:[#allocation2 + $0x90] sm:$0xff]
        %v3119 = vld [vmem:[#allocation2 + $0xa8] sm:$0xff]
        %v3120 = vld [vmem:[#allocation2 + $0xb0] sm:$0xff]
        %v3121 = vld [vmem:[#allocation2 + $0xc8] sm:$0xff]
        %v3122 = vld [vmem:[#allocation2 + $0xd0] sm:$0xff]
        %v3123 = vld [vmem:[#allocation2 + $0xe8] sm:$0xff]
        %v3124 = vld [vmem:[#allocation2 + $0xf0] sm:$0xff]
        %v3125 = vld [vmem:[#allocation2 + $0x108] sm:$0xff]
        %v3126 = vld [vmem:[#allocation2 + $0x110] sm:$0xff]
        %v3127 = vld [vmem:[#allocation2 + $0x128] sm:$0xff]
        %v3128 = vld [vmem:[#allocation2 + $0x130] sm:$0xff]
        %v3129 = vld [vmem:[#allocation2 + $0x148] sm:$0xff]
        %v3130 = vld [vmem:[#allocation2 + $0x150] sm:$0xff]
        %v3131 = vld [vmem:[#allocation2 + $0x168] sm:$0xff]
        %v3132 = vld [vmem:[#allocation2 + $0x170] sm:$0xff]
        %v3133 = vld [vmem:[#allocation2 + $0x188] sm:$0xff]
        %v3134 = vld [vmem:[#allocation2 + $0x190] sm:$0xff]
        %v3135 = vld [vmem:[#allocation2 + $0x1a8] sm:$0xff]
        %v3136 = vld [vmem:[#allocation2 + $0x1b0] sm:$0xff]
        %v3137 = vld [vmem:[#allocation2 + $0x1c8] sm:$0xff]
        %v3138 = vld [vmem:[#allocation2 + $0x1d0] sm:$0xff]
        %v3139 = vld [vmem:[#allocation2 + $0x1e8] sm:$0xff]
        %v3140 = vld [vmem:[#allocation2 + $0x1f0] sm:$0xff]
        %v3141 = vld [vmem:[#allocation2 + $0x208] sm:$0xff]
        %v3142 = vld [vmem:[#allocation2 + $0x210] sm:$0xff]
        %v3143 = vld [vmem:[#allocation2 + $0x228] sm:$0xff]
        %v3144 = vld [vmem:[#allocation2 + $0x230] sm:$0xff]
        %v3145 = vld [vmem:[#allocation2 + $0x248] sm:$0xff]
        %v3146 = vld [vmem:[#allocation2 + $0x250] sm:$0xff]
        %v3147 = vld [vmem:[#allocation2 + $0x268] sm:$0xff]
        %v3148 = vld [vmem:[#allocation2 + $0x270] sm:$0xff]
        %v3149 = vld [vmem:[#allocation2 + $0x288] sm:$0xff]
        %v3150 = vld [vmem:[#allocation2 + $0x290] sm:$0xff]
        %v3151 = vperm.slane %v2906, 1
        %v3152 = vmul.f32 %v3111, %v3151
        %v3153 = vmul.f32 %v3112, %v3151
        %v3154 = vmul.f32 %v3113, %v3151
        %v3155 = vmul.f32 %v3114, %v3151
        %v3156 = vmul.f32 %v3115, %v3151
        %v3157 = vmul.f32 %v3116, %v3151
        %v3158 = vmul.f32 %v3117, %v3151
        %v3159 = vmul.f32 %v3118, %v3151
        %v3160 = vmul.f32 %v3119, %v3151
        %v3161 = vmul.f32 %v3120, %v3151
        %v3162 = vmul.f32 %v3121, %v3151
        %v3163 = vmul.f32 %v3122, %v3151
        %v3164 = vmul.f32 %v3123, %v3151
        %v3165 = vmul.f32 %v3124, %v3151
        %v3166 = vmul.f32 %v3125, %v3151
        %v3167 = vmul.f32 %v3126, %v3151
        %v3168 = vmul.f32 %v3127, %v3151
        %v3169 = vmul.f32 %v3128, %v3151
        %v3170 = vmul.f32 %v3129, %v3151
        %v3171 = vmul.f32 %v3130, %v3151
        %v3172 = vmul.f32 %v3131, %v3151
        %v3173 = vmul.f32 %v3132, %v3151
        %v3174 = vmul.f32 %v3133, %v3151
        %v3175 = vmul.f32 %v3134, %v3151
        %v3176 = vmul.f32 %v3135, %v3151
        %v3177 = vmul.f32 %v3136, %v3151
        %v3178 = vmul.f32 %v3137, %v3151
        %v3179 = vmul.f32 %v3138, %v3151
        %v3180 = vmul.f32 %v3139, %v3151
        %v3181 = vmul.f32 %v3140, %v3151
        %v3182 = vmul.f32 %v3141, %v3151
        %v3183 = vmul.f32 %v3142, %v3151
        %v3184 = vadd.f32 %v3079, %v3152
        %v3185 = vadd.f32 %v3080, %v3153
        %v3186 = vadd.f32 %v3081, %v3154
        %v3187 = vadd.f32 %v3082, %v3155
        %v3188 = vadd.f32 %v3083, %v3156
        %v3189 = vadd.f32 %v3084, %v3157
        %v3190 = vadd.f32 %v3085, %v3158
        %v3191 = vadd.f32 %v3086, %v3159
        %v3192 = vadd.f32 %v3087, %v3160
        %v3193 = vadd.f32 %v3088, %v3161
        %v3194 = vadd.f32 %v3089, %v3162
        %v3195 = vadd.f32 %v3090, %v3163
        %v3196 = vadd.f32 %v3091, %v3164
        %v3197 = vadd.f32 %v3092, %v3165
        %v3198 = vadd.f32 %v3093, %v3166
        %v3199 = vadd.f32 %v3094, %v3167
        %v3200 = vadd.f32 %v3095, %v3168
        %v3201 = vadd.f32 %v3096, %v3169
        %v3202 = vadd.f32 %v3097, %v3170
        %v3203 = vadd.f32 %v3098, %v3171
        %v3204 = vadd.f32 %v3099, %v3172
        %v3205 = vadd.f32 %v3100, %v3173
        %v3206 = vadd.f32 %v3101, %v3174
        %v3207 = vadd.f32 %v3102, %v3175
        %v3208 = vadd.f32 %v3103, %v3176
        %v3209 = vadd.f32 %v3104, %v3177
        %v3210 = vadd.f32 %v3105, %v3178
        %v3211 = vadd.f32 %v3106, %v3179
        %v3212 = vadd.f32 %v3107, %v3180
        %v3213 = vadd.f32 %v3108, %v3181
        %v3214 = vadd.f32 %v3109, %v3182
        %v3215 = vadd.f32 %v3110, %v3183
        %v3216 = vperm.slane %v2906, 4
        %v3217 = vmul.f32 %v3115, %v3216
        %v3218 = vmul.f32 %v3116, %v3216
        %v3219 = vmul.f32 %v3117, %v3216
        %v3220 = vmul.f32 %v3118, %v3216
        %v3221 = vmul.f32 %v3119, %v3216
        %v3222 = vmul.f32 %v3120, %v3216
        %v3223 = vmul.f32 %v3121, %v3216
        %v3224 = vmul.f32 %v3122, %v3216
        %v3225 = vmul.f32 %v3123, %v3216
        %v3226 = vmul.f32 %v3124, %v3216
        %v3227 = vmul.f32 %v3125, %v3216
        %v3228 = vmul.f32 %v3126, %v3216
        %v3229 = vmul.f32 %v3127, %v3216
        %v3230 = vmul.f32 %v3128, %v3216
        %v3231 = vmul.f32 %v3129, %v3216
        %v3232 = vmul.f32 %v3130, %v3216
        %v3233 = vmul.f32 %v3131, %v3216
        %v3234 = vmul.f32 %v3132, %v3216
        %v3235 = vmul.f32 %v3133, %v3216
        %v3236 = vmul.f32 %v3134, %v3216
        %v3237 = vmul.f32 %v3135, %v3216
        %v3238 = vmul.f32 %v3136, %v3216
        %v3239 = vmul.f32 %v3137, %v3216
        %v3240 = vmul.f32 %v3138, %v3216
        %v3241 = vmul.f32 %v3139, %v3216
        %v3242 = vmul.f32 %v3140, %v3216
        %v3243 = vmul.f32 %v3141, %v3216
        %v3244 = vmul.f32 %v3142, %v3216
        %v3245 = vmul.f32 %v3143, %v3216
        %v3246 = vmul.f32 %v3144, %v3216
        %v3247 = vmul.f32 %v3145, %v3216
        %v3248 = vmul.f32 %v3146, %v3216
        %v3249 = vadd.f32 %v3184, %v3217
        %v3250 = vadd.f32 %v3185, %v3218
        %v3251 = vadd.f32 %v3186, %v3219
        %v3252 = vadd.f32 %v3187, %v3220
        %v3253 = vadd.f32 %v3188, %v3221
        %v3254 = vadd.f32 %v3189, %v3222
        %v3255 = vadd.f32 %v3190, %v3223
        %v3256 = vadd.f32 %v3191, %v3224
        %v3257 = vadd.f32 %v3192, %v3225
        %v3258 = vadd.f32 %v3193, %v3226
        %v3259 = vadd.f32 %v3194, %v3227
        %v3260 = vadd.f32 %v3195, %v3228
        %v3261 = vadd.f32 %v3196, %v3229
        %v3262 = vadd.f32 %v3197, %v3230
        %v3263 = vadd.f32 %v3198, %v3231
        %v3264 = vadd.f32 %v3199, %v3232
        %v3265 = vadd.f32 %v3200, %v3233
        %v3266 = vadd.f32 %v3201, %v3234
        %v3267 = vadd.f32 %v3202, %v3235
        %v3268 = vadd.f32 %v3203, %v3236
        %v3269 = vadd.f32 %v3204, %v3237
        %v3270 = vadd.f32 %v3205, %v3238
        %v3271 = vadd.f32 %v3206, %v3239
        %v3272 = vadd.f32 %v3207, %v3240
        %v3273 = vadd.f32 %v3208, %v3241
        %v3274 = vadd.f32 %v3209, %v3242
        %v3275 = vadd.f32 %v3210, %v3243
        %v3276 = vadd.f32 %v3211, %v3244
        %v3277 = vadd.f32 %v3212, %v3245
        %v3278 = vadd.f32 %v3213, %v3246
        %v3279 = vadd.f32 %v3214, %v3247
        %v3280 = vadd.f32 %v3215, %v3248
        %v3281 = vperm.slane %v2906, 7
        %v3282 = vmul.f32 %v3119, %v3281
        %v3283 = vmul.f32 %v3120, %v3281
        %v3284 = vmul.f32 %v3121, %v3281
        %v3285 = vmul.f32 %v3122, %v3281
        %v3286 = vmul.f32 %v3123, %v3281
        %v3287 = vmul.f32 %v3124, %v3281
        %v3288 = vmul.f32 %v3125, %v3281
        %v3289 = vmul.f32 %v3126, %v3281
        %v3290 = vmul.f32 %v3127, %v3281
        %v3291 = vmul.f32 %v3128, %v3281
        %v3292 = vmul.f32 %v3129, %v3281
        %v3293 = vmul.f32 %v3130, %v3281
        %v3294 = vmul.f32 %v3131, %v3281
        %v3295 = vmul.f32 %v3132, %v3281
        %v3296 = vmul.f32 %v3133, %v3281
        %v3297 = vmul.f32 %v3134, %v3281
        %v3298 = vmul.f32 %v3135, %v3281
        %v3299 = vmul.f32 %v3136, %v3281
        %v3300 = vmul.f32 %v3137, %v3281
        %v3301 = vmul.f32 %v3138, %v3281
        %v3302 = vmul.f32 %v3139, %v3281
        %v3303 = vmul.f32 %v3140, %v3281
        %v3304 = vmul.f32 %v3141, %v3281
        %v3305 = vmul.f32 %v3142, %v3281
        %v3306 = vmul.f32 %v3143, %v3281
        %v3307 = vmul.f32 %v3144, %v3281
        %v3308 = vmul.f32 %v3145, %v3281
        %v3309 = vmul.f32 %v3146, %v3281
        %v3310 = vmul.f32 %v3147, %v3281
        %v3311 = vmul.f32 %v3148, %v3281
        %v3312 = vmul.f32 %v3149, %v3281
        %v3313 = vmul.f32 %v3150, %v3281
        %v3314 = vadd.f32 %v3249, %v3282
        %v3315 = vadd.f32 %v3250, %v3283
        %v3316 = vadd.f32 %v3251, %v3284
        %v3317 = vadd.f32 %v3252, %v3285
        %v3318 = vadd.f32 %v3253, %v3286
        %v3319 = vadd.f32 %v3254, %v3287
        %v3320 = vadd.f32 %v3255, %v3288
        %v3321 = vadd.f32 %v3256, %v3289
        %v3322 = vadd.f32 %v3257, %v3290
        %v3323 = vadd.f32 %v3258, %v3291
        %v3324 = vadd.f32 %v3259, %v3292
        %v3325 = vadd.f32 %v3260, %v3293
        %v3326 = vadd.f32 %v3261, %v3294
        %v3327 = vadd.f32 %v3262, %v3295
        %v3328 = vadd.f32 %v3263, %v3296
        %v3329 = vadd.f32 %v3264, %v3297
        %v3330 = vadd.f32 %v3265, %v3298
        %v3331 = vadd.f32 %v3266, %v3299
        %v3332 = vadd.f32 %v3267, %v3300
        %v3333 = vadd.f32 %v3268, %v3301
        %v3334 = vadd.f32 %v3269, %v3302
        %v3335 = vadd.f32 %v3270, %v3303
        %v3336 = vadd.f32 %v3271, %v3304
        %v3337 = vadd.f32 %v3272, %v3305
        %v3338 = vadd.f32 %v3273, %v3306
        %v3339 = vadd.f32 %v3274, %v3307
        %v3340 = vadd.f32 %v3275, %v3308
        %v3341 = vadd.f32 %v3276, %v3309
        %v3342 = vadd.f32 %v3277, %v3310
        %v3343 = vadd.f32 %v3278, %v3311
        %v3344 = vadd.f32 %v3279, %v3312
        %v3345 = vadd.f32 %v3280, %v3313
        %v3346 = vld [vmem:[#allocation2 + $0x2a] sm:$0xff]
        %v3347 = vld [vmem:[#allocation2 + $0x32] sm:$0xff]
        %v3348 = vld [vmem:[#allocation2 + $0x4a] sm:$0xff]
        %v3349 = vld [vmem:[#allocation2 + $0x52] sm:$0xff]
        %v3350 = vld [vmem:[#allocation2 + $0x6a] sm:$0xff]
        %v3351 = vld [vmem:[#allocation2 + $0x72] sm:$0xff]
        %v3352 = vld [vmem:[#allocation2 + $0x8a] sm:$0xff]
        %v3353 = vld [vmem:[#allocation2 + $0x92] sm:$0xff]
        %v3354 = vld [vmem:[#allocation2 + $0xaa] sm:$0xff]
        %v3355 = vld [vmem:[#allocation2 + $0xb2] sm:$0xff]
        %v3356 = vld [vmem:[#allocation2 + $0xca] sm:$0xff]
        %v3357 = vld [vmem:[#allocation2 + $0xd2] sm:$0xff]
        %v3358 = vld [vmem:[#allocation2 + $0xea] sm:$0xff]
        %v3359 = vld [vmem:[#allocation2 + $0xf2] sm:$0xff]
        %v3360 = vld [vmem:[#allocation2 + $0x10a] sm:$0xff]
        %v3361 = vld [vmem:[#allocation2 + $0x112] sm:$0xff]
        %v3362 = vld [vmem:[#allocation2 + $0x12a] sm:$0xff]
        %v3363 = vld [vmem:[#allocation2 + $0x132] sm:$0xff]
        %v3364 = vld [vmem:[#allocation2 + $0x14a] sm:$0xff]
        %v3365 = vld [vmem:[#allocation2 + $0x152] sm:$0xff]
        %v3366 = vld [vmem:[#allocation2 + $0x16a] sm:$0xff]
        %v3367 = vld [vmem:[#allocation2 + $0x172] sm:$0xff]
        %v3368 = vld [vmem:[#allocation2 + $0x18a] sm:$0xff]
        %v3369 = vld [vmem:[#allocation2 + $0x192] sm:$0xff]
        %v3370 = vld [vmem:[#allocation2 + $0x1aa] sm:$0xff]
        %v3371 = vld [vmem:[#allocation2 + $0x1b2] sm:$0xff]
        %v3372 = vld [vmem:[#allocation2 + $0x1ca] sm:$0xff]
        %v3373 = vld [vmem:[#allocation2 + $0x1d2] sm:$0xff]
        %v3374 = vld [vmem:[#allocation2 + $0x1ea] sm:$0xff]
        %v3375 = vld [vmem:[#allocation2 + $0x1f2] sm:$0xff]
        %v3376 = vld [vmem:[#allocation2 + $0x20a] sm:$0xff]
        %v3377 = vld [vmem:[#allocation2 + $0x212] sm:$0xff]
        %v3378 = vld [vmem:[#allocation2 + $0x22a] sm:$0xff]
        %v3379 = vld [vmem:[#allocation2 + $0x232] sm:$0xff]
        %v3380 = vld [vmem:[#allocation2 + $0x24a] sm:$0xff]
        %v3381 = vld [vmem:[#allocation2 + $0x252] sm:$0xff]
        %v3382 = vld [vmem:[#allocation2 + $0x26a] sm:$0xff]
        %v3383 = vld [vmem:[#allocation2 + $0x272] sm:$0xff]
        %v3384 = vld [vmem:[#allocation2 + $0x28a] sm:$0xff]
        %v3385 = vld [vmem:[#allocation2 + $0x292] sm:$0xff]
        %v3386 = vperm.slane %v2906, 2
        %v3387 = vmul.f32 %v3346, %v3386
        %v3388 = vmul.f32 %v3347, %v3386
        %v3389 = vmul.f32 %v3348, %v3386
        %v3390 = vmul.f32 %v3349, %v3386
        %v3391 = vmul.f32 %v3350, %v3386
        %v3392 = vmul.f32 %v3351, %v3386
        %v3393 = vmul.f32 %v3352, %v3386
        %v3394 = vmul.f32 %v3353, %v3386
        %v3395 = vmul.f32 %v3354, %v3386
        %v3396 = vmul.f32 %v3355, %v3386
        %v3397 = vmul.f32 %v3356, %v3386
        %v3398 = vmul.f32 %v3357, %v3386
        %v3399 = vmul.f32 %v3358, %v3386
        %v3400 = vmul.f32 %v3359, %v3386
        %v3401 = vmul.f32 %v3360, %v3386
        %v3402 = vmul.f32 %v3361, %v3386
        %v3403 = vmul.f32 %v3362, %v3386
        %v3404 = vmul.f32 %v3363, %v3386
        %v3405 = vmul.f32 %v3364, %v3386
        %v3406 = vmul.f32 %v3365, %v3386
        %v3407 = vmul.f32 %v3366, %v3386
        %v3408 = vmul.f32 %v3367, %v3386
        %v3409 = vmul.f32 %v3368, %v3386
        %v3410 = vmul.f32 %v3369, %v3386
        %v3411 = vmul.f32 %v3370, %v3386
        %v3412 = vmul.f32 %v3371, %v3386
        %v3413 = vmul.f32 %v3372, %v3386
        %v3414 = vmul.f32 %v3373, %v3386
        %v3415 = vmul.f32 %v3374, %v3386
        %v3416 = vmul.f32 %v3375, %v3386
        %v3417 = vmul.f32 %v3376, %v3386
        %v3418 = vmul.f32 %v3377, %v3386
        %v3419 = vadd.f32 %v3314, %v3387
        %v3420 = vadd.f32 %v3315, %v3388
        %v3421 = vadd.f32 %v3316, %v3389
        %v3422 = vadd.f32 %v3317, %v3390
        %v3423 = vadd.f32 %v3318, %v3391
        %v3424 = vadd.f32 %v3319, %v3392
        %v3425 = vadd.f32 %v3320, %v3393
        %v3426 = vadd.f32 %v3321, %v3394
        %v3427 = vadd.f32 %v3322, %v3395
        %v3428 = vadd.f32 %v3323, %v3396
        %v3429 = vadd.f32 %v3324, %v3397
        %v3430 = vadd.f32 %v3325, %v3398
        %v3431 = vadd.f32 %v3326, %v3399
        %v3432 = vadd.f32 %v3327, %v3400
        %v3433 = vadd.f32 %v3328, %v3401
        %v3434 = vadd.f32 %v3329, %v3402
        %v3435 = vadd.f32 %v3330, %v3403
        %v3436 = vadd.f32 %v3331, %v3404
        %v3437 = vadd.f32 %v3332, %v3405
        %v3438 = vadd.f32 %v3333, %v3406
        %v3439 = vadd.f32 %v3334, %v3407
        %v3440 = vadd.f32 %v3335, %v3408
        %v3441 = vadd.f32 %v3336, %v3409
        %v3442 = vadd.f32 %v3337, %v3410
        %v3443 = vadd.f32 %v3338, %v3411
        %v3444 = vadd.f32 %v3339, %v3412
        %v3445 = vadd.f32 %v3340, %v3413
        %v3446 = vadd.f32 %v3341, %v3414
        %v3447 = vadd.f32 %v3342, %v3415
        %v3448 = vadd.f32 %v3343, %v3416
        %v3449 = vadd.f32 %v3344, %v3417
        %v3450 = vadd.f32 %v3345, %v3418
        %v3451 = vperm.slane %v2906, 5
        %v3452 = vmul.f32 %v3350, %v3451
        %v3453 = vmul.f32 %v3351, %v3451
        %v3454 = vmul.f32 %v3352, %v3451
        %v3455 = vmul.f32 %v3353, %v3451
        %v3456 = vmul.f32 %v3354, %v3451
        %v3457 = vmul.f32 %v3355, %v3451
        %v3458 = vmul.f32 %v3356, %v3451
        %v3459 = vmul.f32 %v3357, %v3451
        %v3460 = vmul.f32 %v3358, %v3451
        %v3461 = vmul.f32 %v3359, %v3451
        %v3462 = vmul.f32 %v3360, %v3451
        %v3463 = vmul.f32 %v3361, %v3451
        %v3464 = vmul.f32 %v3362, %v3451
        %v3465 = vmul.f32 %v3363, %v3451
        %v3466 = vmul.f32 %v3364, %v3451
        %v3467 = vmul.f32 %v3365, %v3451
        %v3468 = vmul.f32 %v3366, %v3451
        %v3469 = vmul.f32 %v3367, %v3451
        %v3470 = vmul.f32 %v3368, %v3451
        %v3471 = vmul.f32 %v3369, %v3451
        %v3472 = vmul.f32 %v3370, %v3451
        %v3473 = vmul.f32 %v3371, %v3451
        %v3474 = vmul.f32 %v3372, %v3451
        %v3475 = vmul.f32 %v3373, %v3451
        %v3476 = vmul.f32 %v3374, %v3451
        %v3477 = vmul.f32 %v3375, %v3451
        %v3478 = vmul.f32 %v3376, %v3451
        %v3479 = vmul.f32 %v3377, %v3451
        %v3480 = vmul.f32 %v3378, %v3451
        %v3481 = vmul.f32 %v3379, %v3451
        %v3482 = vmul.f32 %v3380, %v3451
        %v3483 = vmul.f32 %v3381, %v3451
        %v3484 = vadd.f32 %v3419, %v3452
        %v3485 = vadd.f32 %v3420, %v3453
        %v3486 = vadd.f32 %v3421, %v3454
        %v3487 = vadd.f32 %v3422, %v3455
        %v3488 = vadd.f32 %v3423, %v3456
        %v3489 = vadd.f32 %v3424, %v3457
        %v3490 = vadd.f32 %v3425, %v3458
        %v3491 = vadd.f32 %v3426, %v3459
        %v3492 = vadd.f32 %v3427, %v3460
        %v3493 = vadd.f32 %v3428, %v3461
        %v3494 = vadd.f32 %v3429, %v3462
        %v3495 = vadd.f32 %v3430, %v3463
        %v3496 = vadd.f32 %v3431, %v3464
        %v3497 = vadd.f32 %v3432, %v3465
        %v3498 = vadd.f32 %v3433, %v3466
        %v3499 = vadd.f32 %v3434, %v3467
        %v3500 = vadd.f32 %v3435, %v3468
        %v3501 = vadd.f32 %v3436, %v3469
        %v3502 = vadd.f32 %v3437, %v3470
        %v3503 = vadd.f32 %v3438, %v3471
        %v3504 = vadd.f32 %v3439, %v3472
        %v3505 = vadd.f32 %v3440, %v3473
        %v3506 = vadd.f32 %v3441, %v3474
        %v3507 = vadd.f32 %v3442, %v3475
        %v3508 = vadd.f32 %v3443, %v3476
        %v3509 = vadd.f32 %v3444, %v3477
        %v3510 = vadd.f32 %v3445, %v3478
        %v3511 = vadd.f32 %v3446, %v3479
        %v3512 = vadd.f32 %v3447, %v3480
        %v3513 = vadd.f32 %v3448, %v3481
        %v3514 = vadd.f32 %v3449, %v3482
        %v3515 = vadd.f32 %v3450, %v3483
        %v3516 = vperm.slane %v2907, 0
        %v3517 = vmul.f32 %v3354, %v3516
        %v3518 = vmul.f32 %v3355, %v3516
        %v3519 = vmul.f32 %v3356, %v3516
        %v3520 = vmul.f32 %v3357, %v3516
        %v3521 = vmul.f32 %v3358, %v3516
        %v3522 = vmul.f32 %v3359, %v3516
        %v3523 = vmul.f32 %v3360, %v3516
        %v3524 = vmul.f32 %v3361, %v3516
        %v3525 = vmul.f32 %v3362, %v3516
        %v3526 = vmul.f32 %v3363, %v3516
        %v3527 = vmul.f32 %v3364, %v3516
        %v3528 = vmul.f32 %v3365, %v3516
        %v3529 = vmul.f32 %v3366, %v3516
        %v3530 = vmul.f32 %v3367, %v3516
        %v3531 = vmul.f32 %v3368, %v3516
        %v3532 = vmul.f32 %v3369, %v3516
        %v3533 = vmul.f32 %v3370, %v3516
        %v3534 = vmul.f32 %v3371, %v3516
        %v3535 = vmul.f32 %v3372, %v3516
        %v3536 = vmul.f32 %v3373, %v3516
        %v3537 = vmul.f32 %v3374, %v3516
        %v3538 = vmul.f32 %v3375, %v3516
        %v3539 = vmul.f32 %v3376, %v3516
        %v3540 = vmul.f32 %v3377, %v3516
        %v3541 = vmul.f32 %v3378, %v3516
        %v3542 = vmul.f32 %v3379, %v3516
        %v3543 = vmul.f32 %v3380, %v3516
        %v3544 = vmul.f32 %v3381, %v3516
        %v3545 = vmul.f32 %v3382, %v3516
        %v3546 = vmul.f32 %v3383, %v3516
        %v3547 = vmul.f32 %v3384, %v3516
        %v3548 = vmul.f32 %v3385, %v3516
        %v3549 = vadd.f32 %v3484, %v3517
        %v3550 = vadd.f32 %v3485, %v3518
        %v3551 = vadd.f32 %v3486, %v3519
        %v3552 = vadd.f32 %v3487, %v3520
        %v3553 = vadd.f32 %v3488, %v3521
        %v3554 = vadd.f32 %v3489, %v3522
        %v3555 = vadd.f32 %v3490, %v3523
        %v3556 = vadd.f32 %v3491, %v3524
        %v3557 = vadd.f32 %v3492, %v3525
        %v3558 = vadd.f32 %v3493, %v3526
        %v3559 = vadd.f32 %v3494, %v3527
        %v3560 = vadd.f32 %v3495, %v3528
        %v3561 = vadd.f32 %v3496, %v3529
        %v3562 = vadd.f32 %v3497, %v3530
        %v3563 = vadd.f32 %v3498, %v3531
        %v3564 = vadd.f32 %v3499, %v3532
        %v3565 = vadd.f32 %v3500, %v3533
        %v3566 = vadd.f32 %v3501, %v3534
        %v3567 = vadd.f32 %v3502, %v3535
        %v3568 = vadd.f32 %v3503, %v3536
        %v3569 = vadd.f32 %v3504, %v3537
        %v3570 = vadd.f32 %v3505, %v3538
        %v3571 = vadd.f32 %v3506, %v3539
        %v3572 = vadd.f32 %v3507, %v3540
        %v3573 = vadd.f32 %v3508, %v3541
        %v3574 = vadd.f32 %v3509, %v3542
        %v3575 = vadd.f32 %v3510, %v3543
        %v3576 = vadd.f32 %v3511, %v3544
        %v3577 = vadd.f32 %v3512, %v3545
        %v3578 = vadd.f32 %v3513, %v3546
        %v3579 = vadd.f32 %v3514, %v3547
        %v3580 = vadd.f32 %v3515, %v3548
        %v3581 = vld [vmem:[%s4 + $0x1] sm:$0x1]
        %v3582 = vperm.slane %v3581, 0
        %v3583 = vadd.f32 %v3549, %v3582
        %v3584 = vadd.f32 %v3550, %v3582
        %v3585 = vadd.f32 %v3551, %v3582
        %v3586 = vadd.f32 %v3552, %v3582
        %v3587 = vadd.f32 %v3553, %v3582
        %v3588 = vadd.f32 %v3554, %v3582
        %v3589 = vadd.f32 %v3555, %v3582
        %v3590 = vadd.f32 %v3556, %v3582
        %v3591 = vadd.f32 %v3557, %v3582
        %v3592 = vadd.f32 %v3558, %v3582
        %v3593 = vadd.f32 %v3559, %v3582
        %v3594 = vadd.f32 %v3560, %v3582
        %v3595 = vadd.f32 %v3561, %v3582
        %v3596 = vadd.f32 %v3562, %v3582
        %v3597 = vadd.f32 %v3563, %v3582
        %v3598 = vadd.f32 %v3564, %v3582
        %v3599 = vadd.f32 %v3565, %v3582
        %v3600 = vadd.f32 %v3566, %v3582
        %v3601 = vadd.f32 %v3567, %v3582
        %v3602 = vadd.f32 %v3568, %v3582
        %v3603 = vadd.f32 %v3569, %v3582
        %v3604 = vadd.f32 %v3570, %v3582
        %v3605 = vadd.f32 %v3571, %v3582
        %v3606 = vadd.f32 %v3572, %v3582
        %v3607 = vadd.f32 %v3573, %v3582
        %v3608 = vadd.f32 %v3574, %v3582
        %v3609 = vadd.f32 %v3575, %v3582
        %v3610 = vadd.f32 %v3576, %v3582
        %v3611 = vadd.f32 %v3577, %v3582
        %v3612 = vadd.f32 %v3578, %v3582
        %v3613 = vadd.f32 %v3579, %v3582
        %v3614 = vadd.f32 %v3580, %v3582
        %v3615 = vmul.f32 %v3583, %v3583
        %v3616 = vmul.f32 %v3584, %v3584
        %v3617 = vmul.f32 %v3585, %v3585
        %v3618 = vmul.f32 %v3586, %v3586
        %v3619 = vmul.f32 %v3587, %v3587
        %v3620 = vmul.f32 %v3588, %v3588
        %v3621 = vmul.f32 %v3589, %v3589
        %v3622 = vmul.f32 %v3590, %v3590
        %v3623 = vmul.f32 %v3591, %v3591
        %v3624 = vmul.f32 %v3592, %v3592
        %v3625 = vmul.f32 %v3593, %v3593
        %v3626 = vmul.f32 %v3594, %v3594
        %v3627 = vmul.f32 %v3595, %v3595
        %v3628 = vmul.f32 %v3596, %v3596
        %v3629 = vmul.f32 %v3597, %v3597
        %v3630 = vmul.f32 %v3598, %v3598
        %v3631 = vmul.f32 %v3599, %v3599
        %v3632 = vmul.f32 %v3600, %v3600
        %v3633 = vmul.f32 %v3601, %v3601
        %v3634 = vmul.f32 %v3602, %v3602
        %v3635 = vmul.f32 %v3603, %v3603
        %v3636 = vmul.f32 %v3604, %v3604
        %v3637 = vmul.f32 %v3605, %v3605
        %v3638 = vmul.f32 %v3606, %v3606
        %v3639 = vmul.f32 %v3607, %v3607
        %v3640 = vmul.f32 %v3608, %v3608
        %v3641 = vmul.f32 %v3609, %v3609
        %v3642 = vmul.f32 %v3610, %v3610
        %v3643 = vmul.f32 %v3611, %v3611
        %v3644 = vmul.f32 %v3612, %v3612
        %v3645 = vmul.f32 %v3613, %v3613
        %v3646 = vmul.f32 %v3614, %v3614
        %v3647 = vmul.f32 %v3583, %v3615
        %v3648 = vmul.f32 %v3584, %v3616
        %v3649 = vmul.f32 %v3585, %v3617
        %v3650 = vmul.f32 %v3586, %v3618
        %v3651 = vmul.f32 %v3587, %v3619
        %v3652 = vmul.f32 %v3588, %v3620
        %v3653 = vmul.f32 %v3589, %v3621
        %v3654 = vmul.f32 %v3590, %v3622
        %v3655 = vmul.f32 %v3591, %v3623
        %v3656 = vmul.f32 %v3592, %v3624
        %v3657 = vmul.f32 %v3593, %v3625
        %v3658 = vmul.f32 %v3594, %v3626
        %v3659 = vmul.f32 %v3595, %v3627
        %v3660 = vmul.f32 %v3596, %v3628
        %v3661 = vmul.f32 %v3597, %v3629
        %v3662 = vmul.f32 %v3598, %v3630
        %v3663 = vmul.f32 %v3599, %v3631
        %v3664 = vmul.f32 %v3600, %v3632
        %v3665 = vmul.f32 %v3601, %v3633
        %v3666 = vmul.f32 %v3602, %v3634
        %v3667 = vmul.f32 %v3603, %v3635
        %v3668 = vmul.f32 %v3604, %v3636
        %v3669 = vmul.f32 %v3605, %v3637
        %v3670 = vmul.f32 %v3606, %v3638
        %v3671 = vmul.f32 %v3607, %v3639
        %v3672 = vmul.f32 %v3608, %v3640
        %v3673 = vmul.f32 %v3609, %v3641
        %v3674 = vmul.f32 %v3610, %v3642
        %v3675 = vmul.f32 %v3611, %v3643
        %v3676 = vmul.f32 %v3612, %v3644
        %v3677 = vmul.f32 %v3613, %v3645
        %v3678 = vmul.f32 %v3614, %v3646
        %v3679 = vmul.f32 %v3647, 0.044715
        %v3680 = vmul.f32 %v3648, 0.044715
        %v3681 = vmul.f32 %v3649, 0.044715
        %v3682 = vmul.f32 %v3650, 0.044715
        %v3683 = vmul.f32 %v3651, 0.044715
        %v3684 = vmul.f32 %v3652, 0.044715
        %v3685 = vmul.f32 %v3653, 0.044715
        %v3686 = vmul.f32 %v3654, 0.044715
        %v3687 = vmul.f32 %v3655, 0.044715
        %v3688 = vmul.f32 %v3656, 0.044715
        %v3689 = vmul.f32 %v3657, 0.044715
        %v3690 = vmul.f32 %v3658, 0.044715
        %v3691 = vmul.f32 %v3659, 0.044715
        %v3692 = vmul.f32 %v3660, 0.044715
        %v3693 = vmul.f32 %v3661, 0.044715
        %v3694 = vmul.f32 %v3662, 0.044715
        %v3695 = vmul.f32 %v3663, 0.044715
        %v3696 = vmul.f32 %v3664, 0.044715
        %v3697 = vmul.f32 %v3665, 0.044715
        %v3698 = vmul.f32 %v3666, 0.044715
        %v3699 = vmul.f32 %v3667, 0.044715
        %v3700 = vmul.f32 %v3668, 0.044715
        %v3701 = vmul.f32 %v3669, 0.044715
        %v3702 = vmul.f32 %v3670, 0.044715
        %v3703 = vmul.f32 %v3671, 0.044715
        %v3704 = vmul.f32 %v3672, 0.044715
        %v3705 = vmul.f32 %v3673, 0.044715
        %v3706 = vmul.f32 %v3674, 0.044715
        %v3707 = vmul.f32 %v3675, 0.044715
        %v3708 = vmul.f32 %v3676, 0.044715
        %v3709 = vmul.f32 %v3677, 0.044715
        %v3710 = vmul.f32 %v3678, 0.044715
        %v3711 = vadd.f32 %v3583, %v3679
        %v3712 = vadd.f32 %v3584, %v3680
        %v3713 = vadd.f32 %v3585, %v3681
        %v3714 = vadd.f32 %v3586, %v3682
        %v3715 = vadd.f32 %v3587, %v3683
        %v3716 = vadd.f32 %v3588, %v3684
        %v3717 = vadd.f32 %v3589, %v3685
        %v3718 = vadd.f32 %v3590, %v3686
        %v3719 = vadd.f32 %v3591, %v3687
        %v3720 = vadd.f32 %v3592, %v3688
        %v3721 = vadd.f32 %v3593, %v3689
        %v3722 = vadd.f32 %v3594, %v3690
        %v3723 = vadd.f32 %v3595, %v3691
        %v3724 = vadd.f32 %v3596, %v3692
        %v3725 = vadd.f32 %v3597, %v3693
        %v3726 = vadd.f32 %v3598, %v3694
        %v3727 = vadd.f32 %v3599, %v3695
        %v3728 = vadd.f32 %v3600, %v3696
        %v3729 = vadd.f32 %v3601, %v3697
        %v3730 = vadd.f32 %v3602, %v3698
        %v3731 = vadd.f32 %v3603, %v3699
        %v3732 = vadd.f32 %v3604, %v3700
        %v3733 = vadd.f32 %v3605, %v3701
        %v3734 = vadd.f32 %v3606, %v3702
        %v3735 = vadd.f32 %v3607, %v3703
        %v3736 = vadd.f32 %v3608, %v3704
        %v3737 = vadd.f32 %v3609, %v3705
        %v3738 = vadd.f32 %v3610, %v3706
        %v3739 = vadd.f32 %v3611, %v3707
        %v3740 = vadd.f32 %v3612, %v3708
        %v3741 = vadd.f32 %v3613, %v3709
        %v3742 = vadd.f32 %v3614, %v3710
        %v3743 = vmul.f32 %v3711, 0.7978846
        %v3744 = vmul.f32 %v3712, 0.7978846
        %v3745 = vmul.f32 %v3713, 0.7978846
        %v3746 = vmul.f32 %v3714, 0.7978846
        %v3747 = vmul.f32 %v3715, 0.7978846
        %v3748 = vmul.f32 %v3716, 0.7978846
        %v3749 = vmul.f32 %v3717, 0.7978846
        %v3750 = vmul.f32 %v3718, 0.7978846
        %v3751 = vmul.f32 %v3719, 0.7978846
        %v3752 = vmul.f32 %v3720, 0.7978846
        %v3753 = vmul.f32 %v3721, 0.7978846
        %v3754 = vmul.f32 %v3722, 0.7978846
        %v3755 = vmul.f32 %v3723, 0.7978846
        %v3756 = vmul.f32 %v3724, 0.7978846
        %v3757 = vmul.f32 %v3725, 0.7978846
        %v3758 = vmul.f32 %v3726, 0.7978846
        %v3759 = vmul.f32 %v3727, 0.7978846
        %v3760 = vmul.f32 %v3728, 0.7978846
        %v3761 = vmul.f32 %v3729, 0.7978846
        %v3762 = vmul.f32 %v3730, 0.7978846
        %v3763 = vmul.f32 %v3731, 0.7978846
        %v3764 = vmul.f32 %v3732, 0.7978846
        %v3765 = vmul.f32 %v3733, 0.7978846
        %v3766 = vmul.f32 %v3734, 0.7978846
        %v3767 = vmul.f32 %v3735, 0.7978846
        %v3768 = vmul.f32 %v3736, 0.7978846
        %v3769 = vmul.f32 %v3737, 0.7978846
        %v3770 = vmul.f32 %v3738, 0.7978846
        %v3771 = vmul.f32 %v3739, 0.7978846
        %v3772 = vmul.f32 %v3740, 0.7978846
        %v3773 = vmul.f32 %v3741, 0.7978846
        %v3774 = vmul.f32 %v3742, 0.7978846
        %v3775 = vtanh.pop %v3743
        %v3776 = vtanh.pop %v3744
        %v3777 = vtanh.pop %v3745
        %v3778 = vtanh.pop %v3746
        %v3779 = vtanh.pop %v3747
        %v3780 = vtanh.pop %v3748
        %v3781 = vtanh.pop %v3749
        %v3782 = vtanh.pop %v3750
        %v3783 = vtanh.pop %v3751
        %v3784 = vtanh.pop %v3752
        %v3785 = vtanh.pop %v3753
        %v3786 = vtanh.pop %v3754
        %v3787 = vtanh.pop %v3755
        %v3788 = vtanh.pop %v3756
        %v3789 = vtanh.pop %v3757
        %v3790 = vtanh.pop %v3758
        %v3791 = vtanh.pop %v3759
        %v3792 = vtanh.pop %v3760
        %v3793 = vtanh.pop %v3761
        %v3794 = vtanh.pop %v3762
        %v3795 = vtanh.pop %v3763
        %v3796 = vtanh.pop %v3764
        %v3797 = vtanh.pop %v3765
        %v3798 = vtanh.pop %v3766
        %v3799 = vtanh.pop %v3767
        %v3800 = vtanh.pop %v3768
        %v3801 = vtanh.pop %v3769
        %v3802 = vtanh.pop %v3770
        %v3803 = vtanh.pop %v3771
        %v3804 = vtanh.pop %v3772
        %v3805 = vtanh.pop %v3773
        %v3806 = vtanh.pop %v3774
        %v3807 = vadd.f32 %v3775, 1.0
        %v3808 = vadd.f32 %v3776, 1.0
        %v3809 = vadd.f32 %v3777, 1.0
        %v3810 = vadd.f32 %v3778, 1.0
        %v3811 = vadd.f32 %v3779, 1.0
        %v3812 = vadd.f32 %v3780, 1.0
        %v3813 = vadd.f32 %v3781, 1.0
        %v3814 = vadd.f32 %v3782, 1.0
        %v3815 = vadd.f32 %v3783, 1.0
        %v3816 = vadd.f32 %v3784, 1.0
        %v3817 = vadd.f32 %v3785, 1.0
        %v3818 = vadd.f32 %v3786, 1.0
        %v3819 = vadd.f32 %v3787, 1.0
        %v3820 = vadd.f32 %v3788, 1.0
        %v3821 = vadd.f32 %v3789, 1.0
        %v3822 = vadd.f32 %v3790, 1.0
        %v3823 = vadd.f32 %v3791, 1.0
        %v3824 = vadd.f32 %v3792, 1.0
        %v3825 = vadd.f32 %v3793, 1.0
        %v3826 = vadd.f32 %v3794, 1.0
        %v3827 = vadd.f32 %v3795, 1.0
        %v3828 = vadd.f32 %v3796, 1.0
        %v3829 = vadd.f32 %v3797, 1.0
        %v3830 = vadd.f32 %v3798, 1.0
        %v3831 = vadd.f32 %v3799, 1.0
        %v3832 = vadd.f32 %v3800, 1.0
        %v3833 = vadd.f32 %v3801, 1.0
        %v3834 = vadd.f32 %v3802, 1.0
        %v3835 = vadd.f32 %v3803, 1.0
        %v3836 = vadd.f32 %v3804, 1.0
        %v3837 = vadd.f32 %v3805, 1.0
        %v3838 = vadd.f32 %v3806, 1.0
        %v3839 = vmul.f32 %v3807, 0.5
        %v3840 = vmul.f32 %v3808, 0.5
        %v3841 = vmul.f32 %v3809, 0.5
        %v3842 = vmul.f32 %v3810, 0.5
        %v3843 = vmul.f32 %v3811, 0.5
        %v3844 = vmul.f32 %v3812, 0.5
        %v3845 = vmul.f32 %v3813, 0.5
        %v3846 = vmul.f32 %v3814, 0.5
        %v3847 = vmul.f32 %v3815, 0.5
        %v3848 = vmul.f32 %v3816, 0.5
        %v3849 = vmul.f32 %v3817, 0.5
        %v3850 = vmul.f32 %v3818, 0.5
        %v3851 = vmul.f32 %v3819, 0.5
        %v3852 = vmul.f32 %v3820, 0.5
        %v3853 = vmul.f32 %v3821, 0.5
        %v3854 = vmul.f32 %v3822, 0.5
        %v3855 = vmul.f32 %v3823, 0.5
        %v3856 = vmul.f32 %v3824, 0.5
        %v3857 = vmul.f32 %v3825, 0.5
        %v3858 = vmul.f32 %v3826, 0.5
        %v3859 = vmul.f32 %v3827, 0.5
        %v3860 = vmul.f32 %v3828, 0.5
        %v3861 = vmul.f32 %v3829, 0.5
        %v3862 = vmul.f32 %v3830, 0.5
        %v3863 = vmul.f32 %v3831, 0.5
        %v3864 = vmul.f32 %v3832, 0.5
        %v3865 = vmul.f32 %v3833, 0.5
        %v3866 = vmul.f32 %v3834, 0.5
        %v3867 = vmul.f32 %v3835, 0.5
        %v3868 = vmul.f32 %v3836, 0.5
        %v3869 = vmul.f32 %v3837, 0.5
        %v3870 = vmul.f32 %v3838, 0.5
        %v3871 = vmul.f32 %v3583, %v3839
        %v3872 = vmul.f32 %v3584, %v3840
        %v3873 = vmul.f32 %v3585, %v3841
        %v3874 = vmul.f32 %v3586, %v3842
        %v3875 = vmul.f32 %v3587, %v3843
        %v3876 = vmul.f32 %v3588, %v3844
        %v3877 = vmul.f32 %v3589, %v3845
        %v3878 = vmul.f32 %v3590, %v3846
        %v3879 = vmul.f32 %v3591, %v3847
        %v3880 = vmul.f32 %v3592, %v3848
        %v3881 = vmul.f32 %v3593, %v3849
        %v3882 = vmul.f32 %v3594, %v3850
        %v3883 = vmul.f32 %v3595, %v3851
        %v3884 = vmul.f32 %v3596, %v3852
        %v3885 = vmul.f32 %v3597, %v3853
        %v3886 = vmul.f32 %v3598, %v3854
        %v3887 = vmul.f32 %v3599, %v3855
        %v3888 = vmul.f32 %v3600, %v3856
        %v3889 = vmul.f32 %v3601, %v3857
        %v3890 = vmul.f32 %v3602, %v3858
        %v3891 = vmul.f32 %v3603, %v3859
        %v3892 = vmul.f32 %v3604, %v3860
        %v3893 = vmul.f32 %v3605, %v3861
        %v3894 = vmul.f32 %v3606, %v3862
        %v3895 = vmul.f32 %v3607, %v3863
        %v3896 = vmul.f32 %v3608, %v3864
        %v3897 = vmul.f32 %v3609, %v3865
        %v3898 = vmul.f32 %v3610, %v3866
        %v3899 = vmul.f32 %v3611, %v3867
        %v3900 = vmul.f32 %v3612, %v3868
        %v3901 = vmul.f32 %v3613, %v3869
        %v3902 = vmul.f32 %v3614, %v3870
        %3903 = vst.msk [vmem:[%s1855 + $0x8] sm:$0xff] %vm223, %v3871
        %3904 = vst.msk [vmem:[%s1855 + $0x10] sm:$0xff] %vm223, %v3872
        %3905 = vst.msk [vmem:[%s1855 + $0x28] sm:$0xff] %vm223, %v3873
        %3906 = vst.msk [vmem:[%s1855 + $0x30] sm:$0xff] %vm223, %v3874
        %3907 = vst.msk [vmem:[%s1855 + $0x48] sm:$0xff] %vm223, %v3875
        %3908 = vst.msk [vmem:[%s1855 + $0x50] sm:$0xff] %vm223, %v3876
        %3909 = vst.msk [vmem:[%s1855 + $0x68] sm:$0xff] %vm223, %v3877
        %3910 = vst.msk [vmem:[%s1855 + $0x70] sm:$0xff] %vm223, %v3878
        %3911 = vst.msk [vmem:[%s1855 + $0x88] sm:$0xff] %vm223, %v3879
        %3912 = vst.msk [vmem:[%s1855 + $0x90] sm:$0xff] %vm223, %v3880
        %3913 = vst.msk [vmem:[%s1855 + $0xa8] sm:$0xff] %vm223, %v3881
        %3914 = vst.msk [vmem:[%s1855 + $0xb0] sm:$0xff] %vm223, %v3882
        %3915 = vst.msk [vmem:[%s1855 + $0xc8] sm:$0xff] %vm223, %v3883
        %3916 = vst.msk [vmem:[%s1855 + $0xd0] sm:$0xff] %vm223, %v3884
        %3917 = vst.msk [vmem:[%s1855 + $0xe8] sm:$0xff] %vm223, %v3885
        %3918 = vst.msk [vmem:[%s1855 + $0xf0] sm:$0xff] %vm223, %v3886
        %3919 = vst.msk [vmem:[%s1855 + $0x108] sm:$0xff] %vm223, %v3887
        %3920 = vst.msk [vmem:[%s1855 + $0x110] sm:$0xff] %vm223, %v3888
        %3921 = vst.msk [vmem:[%s1855 + $0x128] sm:$0xff] %vm223, %v3889
        %3922 = vst.msk [vmem:[%s1855 + $0x130] sm:$0xff] %vm223, %v3890
        %3923 = vst.msk [vmem:[%s1855 + $0x148] sm:$0xff] %vm223, %v3891
        %3924 = vst.msk [vmem:[%s1855 + $0x150] sm:$0xff] %vm223, %v3892
        %3925 = vst.msk [vmem:[%s1855 + $0x168] sm:$0xff] %vm223, %v3893
        %3926 = vst.msk [vmem:[%s1855 + $0x170] sm:$0xff] %vm223, %v3894
        %3927 = vst.msk [vmem:[%s1855 + $0x188] sm:$0xff] %vm223, %v3895
        %3928 = vst.msk [vmem:[%s1855 + $0x190] sm:$0xff] %vm223, %v3896
        %3929 = vst.msk [vmem:[%s1855 + $0x1a8] sm:$0xff] %vm223, %v3897
        %3930 = vst.msk [vmem:[%s1855 + $0x1b0] sm:$0xff] %vm223, %v3898
        %3931 = vst.msk [vmem:[%s1855 + $0x1c8] sm:$0xff] %vm223, %v3899
        %3932 = vst.msk [vmem:[%s1855 + $0x1d0] sm:$0xff] %vm223, %v3900
        %3933 = vst.msk [vmem:[%s1855 + $0x1e8] sm:$0xff] %vm223, %v3901
        %3934 = vst.msk [vmem:[%s1855 + $0x1f0] sm:$0xff] %vm223, %v3902
        %s3935 = scalar_lea.vmem %s3, 32
        %v3936 = vld [vmem:[%s3935] sm:$0xff]
        %v3937 = vld [vmem:[%s3935 + $0x8] sm:$0x1]
        %v3938 = vld [vmem:[#allocation2 + $0x5] sm:$0xff]
        %v3939 = vld [vmem:[#allocation2 + $0xd] sm:$0xff]
        %v3940 = vld [vmem:[#allocation2 + $0x25] sm:$0xff]
        %v3941 = vld [vmem:[#allocation2 + $0x2d] sm:$0xff]
        %v3942 = vld [vmem:[#allocation2 + $0x45] sm:$0xff]
        %v3943 = vld [vmem:[#allocation2 + $0x4d] sm:$0xff]
        %v3944 = vld [vmem:[#allocation2 + $0x65] sm:$0xff]
        %v3945 = vld [vmem:[#allocation2 + $0x6d] sm:$0xff]
        %v3946 = vld [vmem:[#allocation2 + $0x85] sm:$0xff]
        %v3947 = vld [vmem:[#allocation2 + $0x8d] sm:$0xff]
        %v3948 = vld [vmem:[#allocation2 + $0xa5] sm:$0xff]
        %v3949 = vld [vmem:[#allocation2 + $0xad] sm:$0xff]
        %v3950 = vld [vmem:[#allocation2 + $0xc5] sm:$0xff]
        %v3951 = vld [vmem:[#allocation2 + $0xcd] sm:$0xff]
        %v3952 = vld [vmem:[#allocation2 + $0xe5] sm:$0xff]
        %v3953 = vld [vmem:[#allocation2 + $0xed] sm:$0xff]
        %v3954 = vld [vmem:[#allocation2 + $0x105] sm:$0xff]
        %v3955 = vld [vmem:[#allocation2 + $0x10d] sm:$0xff]
        %v3956 = vld [vmem:[#allocation2 + $0x125] sm:$0xff]
        %v3957 = vld [vmem:[#allocation2 + $0x12d] sm:$0xff]
        %v3958 = vld [vmem:[#allocation2 + $0x145] sm:$0xff]
        %v3959 = vld [vmem:[#allocation2 + $0x14d] sm:$0xff]
        %v3960 = vld [vmem:[#allocation2 + $0x165] sm:$0xff]
        %v3961 = vld [vmem:[#allocation2 + $0x16d] sm:$0xff]
        %v3962 = vld [vmem:[#allocation2 + $0x185] sm:$0xff]
        %v3963 = vld [vmem:[#allocation2 + $0x18d] sm:$0xff]
        %v3964 = vld [vmem:[#allocation2 + $0x1a5] sm:$0xff]
        %v3965 = vld [vmem:[#allocation2 + $0x1ad] sm:$0xff]
        %v3966 = vld [vmem:[#allocation2 + $0x1c5] sm:$0xff]
        %v3967 = vld [vmem:[#allocation2 + $0x1cd] sm:$0xff]
        %v3968 = vld [vmem:[#allocation2 + $0x1e5] sm:$0xff]
        %v3969 = vld [vmem:[#allocation2 + $0x1ed] sm:$0xff]
        %v3970 = vld [vmem:[#allocation2 + $0x205] sm:$0xff]
        %v3971 = vld [vmem:[#allocation2 + $0x20d] sm:$0xff]
        %v3972 = vld [vmem:[#allocation2 + $0x225] sm:$0xff]
        %v3973 = vld [vmem:[#allocation2 + $0x22d] sm:$0xff]
        %v3974 = vld [vmem:[#allocation2 + $0x245] sm:$0xff]
        %v3975 = vld [vmem:[#allocation2 + $0x24d] sm:$0xff]
        %v3976 = vld [vmem:[#allocation2 + $0x265] sm:$0xff]
        %v3977 = vld [vmem:[#allocation2 + $0x26d] sm:$0xff]
        %v3978 = vld [vmem:[#allocation2 + $0x285] sm:$0xff]
        %v3979 = vld [vmem:[#allocation2 + $0x28d] sm:$0xff]
        %v3980 = vld [vmem:[#allocation2 + $0x2a5] sm:$0xff]
        %v3981 = vld [vmem:[#allocation2 + $0x2ad] sm:$0xff]
        %v3982 = vperm.slane %v3936, 0
        %v3983 = vmul.f32 %v3938, %v3982
        %v3984 = vmul.f32 %v3939, %v3982
        %v3985 = vmul.f32 %v3940, %v3982
        %v3986 = vmul.f32 %v3941, %v3982
        %v3987 = vmul.f32 %v3942, %v3982
        %v3988 = vmul.f32 %v3943, %v3982
        %v3989 = vmul.f32 %v3944, %v3982
        %v3990 = vmul.f32 %v3945, %v3982
        %v3991 = vmul.f32 %v3946, %v3982
        %v3992 = vmul.f32 %v3947, %v3982
        %v3993 = vmul.f32 %v3948, %v3982
        %v3994 = vmul.f32 %v3949, %v3982
        %v3995 = vmul.f32 %v3950, %v3982
        %v3996 = vmul.f32 %v3951, %v3982
        %v3997 = vmul.f32 %v3952, %v3982
        %v3998 = vmul.f32 %v3953, %v3982
        %v3999 = vmul.f32 %v3954, %v3982
        %v4000 = vmul.f32 %v3955, %v3982
        %v4001 = vmul.f32 %v3956, %v3982
        %v4002 = vmul.f32 %v3957, %v3982
        %v4003 = vmul.f32 %v3958, %v3982
        %v4004 = vmul.f32 %v3959, %v3982
        %v4005 = vmul.f32 %v3960, %v3982
        %v4006 = vmul.f32 %v3961, %v3982
        %v4007 = vmul.f32 %v3962, %v3982
        %v4008 = vmul.f32 %v3963, %v3982
        %v4009 = vmul.f32 %v3964, %v3982
        %v4010 = vmul.f32 %v3965, %v3982
        %v4011 = vmul.f32 %v3966, %v3982
        %v4012 = vmul.f32 %v3967, %v3982
        %v4013 = vmul.f32 %v3968, %v3982
        %v4014 = vmul.f32 %v3969, %v3982
        %v4015 = vperm.slane %v3936, 3
        %v4016 = vmul.f32 %v3944, %v4015
        %v4017 = vmul.f32 %v3945, %v4015
        %v4018 = vmul.f32 %v3946, %v4015
        %v4019 = vmul.f32 %v3947, %v4015
        %v4020 = vmul.f32 %v3948, %v4015
        %v4021 = vmul.f32 %v3949, %v4015
        %v4022 = vmul.f32 %v3950, %v4015
        %v4023 = vmul.f32 %v3951, %v4015
        %v4024 = vmul.f32 %v3952, %v4015
        %v4025 = vmul.f32 %v3953, %v4015
        %v4026 = vmul.f32 %v3954, %v4015
        %v4027 = vmul.f32 %v3955, %v4015
        %v4028 = vmul.f32 %v3956, %v4015
        %v4029 = vmul.f32 %v3957, %v4015
        %v4030 = vmul.f32 %v3958, %v4015
        %v4031 = vmul.f32 %v3959, %v4015
        %v4032 = vmul.f32 %v3960, %v4015
        %v4033 = vmul.f32 %v3961, %v4015
        %v4034 = vmul.f32 %v3962, %v4015
        %v4035 = vmul.f32 %v3963, %v4015
        %v4036 = vmul.f32 %v3964, %v4015
        %v4037 = vmul.f32 %v3965, %v4015
        %v4038 = vmul.f32 %v3966, %v4015
        %v4039 = vmul.f32 %v3967, %v4015
        %v4040 = vmul.f32 %v3968, %v4015
        %v4041 = vmul.f32 %v3969, %v4015
        %v4042 = vmul.f32 %v3970, %v4015
        %v4043 = vmul.f32 %v3971, %v4015
        %v4044 = vmul.f32 %v3972, %v4015
        %v4045 = vmul.f32 %v3973, %v4015
        %v4046 = vmul.f32 %v3974, %v4015
        %v4047 = vmul.f32 %v3975, %v4015
        %v4048 = vadd.f32 %v3983, %v4016
        %v4049 = vadd.f32 %v3984, %v4017
        %v4050 = vadd.f32 %v3985, %v4018
        %v4051 = vadd.f32 %v3986, %v4019
        %v4052 = vadd.f32 %v3987, %v4020
        %v4053 = vadd.f32 %v3988, %v4021
        %v4054 = vadd.f32 %v3989, %v4022
        %v4055 = vadd.f32 %v3990, %v4023
        %v4056 = vadd.f32 %v3991, %v4024
        %v4057 = vadd.f32 %v3992, %v4025
        %v4058 = vadd.f32 %v3993, %v4026
        %v4059 = vadd.f32 %v3994, %v4027
        %v4060 = vadd.f32 %v3995, %v4028
        %v4061 = vadd.f32 %v3996, %v4029
        %v4062 = vadd.f32 %v3997, %v4030
        %v4063 = vadd.f32 %v3998, %v4031
        %v4064 = vadd.f32 %v3999, %v4032
        %v4065 = vadd.f32 %v4000, %v4033
        %v4066 = vadd.f32 %v4001, %v4034
        %v4067 = vadd.f32 %v4002, %v4035
        %v4068 = vadd.f32 %v4003, %v4036
        %v4069 = vadd.f32 %v4004, %v4037
        %v4070 = vadd.f32 %v4005, %v4038
        %v4071 = vadd.f32 %v4006, %v4039
        %v4072 = vadd.f32 %v4007, %v4040
        %v4073 = vadd.f32 %v4008, %v4041
        %v4074 = vadd.f32 %v4009, %v4042
        %v4075 = vadd.f32 %v4010, %v4043
        %v4076 = vadd.f32 %v4011, %v4044
        %v4077 = vadd.f32 %v4012, %v4045
        %v4078 = vadd.f32 %v4013, %v4046
        %v4079 = vadd.f32 %v4014, %v4047
        %v4080 = vperm.slane %v3936, 6
        %v4081 = vmul.f32 %v3950, %v4080
        %v4082 = vmul.f32 %v3951, %v4080
        %v4083 = vmul.f32 %v3952, %v4080
        %v4084 = vmul.f32 %v3953, %v4080
        %v4085 = vmul.f32 %v3954, %v4080
        %v4086 = vmul.f32 %v3955, %v4080
        %v4087 = vmul.f32 %v3956, %v4080
        %v4088 = vmul.f32 %v3957, %v4080
        %v4089 = vmul.f32 %v3958, %v4080
        %v4090 = vmul.f32 %v3959, %v4080
        %v4091 = vmul.f32 %v3960, %v4080
        %v4092 = vmul.f32 %v3961, %v4080
        %v4093 = vmul.f32 %v3962, %v4080
        %v4094 = vmul.f32 %v3963, %v4080
        %v4095 = vmul.f32 %v3964, %v4080
        %v4096 = vmul.f32 %v3965, %v4080
        %v4097 = vmul.f32 %v3966, %v4080
        %v4098 = vmul.f32 %v3967, %v4080
        %v4099 = vmul.f32 %v3968, %v4080
        %v4100 = vmul.f32 %v3969, %v4080
        %v4101 = vmul.f32 %v3970, %v4080
        %v4102 = vmul.f32 %v3971, %v4080
        %v4103 = vmul.f32 %v3972, %v4080
        %v4104 = vmul.f32 %v3973, %v4080
        %v4105 = vmul.f32 %v3974, %v4080
        %v4106 = vmul.f32 %v3975, %v4080
        %v4107 = vmul.f32 %v3976, %v4080
        %v4108 = vmul.f32 %v3977, %v4080
        %v4109 = vmul.f32 %v3978, %v4080
        %v4110 = vmul.f32 %v3979, %v4080
        %v4111 = vmul.f32 %v3980, %v4080
        %v4112 = vmul.f32 %v3981, %v4080
        %v4113 = vadd.f32 %v4048, %v4081
        %v4114 = vadd.f32 %v4049, %v4082
        %v4115 = vadd.f32 %v4050, %v4083
        %v4116 = vadd.f32 %v4051, %v4084
        %v4117 = vadd.f32 %v4052, %v4085
        %v4118 = vadd.f32 %v4053, %v4086
        %v4119 = vadd.f32 %v4054, %v4087
        %v4120 = vadd.f32 %v4055, %v4088
        %v4121 = vadd.f32 %v4056, %v4089
        %v4122 = vadd.f32 %v4057, %v4090
        %v4123 = vadd.f32 %v4058, %v4091
        %v4124 = vadd.f32 %v4059, %v4092
        %v4125 = vadd.f32 %v4060, %v4093
        %v4126 = vadd.f32 %v4061, %v4094
        %v4127 = vadd.f32 %v4062, %v4095
        %v4128 = vadd.f32 %v4063, %v4096
        %v4129 = vadd.f32 %v4064, %v4097
        %v4130 = vadd.f32 %v4065, %v4098
        %v4131 = vadd.f32 %v4066, %v4099
        %v4132 = vadd.f32 %v4067, %v4100
        %v4133 = vadd.f32 %v4068, %v4101
        %v4134 = vadd.f32 %v4069, %v4102
        %v4135 = vadd.f32 %v4070, %v4103
        %v4136 = vadd.f32 %v4071, %v4104
        %v4137 = vadd.f32 %v4072, %v4105
        %v4138 = vadd.f32 %v4073, %v4106
        %v4139 = vadd.f32 %v4074, %v4107
        %v4140 = vadd.f32 %v4075, %v4108
        %v4141 = vadd.f32 %v4076, %v4109
        %v4142 = vadd.f32 %v4077, %v4110
        %v4143 = vadd.f32 %v4078, %v4111
        %v4144 = vadd.f32 %v4079, %v4112
        %v4145 = vld [vmem:[#allocation2 + $0x8] sm:$0xff]
        %v4146 = vld [vmem:[#allocation2 + $0x10] sm:$0xff]
        %v4147 = vld [vmem:[#allocation2 + $0x28] sm:$0xff]
        %v4148 = vld [vmem:[#allocation2 + $0x30] sm:$0xff]
        %v4149 = vld [vmem:[#allocation2 + $0x48] sm:$0xff]
        %v4150 = vld [vmem:[#allocation2 + $0x50] sm:$0xff]
        %v4151 = vld [vmem:[#allocation2 + $0x68] sm:$0xff]
        %v4152 = vld [vmem:[#allocation2 + $0x70] sm:$0xff]
        %v4153 = vld [vmem:[#allocation2 + $0x88] sm:$0xff]
        %v4154 = vld [vmem:[#allocation2 + $0x90] sm:$0xff]
        %v4155 = vld [vmem:[#allocation2 + $0xa8] sm:$0xff]
        %v4156 = vld [vmem:[#allocation2 + $0xb0] sm:$0xff]
        %v4157 = vld [vmem:[#allocation2 + $0xc8] sm:$0xff]
        %v4158 = vld [vmem:[#allocation2 + $0xd0] sm:$0xff]
        %v4159 = vld [vmem:[#allocation2 + $0xe8] sm:$0xff]
        %v4160 = vld [vmem:[#allocation2 + $0xf0] sm:$0xff]
        %v4161 = vld [vmem:[#allocation2 + $0x108] sm:$0xff]
        %v4162 = vld [vmem:[#allocation2 + $0x110] sm:$0xff]
        %v4163 = vld [vmem:[#allocation2 + $0x128] sm:$0xff]
        %v4164 = vld [vmem:[#allocation2 + $0x130] sm:$0xff]
        %v4165 = vld [vmem:[#allocation2 + $0x148] sm:$0xff]
        %v4166 = vld [vmem:[#allocation2 + $0x150] sm:$0xff]
        %v4167 = vld [vmem:[#allocation2 + $0x168] sm:$0xff]
        %v4168 = vld [vmem:[#allocation2 + $0x170] sm:$0xff]
        %v4169 = vld [vmem:[#allocation2 + $0x188] sm:$0xff]
        %v4170 = vld [vmem:[#allocation2 + $0x190] sm:$0xff]
        %v4171 = vld [vmem:[#allocation2 + $0x1a8] sm:$0xff]
        %v4172 = vld [vmem:[#allocation2 + $0x1b0] sm:$0xff]
        %v4173 = vld [vmem:[#allocation2 + $0x1c8] sm:$0xff]
        %v4174 = vld [vmem:[#allocation2 + $0x1d0] sm:$0xff]
        %v4175 = vld [vmem:[#allocation2 + $0x1e8] sm:$0xff]
        %v4176 = vld [vmem:[#allocation2 + $0x1f0] sm:$0xff]
        %v4177 = vld [vmem:[#allocation2 + $0x208] sm:$0xff]
        %v4178 = vld [vmem:[#allocation2 + $0x210] sm:$0xff]
        %v4179 = vld [vmem:[#allocation2 + $0x228] sm:$0xff]
        %v4180 = vld [vmem:[#allocation2 + $0x230] sm:$0xff]
        %v4181 = vld [vmem:[#allocation2 + $0x248] sm:$0xff]
        %v4182 = vld [vmem:[#allocation2 + $0x250] sm:$0xff]
        %v4183 = vld [vmem:[#allocation2 + $0x268] sm:$0xff]
        %v4184 = vld [vmem:[#allocation2 + $0x270] sm:$0xff]
        %v4185 = vld [vmem:[#allocation2 + $0x288] sm:$0xff]
        %v4186 = vld [vmem:[#allocation2 + $0x290] sm:$0xff]
        %v4187 = vld [vmem:[#allocation2 + $0x2a8] sm:$0xff]
        %v4188 = vld [vmem:[#allocation2 + $0x2b0] sm:$0xff]
        %v4189 = vperm.slane %v3936, 1
        %v4190 = vmul.f32 %v4145, %v4189
        %v4191 = vmul.f32 %v4146, %v4189
        %v4192 = vmul.f32 %v4147, %v4189
        %v4193 = vmul.f32 %v4148, %v4189
        %v4194 = vmul.f32 %v4149, %v4189
        %v4195 = vmul.f32 %v4150, %v4189
        %v4196 = vmul.f32 %v4151, %v4189
        %v4197 = vmul.f32 %v4152, %v4189
        %v4198 = vmul.f32 %v4153, %v4189
        %v4199 = vmul.f32 %v4154, %v4189
        %v4200 = vmul.f32 %v4155, %v4189
        %v4201 = vmul.f32 %v4156, %v4189
        %v4202 = vmul.f32 %v4157, %v4189
        %v4203 = vmul.f32 %v4158, %v4189
        %v4204 = vmul.f32 %v4159, %v4189
        %v4205 = vmul.f32 %v4160, %v4189
        %v4206 = vmul.f32 %v4161, %v4189
        %v4207 = vmul.f32 %v4162, %v4189
        %v4208 = vmul.f32 %v4163, %v4189
        %v4209 = vmul.f32 %v4164, %v4189
        %v4210 = vmul.f32 %v4165, %v4189
        %v4211 = vmul.f32 %v4166, %v4189
        %v4212 = vmul.f32 %v4167, %v4189
        %v4213 = vmul.f32 %v4168, %v4189
        %v4214 = vmul.f32 %v4169, %v4189
        %v4215 = vmul.f32 %v4170, %v4189
        %v4216 = vmul.f32 %v4171, %v4189
        %v4217 = vmul.f32 %v4172, %v4189
        %v4218 = vmul.f32 %v4173, %v4189
        %v4219 = vmul.f32 %v4174, %v4189
        %v4220 = vmul.f32 %v4175, %v4189
        %v4221 = vmul.f32 %v4176, %v4189
        %v4222 = vadd.f32 %v4113, %v4190
        %v4223 = vadd.f32 %v4114, %v4191
        %v4224 = vadd.f32 %v4115, %v4192
        %v4225 = vadd.f32 %v4116, %v4193
        %v4226 = vadd.f32 %v4117, %v4194
        %v4227 = vadd.f32 %v4118, %v4195
        %v4228 = vadd.f32 %v4119, %v4196
        %v4229 = vadd.f32 %v4120, %v4197
        %v4230 = vadd.f32 %v4121, %v4198
        %v4231 = vadd.f32 %v4122, %v4199
        %v4232 = vadd.f32 %v4123, %v4200
        %v4233 = vadd.f32 %v4124, %v4201
        %v4234 = vadd.f32 %v4125, %v4202
        %v4235 = vadd.f32 %v4126, %v4203
        %v4236 = vadd.f32 %v4127, %v4204
        %v4237 = vadd.f32 %v4128, %v4205
        %v4238 = vadd.f32 %v4129, %v4206
        %v4239 = vadd.f32 %v4130, %v4207
        %v4240 = vadd.f32 %v4131, %v4208
        %v4241 = vadd.f32 %v4132, %v4209
        %v4242 = vadd.f32 %v4133, %v4210
        %v4243 = vadd.f32 %v4134, %v4211
        %v4244 = vadd.f32 %v4135, %v4212
        %v4245 = vadd.f32 %v4136, %v4213
        %v4246 = vadd.f32 %v4137, %v4214
        %v4247 = vadd.f32 %v4138, %v4215
        %v4248 = vadd.f32 %v4139, %v4216
        %v4249 = vadd.f32 %v4140, %v4217
        %v4250 = vadd.f32 %v4141, %v4218
        %v4251 = vadd.f32 %v4142, %v4219
        %v4252 = vadd.f32 %v4143, %v4220
        %v4253 = vadd.f32 %v4144, %v4221
        %v4254 = vperm.slane %v3936, 4
        %v4255 = vmul.f32 %v4151, %v4254
        %v4256 = vmul.f32 %v4152, %v4254
        %v4257 = vmul.f32 %v4153, %v4254
        %v4258 = vmul.f32 %v4154, %v4254
        %v4259 = vmul.f32 %v4155, %v4254
        %v4260 = vmul.f32 %v4156, %v4254
        %v4261 = vmul.f32 %v4157, %v4254
        %v4262 = vmul.f32 %v4158, %v4254
        %v4263 = vmul.f32 %v4159, %v4254
        %v4264 = vmul.f32 %v4160, %v4254
        %v4265 = vmul.f32 %v4161, %v4254
        %v4266 = vmul.f32 %v4162, %v4254
        %v4267 = vmul.f32 %v4163, %v4254
        %v4268 = vmul.f32 %v4164, %v4254
        %v4269 = vmul.f32 %v4165, %v4254
        %v4270 = vmul.f32 %v4166, %v4254
        %v4271 = vmul.f32 %v4167, %v4254
        %v4272 = vmul.f32 %v4168, %v4254
        %v4273 = vmul.f32 %v4169, %v4254
        %v4274 = vmul.f32 %v4170, %v4254
        %v4275 = vmul.f32 %v4171, %v4254
        %v4276 = vmul.f32 %v4172, %v4254
        %v4277 = vmul.f32 %v4173, %v4254
        %v4278 = vmul.f32 %v4174, %v4254
        %v4279 = vmul.f32 %v4175, %v4254
        %v4280 = vmul.f32 %v4176, %v4254
        %v4281 = vmul.f32 %v4177, %v4254
        %v4282 = vmul.f32 %v4178, %v4254
        %v4283 = vmul.f32 %v4179, %v4254
        %v4284 = vmul.f32 %v4180, %v4254
        %v4285 = vmul.f32 %v4181, %v4254
        %v4286 = vmul.f32 %v4182, %v4254
        %v4287 = vadd.f32 %v4222, %v4255
        %v4288 = vadd.f32 %v4223, %v4256
        %v4289 = vadd.f32 %v4224, %v4257
        %v4290 = vadd.f32 %v4225, %v4258
        %v4291 = vadd.f32 %v4226, %v4259
        %v4292 = vadd.f32 %v4227, %v4260
        %v4293 = vadd.f32 %v4228, %v4261
        %v4294 = vadd.f32 %v4229, %v4262
        %v4295 = vadd.f32 %v4230, %v4263
        %v4296 = vadd.f32 %v4231, %v4264
        %v4297 = vadd.f32 %v4232, %v4265
        %v4298 = vadd.f32 %v4233, %v4266
        %v4299 = vadd.f32 %v4234, %v4267
        %v4300 = vadd.f32 %v4235, %v4268
        %v4301 = vadd.f32 %v4236, %v4269
        %v4302 = vadd.f32 %v4237, %v4270
        %v4303 = vadd.f32 %v4238, %v4271
        %v4304 = vadd.f32 %v4239, %v4272
        %v4305 = vadd.f32 %v4240, %v4273
        %v4306 = vadd.f32 %v4241, %v4274
        %v4307 = vadd.f32 %v4242, %v4275
        %v4308 = vadd.f32 %v4243, %v4276
        %v4309 = vadd.f32 %v4244, %v4277
        %v4310 = vadd.f32 %v4245, %v4278
        %v4311 = vadd.f32 %v4246, %v4279
        %v4312 = vadd.f32 %v4247, %v4280
        %v4313 = vadd.f32 %v4248, %v4281
        %v4314 = vadd.f32 %v4249, %v4282
        %v4315 = vadd.f32 %v4250, %v4283
        %v4316 = vadd.f32 %v4251, %v4284
        %v4317 = vadd.f32 %v4252, %v4285
        %v4318 = vadd.f32 %v4253, %v4286
        %v4319 = vperm.slane %v3936, 7
        %v4320 = vmul.f32 %v4157, %v4319
        %v4321 = vmul.f32 %v4158, %v4319
        %v4322 = vmul.f32 %v4159, %v4319
        %v4323 = vmul.f32 %v4160, %v4319
        %v4324 = vmul.f32 %v4161, %v4319
        %v4325 = vmul.f32 %v4162, %v4319
        %v4326 = vmul.f32 %v4163, %v4319
        %v4327 = vmul.f32 %v4164, %v4319
        %v4328 = vmul.f32 %v4165, %v4319
        %v4329 = vmul.f32 %v4166, %v4319
        %v4330 = vmul.f32 %v4167, %v4319
        %v4331 = vmul.f32 %v4168, %v4319
        %v4332 = vmul.f32 %v4169, %v4319
        %v4333 = vmul.f32 %v4170, %v4319
        %v4334 = vmul.f32 %v4171, %v4319
        %v4335 = vmul.f32 %v4172, %v4319
        %v4336 = vmul.f32 %v4173, %v4319
        %v4337 = vmul.f32 %v4174, %v4319
        %v4338 = vmul.f32 %v4175, %v4319
        %v4339 = vmul.f32 %v4176, %v4319
        %v4340 = vmul.f32 %v4177, %v4319
        %v4341 = vmul.f32 %v4178, %v4319
        %v4342 = vmul.f32 %v4179, %v4319
        %v4343 = vmul.f32 %v4180, %v4319
        %v4344 = vmul.f32 %v4181, %v4319
        %v4345 = vmul.f32 %v4182, %v4319
        %v4346 = vmul.f32 %v4183, %v4319
        %v4347 = vmul.f32 %v4184, %v4319
        %v4348 = vmul.f32 %v4185, %v4319
        %v4349 = vmul.f32 %v4186, %v4319
        %v4350 = vmul.f32 %v4187, %v4319
        %v4351 = vmul.f32 %v4188, %v4319
        %v4352 = vadd.f32 %v4287, %v4320
        %v4353 = vadd.f32 %v4288, %v4321
        %v4354 = vadd.f32 %v4289, %v4322
        %v4355 = vadd.f32 %v4290, %v4323
        %v4356 = vadd.f32 %v4291, %v4324
        %v4357 = vadd.f32 %v4292, %v4325
        %v4358 = vadd.f32 %v4293, %v4326
        %v4359 = vadd.f32 %v4294, %v4327
        %v4360 = vadd.f32 %v4295, %v4328
        %v4361 = vadd.f32 %v4296, %v4329
        %v4362 = vadd.f32 %v4297, %v4330
        %v4363 = vadd.f32 %v4298, %v4331
        %v4364 = vadd.f32 %v4299, %v4332
        %v4365 = vadd.f32 %v4300, %v4333
        %v4366 = vadd.f32 %v4301, %v4334
        %v4367 = vadd.f32 %v4302, %v4335
        %v4368 = vadd.f32 %v4303, %v4336
        %v4369 = vadd.f32 %v4304, %v4337
        %v4370 = vadd.f32 %v4305, %v4338
        %v4371 = vadd.f32 %v4306, %v4339
        %v4372 = vadd.f32 %v4307, %v4340
        %v4373 = vadd.f32 %v4308, %v4341
        %v4374 = vadd.f32 %v4309, %v4342
        %v4375 = vadd.f32 %v4310, %v4343
        %v4376 = vadd.f32 %v4311, %v4344
        %v4377 = vadd.f32 %v4312, %v4345
        %v4378 = vadd.f32 %v4313, %v4346
        %v4379 = vadd.f32 %v4314, %v4347
        %v4380 = vadd.f32 %v4315, %v4348
        %v4381 = vadd.f32 %v4316, %v4349
        %v4382 = vadd.f32 %v4317, %v4350
        %v4383 = vadd.f32 %v4318, %v4351
        %v4384 = vld [vmem:[#allocation2 + $0xb] sm:$0xff]
        %v4385 = vld [vmem:[#allocation2 + $0x13] sm:$0xff]
        %v4386 = vld [vmem:[#allocation2 + $0x2b] sm:$0xff]
        %v4387 = vld [vmem:[#allocation2 + $0x33] sm:$0xff]
        %v4388 = vld [vmem:[#allocation2 + $0x4b] sm:$0xff]
        %v4389 = vld [vmem:[#allocation2 + $0x53] sm:$0xff]
        %v4390 = vld [vmem:[#allocation2 + $0x6b] sm:$0xff]
        %v4391 = vld [vmem:[#allocation2 + $0x73] sm:$0xff]
        %v4392 = vld [vmem:[#allocation2 + $0x8b] sm:$0xff]
        %v4393 = vld [vmem:[#allocation2 + $0x93] sm:$0xff]
        %v4394 = vld [vmem:[#allocation2 + $0xab] sm:$0xff]
        %v4395 = vld [vmem:[#allocation2 + $0xb3] sm:$0xff]
        %v4396 = vld [vmem:[#allocation2 + $0xcb] sm:$0xff]
        %v4397 = vld [vmem:[#allocation2 + $0xd3] sm:$0xff]
        %v4398 = vld [vmem:[#allocation2 + $0xeb] sm:$0xff]
        %v4399 = vld [vmem:[#allocation2 + $0xf3] sm:$0xff]
        %v4400 = vld [vmem:[#allocation2 + $0x10b] sm:$0xff]
        %v4401 = vld [vmem:[#allocation2 + $0x113] sm:$0xff]
        %v4402 = vld [vmem:[#allocation2 + $0x12b] sm:$0xff]
        %v4403 = vld [vmem:[#allocation2 + $0x133] sm:$0xff]
        %v4404 = vld [vmem:[#allocation2 + $0x14b] sm:$0xff]
        %v4405 = vld [vmem:[#allocation2 + $0x153] sm:$0xff]
        %v4406 = vld [vmem:[#allocation2 + $0x16b] sm:$0xff]
        %v4407 = vld [vmem:[#allocation2 + $0x173] sm:$0xff]
        %v4408 = vld [vmem:[#allocation2 + $0x18b] sm:$0xff]
        %v4409 = vld [vmem:[#allocation2 + $0x193] sm:$0xff]
        %v4410 = vld [vmem:[#allocation2 + $0x1ab] sm:$0xff]
        %v4411 = vld [vmem:[#allocation2 + $0x1b3] sm:$0xff]
        %v4412 = vld [vmem:[#allocation2 + $0x1cb] sm:$0xff]
        %v4413 = vld [vmem:[#allocation2 + $0x1d3] sm:$0xff]
        %v4414 = vld [vmem:[#allocation2 + $0x1eb] sm:$0xff]
        %v4415 = vld [vmem:[#allocation2 + $0x1f3] sm:$0xff]
        %v4416 = vld [vmem:[#allocation2 + $0x20b] sm:$0xff]
        %v4417 = vld [vmem:[#allocation2 + $0x213] sm:$0xff]
        %v4418 = vld [vmem:[#allocation2 + $0x22b] sm:$0xff]
        %v4419 = vld [vmem:[#allocation2 + $0x233] sm:$0xff]
        %v4420 = vld [vmem:[#allocation2 + $0x24b] sm:$0xff]
        %v4421 = vld [vmem:[#allocation2 + $0x253] sm:$0xff]
        %v4422 = vld [vmem:[#allocation2 + $0x26b] sm:$0xff]
        %v4423 = vld [vmem:[#allocation2 + $0x273] sm:$0xff]
        %v4424 = vld [vmem:[#allocation2 + $0x28b] sm:$0xff]
        %v4425 = vld [vmem:[#allocation2 + $0x293] sm:$0xff]
        %v4426 = vld [vmem:[#allocation2 + $0x2ab] sm:$0xff]
        %v4427 = vld [vmem:[#allocation2 + $0x2b3] sm:$0xff]
        %v4428 = vperm.slane %v3936, 2
        %v4429 = vmul.f32 %v4384, %v4428
        %v4430 = vmul.f32 %v4385, %v4428
        %v4431 = vmul.f32 %v4386, %v4428
        %v4432 = vmul.f32 %v4387, %v4428
        %v4433 = vmul.f32 %v4388, %v4428
        %v4434 = vmul.f32 %v4389, %v4428
        %v4435 = vmul.f32 %v4390, %v4428
        %v4436 = vmul.f32 %v4391, %v4428
        %v4437 = vmul.f32 %v4392, %v4428
        %v4438 = vmul.f32 %v4393, %v4428
        %v4439 = vmul.f32 %v4394, %v4428
        %v4440 = vmul.f32 %v4395, %v4428
        %v4441 = vmul.f32 %v4396, %v4428
        %v4442 = vmul.f32 %v4397, %v4428
        %v4443 = vmul.f32 %v4398, %v4428
        %v4444 = vmul.f32 %v4399, %v4428
        %v4445 = vmul.f32 %v4400, %v4428
        %v4446 = vmul.f32 %v4401, %v4428
        %v4447 = vmul.f32 %v4402, %v4428
        %v4448 = vmul.f32 %v4403, %v4428
        %v4449 = vmul.f32 %v4404, %v4428
        %v4450 = vmul.f32 %v4405, %v4428
        %v4451 = vmul.f32 %v4406, %v4428
        %v4452 = vmul.f32 %v4407, %v4428
        %v4453 = vmul.f32 %v4408, %v4428
        %v4454 = vmul.f32 %v4409, %v4428
        %v4455 = vmul.f32 %v4410, %v4428
        %v4456 = vmul.f32 %v4411, %v4428
        %v4457 = vmul.f32 %v4412, %v4428
        %v4458 = vmul.f32 %v4413, %v4428
        %v4459 = vmul.f32 %v4414, %v4428
        %v4460 = vmul.f32 %v4415, %v4428
        %v4461 = vadd.f32 %v4352, %v4429
        %v4462 = vadd.f32 %v4353, %v4430
        %v4463 = vadd.f32 %v4354, %v4431
        %v4464 = vadd.f32 %v4355, %v4432
        %v4465 = vadd.f32 %v4356, %v4433
        %v4466 = vadd.f32 %v4357, %v4434
        %v4467 = vadd.f32 %v4358, %v4435
        %v4468 = vadd.f32 %v4359, %v4436
        %v4469 = vadd.f32 %v4360, %v4437
        %v4470 = vadd.f32 %v4361, %v4438
        %v4471 = vadd.f32 %v4362, %v4439
        %v4472 = vadd.f32 %v4363, %v4440
        %v4473 = vadd.f32 %v4364, %v4441
        %v4474 = vadd.f32 %v4365, %v4442
        %v4475 = vadd.f32 %v4366, %v4443
        %v4476 = vadd.f32 %v4367, %v4444
        %v4477 = vadd.f32 %v4368, %v4445
        %v4478 = vadd.f32 %v4369, %v4446
        %v4479 = vadd.f32 %v4370, %v4447
        %v4480 = vadd.f32 %v4371, %v4448
        %v4481 = vadd.f32 %v4372, %v4449
        %v4482 = vadd.f32 %v4373, %v4450
        %v4483 = vadd.f32 %v4374, %v4451
        %v4484 = vadd.f32 %v4375, %v4452
        %v4485 = vadd.f32 %v4376, %v4453
        %v4486 = vadd.f32 %v4377, %v4454
        %v4487 = vadd.f32 %v4378, %v4455
        %v4488 = vadd.f32 %v4379, %v4456
        %v4489 = vadd.f32 %v4380, %v4457
        %v4490 = vadd.f32 %v4381, %v4458
        %v4491 = vadd.f32 %v4382, %v4459
        %v4492 = vadd.f32 %v4383, %v4460
        %v4493 = vperm.slane %v3936, 5
        %v4494 = vmul.f32 %v4390, %v4493
        %v4495 = vmul.f32 %v4391, %v4493
        %v4496 = vmul.f32 %v4392, %v4493
        %v4497 = vmul.f32 %v4393, %v4493
        %v4498 = vmul.f32 %v4394, %v4493
        %v4499 = vmul.f32 %v4395, %v4493
        %v4500 = vmul.f32 %v4396, %v4493
        %v4501 = vmul.f32 %v4397, %v4493
        %v4502 = vmul.f32 %v4398, %v4493
        %v4503 = vmul.f32 %v4399, %v4493
        %v4504 = vmul.f32 %v4400, %v4493
        %v4505 = vmul.f32 %v4401, %v4493
        %v4506 = vmul.f32 %v4402, %v4493
        %v4507 = vmul.f32 %v4403, %v4493
        %v4508 = vmul.f32 %v4404, %v4493
        %v4509 = vmul.f32 %v4405, %v4493
        %v4510 = vmul.f32 %v4406, %v4493
        %v4511 = vmul.f32 %v4407, %v4493
        %v4512 = vmul.f32 %v4408, %v4493
        %v4513 = vmul.f32 %v4409, %v4493
        %v4514 = vmul.f32 %v4410, %v4493
        %v4515 = vmul.f32 %v4411, %v4493
        %v4516 = vmul.f32 %v4412, %v4493
        %v4517 = vmul.f32 %v4413, %v4493
        %v4518 = vmul.f32 %v4414, %v4493
        %v4519 = vmul.f32 %v4415, %v4493
        %v4520 = vmul.f32 %v4416, %v4493
        %v4521 = vmul.f32 %v4417, %v4493
        %v4522 = vmul.f32 %v4418, %v4493
        %v4523 = vmul.f32 %v4419, %v4493
        %v4524 = vmul.f32 %v4420, %v4493
        %v4525 = vmul.f32 %v4421, %v4493
        %v4526 = vadd.f32 %v4461, %v4494
        %v4527 = vadd.f32 %v4462, %v4495
        %v4528 = vadd.f32 %v4463, %v4496
        %v4529 = vadd.f32 %v4464, %v4497
        %v4530 = vadd.f32 %v4465, %v4498
        %v4531 = vadd.f32 %v4466, %v4499
        %v4532 = vadd.f32 %v4467, %v4500
        %v4533 = vadd.f32 %v4468, %v4501
        %v4534 = vadd.f32 %v4469, %v4502
        %v4535 = vadd.f32 %v4470, %v4503
        %v4536 = vadd.f32 %v4471, %v4504
        %v4537 = vadd.f32 %v4472, %v4505
        %v4538 = vadd.f32 %v4473, %v4506
        %v4539 = vadd.f32 %v4474, %v4507
        %v4540 = vadd.f32 %v4475, %v4508
        %v4541 = vadd.f32 %v4476, %v4509
        %v4542 = vadd.f32 %v4477, %v4510
        %v4543 = vadd.f32 %v4478, %v4511
        %v4544 = vadd.f32 %v4479, %v4512
        %v4545 = vadd.f32 %v4480, %v4513
        %v4546 = vadd.f32 %v4481, %v4514
        %v4547 = vadd.f32 %v4482, %v4515
        %v4548 = vadd.f32 %v4483, %v4516
        %v4549 = vadd.f32 %v4484, %v4517
        %v4550 = vadd.f32 %v4485, %v4518
        %v4551 = vadd.f32 %v4486, %v4519
        %v4552 = vadd.f32 %v4487, %v4520
        %v4553 = vadd.f32 %v4488, %v4521
        %v4554 = vadd.f32 %v4489, %v4522
        %v4555 = vadd.f32 %v4490, %v4523
        %v4556 = vadd.f32 %v4491, %v4524
        %v4557 = vadd.f32 %v4492, %v4525
        %v4558 = vperm.slane %v3937, 0
        %v4559 = vmul.f32 %v4396, %v4558
        %v4560 = vmul.f32 %v4397, %v4558
        %v4561 = vmul.f32 %v4398, %v4558
        %v4562 = vmul.f32 %v4399, %v4558
        %v4563 = vmul.f32 %v4400, %v4558
        %v4564 = vmul.f32 %v4401, %v4558
        %v4565 = vmul.f32 %v4402, %v4558
        %v4566 = vmul.f32 %v4403, %v4558
        %v4567 = vmul.f32 %v4404, %v4558
        %v4568 = vmul.f32 %v4405, %v4558
        %v4569 = vmul.f32 %v4406, %v4558
        %v4570 = vmul.f32 %v4407, %v4558
        %v4571 = vmul.f32 %v4408, %v4558
        %v4572 = vmul.f32 %v4409, %v4558
        %v4573 = vmul.f32 %v4410, %v4558
        %v4574 = vmul.f32 %v4411, %v4558
        %v4575 = vmul.f32 %v4412, %v4558
        %v4576 = vmul.f32 %v4413, %v4558
        %v4577 = vmul.f32 %v4414, %v4558
        %v4578 = vmul.f32 %v4415, %v4558
        %v4579 = vmul.f32 %v4416, %v4558
        %v4580 = vmul.f32 %v4417, %v4558
        %v4581 = vmul.f32 %v4418, %v4558
        %v4582 = vmul.f32 %v4419, %v4558
        %v4583 = vmul.f32 %v4420, %v4558
        %v4584 = vmul.f32 %v4421, %v4558
        %v4585 = vmul.f32 %v4422, %v4558
        %v4586 = vmul.f32 %v4423, %v4558
        %v4587 = vmul.f32 %v4424, %v4558
        %v4588 = vmul.f32 %v4425, %v4558
        %v4589 = vmul.f32 %v4426, %v4558
        %v4590 = vmul.f32 %v4427, %v4558
        %v4591 = vadd.f32 %v4526, %v4559
        %v4592 = vadd.f32 %v4527, %v4560
        %v4593 = vadd.f32 %v4528, %v4561
        %v4594 = vadd.f32 %v4529, %v4562
        %v4595 = vadd.f32 %v4530, %v4563
        %v4596 = vadd.f32 %v4531, %v4564
        %v4597 = vadd.f32 %v4532, %v4565
        %v4598 = vadd.f32 %v4533, %v4566
        %v4599 = vadd.f32 %v4534, %v4567
        %v4600 = vadd.f32 %v4535, %v4568
        %v4601 = vadd.f32 %v4536, %v4569
        %v4602 = vadd.f32 %v4537, %v4570
        %v4603 = vadd.f32 %v4538, %v4571
        %v4604 = vadd.f32 %v4539, %v4572
        %v4605 = vadd.f32 %v4540, %v4573
        %v4606 = vadd.f32 %v4541, %v4574
        %v4607 = vadd.f32 %v4542, %v4575
        %v4608 = vadd.f32 %v4543, %v4576
        %v4609 = vadd.f32 %v4544, %v4577
        %v4610 = vadd.f32 %v4545, %v4578
        %v4611 = vadd.f32 %v4546, %v4579
        %v4612 = vadd.f32 %v4547, %v4580
        %v4613 = vadd.f32 %v4548, %v4581
        %v4614 = vadd.f32 %v4549, %v4582
        %v4615 = vadd.f32 %v4550, %v4583
        %v4616 = vadd.f32 %v4551, %v4584
        %v4617 = vadd.f32 %v4552, %v4585
        %v4618 = vadd.f32 %v4553, %v4586
        %v4619 = vadd.f32 %v4554, %v4587
        %v4620 = vadd.f32 %v4555, %v4588
        %v4621 = vadd.f32 %v4556, %v4589
        %v4622 = vadd.f32 %v4557, %v4590
        %v4623 = vld [vmem:[%s4 + $0x2] sm:$0x1]
        %v4624 = vperm.slane %v4623, 0
        %v4625 = vadd.f32 %v4591, %v4624
        %v4626 = vadd.f32 %v4592, %v4624
        %v4627 = vadd.f32 %v4593, %v4624
        %v4628 = vadd.f32 %v4594, %v4624
        %v4629 = vadd.f32 %v4595, %v4624
        %v4630 = vadd.f32 %v4596, %v4624
        %v4631 = vadd.f32 %v4597, %v4624
        %v4632 = vadd.f32 %v4598, %v4624
        %v4633 = vadd.f32 %v4599, %v4624
        %v4634 = vadd.f32 %v4600, %v4624
        %v4635 = vadd.f32 %v4601, %v4624
        %v4636 = vadd.f32 %v4602, %v4624
        %v4637 = vadd.f32 %v4603, %v4624
        %v4638 = vadd.f32 %v4604, %v4624
        %v4639 = vadd.f32 %v4605, %v4624
        %v4640 = vadd.f32 %v4606, %v4624
        %v4641 = vadd.f32 %v4607, %v4624
        %v4642 = vadd.f32 %v4608, %v4624
        %v4643 = vadd.f32 %v4609, %v4624
        %v4644 = vadd.f32 %v4610, %v4624
        %v4645 = vadd.f32 %v4611, %v4624
        %v4646 = vadd.f32 %v4612, %v4624
        %v4647 = vadd.f32 %v4613, %v4624
        %v4648 = vadd.f32 %v4614, %v4624
        %v4649 = vadd.f32 %v4615, %v4624
        %v4650 = vadd.f32 %v4616, %v4624
        %v4651 = vadd.f32 %v4617, %v4624
        %v4652 = vadd.f32 %v4618, %v4624
        %v4653 = vadd.f32 %v4619, %v4624
        %v4654 = vadd.f32 %v4620, %v4624
        %v4655 = vadd.f32 %v4621, %v4624
        %v4656 = vadd.f32 %v4622, %v4624
        %v4657 = vmul.f32 %v4625, %v4625
        %v4658 = vmul.f32 %v4626, %v4626
        %v4659 = vmul.f32 %v4627, %v4627
        %v4660 = vmul.f32 %v4628, %v4628
        %v4661 = vmul.f32 %v4629, %v4629
        %v4662 = vmul.f32 %v4630, %v4630
        %v4663 = vmul.f32 %v4631, %v4631
        %v4664 = vmul.f32 %v4632, %v4632
        %v4665 = vmul.f32 %v4633, %v4633
        %v4666 = vmul.f32 %v4634, %v4634
        %v4667 = vmul.f32 %v4635, %v4635
        %v4668 = vmul.f32 %v4636, %v4636
        %v4669 = vmul.f32 %v4637, %v4637
        %v4670 = vmul.f32 %v4638, %v4638
        %v4671 = vmul.f32 %v4639, %v4639
        %v4672 = vmul.f32 %v4640, %v4640
        %v4673 = vmul.f32 %v4641, %v4641
        %v4674 = vmul.f32 %v4642, %v4642
        %v4675 = vmul.f32 %v4643, %v4643
        %v4676 = vmul.f32 %v4644, %v4644
        %v4677 = vmul.f32 %v4645, %v4645
        %v4678 = vmul.f32 %v4646, %v4646
        %v4679 = vmul.f32 %v4647, %v4647
        %v4680 = vmul.f32 %v4648, %v4648
        %v4681 = vmul.f32 %v4649, %v4649
        %v4682 = vmul.f32 %v4650, %v4650
        %v4683 = vmul.f32 %v4651, %v4651
        %v4684 = vmul.f32 %v4652, %v4652
        %v4685 = vmul.f32 %v4653, %v4653
        %v4686 = vmul.f32 %v4654, %v4654
        %v4687 = vmul.f32 %v4655, %v4655
        %v4688 = vmul.f32 %v4656, %v4656
        %v4689 = vmul.f32 %v4625, %v4657
        %v4690 = vmul.f32 %v4626, %v4658
        %v4691 = vmul.f32 %v4627, %v4659
        %v4692 = vmul.f32 %v4628, %v4660
        %v4693 = vmul.f32 %v4629, %v4661
        %v4694 = vmul.f32 %v4630, %v4662
        %v4695 = vmul.f32 %v4631, %v4663
        %v4696 = vmul.f32 %v4632, %v4664
        %v4697 = vmul.f32 %v4633, %v4665
        %v4698 = vmul.f32 %v4634, %v4666
        %v4699 = vmul.f32 %v4635, %v4667
        %v4700 = vmul.f32 %v4636, %v4668
        %v4701 = vmul.f32 %v4637, %v4669
        %v4702 = vmul.f32 %v4638, %v4670
        %v4703 = vmul.f32 %v4639, %v4671
        %v4704 = vmul.f32 %v4640, %v4672
        %v4705 = vmul.f32 %v4641, %v4673
        %v4706 = vmul.f32 %v4642, %v4674
        %v4707 = vmul.f32 %v4643, %v4675
        %v4708 = vmul.f32 %v4644, %v4676
        %v4709 = vmul.f32 %v4645, %v4677
        %v4710 = vmul.f32 %v4646, %v4678
        %v4711 = vmul.f32 %v4647, %v4679
        %v4712 = vmul.f32 %v4648, %v4680
        %v4713 = vmul.f32 %v4649, %v4681
        %v4714 = vmul.f32 %v4650, %v4682
        %v4715 = vmul.f32 %v4651, %v4683
        %v4716 = vmul.f32 %v4652, %v4684
        %v4717 = vmul.f32 %v4653, %v4685
        %v4718 = vmul.f32 %v4654, %v4686
        %v4719 = vmul.f32 %v4655, %v4687
        %v4720 = vmul.f32 %v4656, %v4688
        %v4721 = vmul.f32 %v4689, 0.044715
        %v4722 = vmul.f32 %v4690, 0.044715
        %v4723 = vmul.f32 %v4691, 0.044715
        %v4724 = vmul.f32 %v4692, 0.044715
        %v4725 = vmul.f32 %v4693, 0.044715
        %v4726 = vmul.f32 %v4694, 0.044715
        %v4727 = vmul.f32 %v4695, 0.044715
        %v4728 = vmul.f32 %v4696, 0.044715
        %v4729 = vmul.f32 %v4697, 0.044715
        %v4730 = vmul.f32 %v4698, 0.044715
        %v4731 = vmul.f32 %v4699, 0.044715
        %v4732 = vmul.f32 %v4700, 0.044715
        %v4733 = vmul.f32 %v4701, 0.044715
        %v4734 = vmul.f32 %v4702, 0.044715
        %v4735 = vmul.f32 %v4703, 0.044715
        %v4736 = vmul.f32 %v4704, 0.044715
        %v4737 = vmul.f32 %v4705, 0.044715
        %v4738 = vmul.f32 %v4706, 0.044715
        %v4739 = vmul.f32 %v4707, 0.044715
        %v4740 = vmul.f32 %v4708, 0.044715
        %v4741 = vmul.f32 %v4709, 0.044715
        %v4742 = vmul.f32 %v4710, 0.044715
        %v4743 = vmul.f32 %v4711, 0.044715
        %v4744 = vmul.f32 %v4712, 0.044715
        %v4745 = vmul.f32 %v4713, 0.044715
        %v4746 = vmul.f32 %v4714, 0.044715
        %v4747 = vmul.f32 %v4715, 0.044715
        %v4748 = vmul.f32 %v4716, 0.044715
        %v4749 = vmul.f32 %v4717, 0.044715
        %v4750 = vmul.f32 %v4718, 0.044715
        %v4751 = vmul.f32 %v4719, 0.044715
        %v4752 = vmul.f32 %v4720, 0.044715
        %v4753 = vadd.f32 %v4625, %v4721
        %v4754 = vadd.f32 %v4626, %v4722
        %v4755 = vadd.f32 %v4627, %v4723
        %v4756 = vadd.f32 %v4628, %v4724
        %v4757 = vadd.f32 %v4629, %v4725
        %v4758 = vadd.f32 %v4630, %v4726
        %v4759 = vadd.f32 %v4631, %v4727
        %v4760 = vadd.f32 %v4632, %v4728
        %v4761 = vadd.f32 %v4633, %v4729
        %v4762 = vadd.f32 %v4634, %v4730
        %v4763 = vadd.f32 %v4635, %v4731
        %v4764 = vadd.f32 %v4636, %v4732
        %v4765 = vadd.f32 %v4637, %v4733
        %v4766 = vadd.f32 %v4638, %v4734
        %v4767 = vadd.f32 %v4639, %v4735
        %v4768 = vadd.f32 %v4640, %v4736
        %v4769 = vadd.f32 %v4641, %v4737
        %v4770 = vadd.f32 %v4642, %v4738
        %v4771 = vadd.f32 %v4643, %v4739
        %v4772 = vadd.f32 %v4644, %v4740
        %v4773 = vadd.f32 %v4645, %v4741
        %v4774 = vadd.f32 %v4646, %v4742
        %v4775 = vadd.f32 %v4647, %v4743
        %v4776 = vadd.f32 %v4648, %v4744
        %v4777 = vadd.f32 %v4649, %v4745
        %v4778 = vadd.f32 %v4650, %v4746
        %v4779 = vadd.f32 %v4651, %v4747
        %v4780 = vadd.f32 %v4652, %v4748
        %v4781 = vadd.f32 %v4653, %v4749
        %v4782 = vadd.f32 %v4654, %v4750
        %v4783 = vadd.f32 %v4655, %v4751
        %v4784 = vadd.f32 %v4656, %v4752
        %v4785 = vmul.f32 %v4753, 0.7978846
        %v4786 = vmul.f32 %v4754, 0.7978846
        %v4787 = vmul.f32 %v4755, 0.7978846
        %v4788 = vmul.f32 %v4756, 0.7978846
        %v4789 = vmul.f32 %v4757, 0.7978846
        %v4790 = vmul.f32 %v4758, 0.7978846
        %v4791 = vmul.f32 %v4759, 0.7978846
        %v4792 = vmul.f32 %v4760, 0.7978846
        %v4793 = vmul.f32 %v4761, 0.7978846
        %v4794 = vmul.f32 %v4762, 0.7978846
        %v4795 = vmul.f32 %v4763, 0.7978846
        %v4796 = vmul.f32 %v4764, 0.7978846
        %v4797 = vmul.f32 %v4765, 0.7978846
        %v4798 = vmul.f32 %v4766, 0.7978846
        %v4799 = vmul.f32 %v4767, 0.7978846
        %v4800 = vmul.f32 %v4768, 0.7978846
        %v4801 = vmul.f32 %v4769, 0.7978846
        %v4802 = vmul.f32 %v4770, 0.7978846
        %v4803 = vmul.f32 %v4771, 0.7978846
        %v4804 = vmul.f32 %v4772, 0.7978846
        %v4805 = vmul.f32 %v4773, 0.7978846
        %v4806 = vmul.f32 %v4774, 0.7978846
        %v4807 = vmul.f32 %v4775, 0.7978846
        %v4808 = vmul.f32 %v4776, 0.7978846
        %v4809 = vmul.f32 %v4777, 0.7978846
        %v4810 = vmul.f32 %v4778, 0.7978846
        %v4811 = vmul.f32 %v4779, 0.7978846
        %v4812 = vmul.f32 %v4780, 0.7978846
        %v4813 = vmul.f32 %v4781, 0.7978846
        %v4814 = vmul.f32 %v4782, 0.7978846
        %v4815 = vmul.f32 %v4783, 0.7978846
        %v4816 = vmul.f32 %v4784, 0.7978846
        %v4817 = vtanh.pop %v4785
        %v4818 = vtanh.pop %v4786
        %v4819 = vtanh.pop %v4787
        %v4820 = vtanh.pop %v4788
        %v4821 = vtanh.pop %v4789
        %v4822 = vtanh.pop %v4790
        %v4823 = vtanh.pop %v4791
        %v4824 = vtanh.pop %v4792
        %v4825 = vtanh.pop %v4793
        %v4826 = vtanh.pop %v4794
        %v4827 = vtanh.pop %v4795
        %v4828 = vtanh.pop %v4796
        %v4829 = vtanh.pop %v4797
        %v4830 = vtanh.pop %v4798
        %v4831 = vtanh.pop %v4799
        %v4832 = vtanh.pop %v4800
        %v4833 = vtanh.pop %v4801
        %v4834 = vtanh.pop %v4802
        %v4835 = vtanh.pop %v4803
        %v4836 = vtanh.pop %v4804
        %v4837 = vtanh.pop %v4805
        %v4838 = vtanh.pop %v4806
        %v4839 = vtanh.pop %v4807
        %v4840 = vtanh.pop %v4808
        %v4841 = vtanh.pop %v4809
        %v4842 = vtanh.pop %v4810
        %v4843 = vtanh.pop %v4811
        %v4844 = vtanh.pop %v4812
        %v4845 = vtanh.pop %v4813
        %v4846 = vtanh.pop %v4814
        %v4847 = vtanh.pop %v4815
        %v4848 = vtanh.pop %v4816
        %v4849 = vadd.f32 %v4817, 1.0
        %v4850 = vadd.f32 %v4818, 1.0
        %v4851 = vadd.f32 %v4819, 1.0
        %v4852 = vadd.f32 %v4820, 1.0
        %v4853 = vadd.f32 %v4821, 1.0
        %v4854 = vadd.f32 %v4822, 1.0
        %v4855 = vadd.f32 %v4823, 1.0
        %v4856 = vadd.f32 %v4824, 1.0
        %v4857 = vadd.f32 %v4825, 1.0
        %v4858 = vadd.f32 %v4826, 1.0
        %v4859 = vadd.f32 %v4827, 1.0
        %v4860 = vadd.f32 %v4828, 1.0
        %v4861 = vadd.f32 %v4829, 1.0
        %v4862 = vadd.f32 %v4830, 1.0
        %v4863 = vadd.f32 %v4831, 1.0
        %v4864 = vadd.f32 %v4832, 1.0
        %v4865 = vadd.f32 %v4833, 1.0
        %v4866 = vadd.f32 %v4834, 1.0
        %v4867 = vadd.f32 %v4835, 1.0
        %v4868 = vadd.f32 %v4836, 1.0
        %v4869 = vadd.f32 %v4837, 1.0
        %v4870 = vadd.f32 %v4838, 1.0
        %v4871 = vadd.f32 %v4839, 1.0
        %v4872 = vadd.f32 %v4840, 1.0
        %v4873 = vadd.f32 %v4841, 1.0
        %v4874 = vadd.f32 %v4842, 1.0
        %v4875 = vadd.f32 %v4843, 1.0
        %v4876 = vadd.f32 %v4844, 1.0
        %v4877 = vadd.f32 %v4845, 1.0
        %v4878 = vadd.f32 %v4846, 1.0
        %v4879 = vadd.f32 %v4847, 1.0
        %v4880 = vadd.f32 %v4848, 1.0
        %v4881 = vmul.f32 %v4849, 0.5
        %v4882 = vmul.f32 %v4850, 0.5
        %v4883 = vmul.f32 %v4851, 0.5
        %v4884 = vmul.f32 %v4852, 0.5
        %v4885 = vmul.f32 %v4853, 0.5
        %v4886 = vmul.f32 %v4854, 0.5
        %v4887 = vmul.f32 %v4855, 0.5
        %v4888 = vmul.f32 %v4856, 0.5
        %v4889 = vmul.f32 %v4857, 0.5
        %v4890 = vmul.f32 %v4858, 0.5
        %v4891 = vmul.f32 %v4859, 0.5
        %v4892 = vmul.f32 %v4860, 0.5
        %v4893 = vmul.f32 %v4861, 0.5
        %v4894 = vmul.f32 %v4862, 0.5
        %v4895 = vmul.f32 %v4863, 0.5
        %v4896 = vmul.f32 %v4864, 0.5
        %v4897 = vmul.f32 %v4865, 0.5
        %v4898 = vmul.f32 %v4866, 0.5
        %v4899 = vmul.f32 %v4867, 0.5
        %v4900 = vmul.f32 %v4868, 0.5
        %v4901 = vmul.f32 %v4869, 0.5
        %v4902 = vmul.f32 %v4870, 0.5
        %v4903 = vmul.f32 %v4871, 0.5
        %v4904 = vmul.f32 %v4872, 0.5
        %v4905 = vmul.f32 %v4873, 0.5
        %v4906 = vmul.f32 %v4874, 0.5
        %v4907 = vmul.f32 %v4875, 0.5
        %v4908 = vmul.f32 %v4876, 0.5
        %v4909 = vmul.f32 %v4877, 0.5
        %v4910 = vmul.f32 %v4878, 0.5
        %v4911 = vmul.f32 %v4879, 0.5
        %v4912 = vmul.f32 %v4880, 0.5
        %v4913 = vmul.f32 %v4625, %v4881
        %v4914 = vmul.f32 %v4626, %v4882
        %v4915 = vmul.f32 %v4627, %v4883
        %v4916 = vmul.f32 %v4628, %v4884
        %v4917 = vmul.f32 %v4629, %v4885
        %v4918 = vmul.f32 %v4630, %v4886
        %v4919 = vmul.f32 %v4631, %v4887
        %v4920 = vmul.f32 %v4632, %v4888
        %v4921 = vmul.f32 %v4633, %v4889
        %v4922 = vmul.f32 %v4634, %v4890
        %v4923 = vmul.f32 %v4635, %v4891
        %v4924 = vmul.f32 %v4636, %v4892
        %v4925 = vmul.f32 %v4637, %v4893
        %v4926 = vmul.f32 %v4638, %v4894
        %v4927 = vmul.f32 %v4639, %v4895
        %v4928 = vmul.f32 %v4640, %v4896
        %v4929 = vmul.f32 %v4641, %v4897
        %v4930 = vmul.f32 %v4642, %v4898
        %v4931 = vmul.f32 %v4643, %v4899
        %v4932 = vmul.f32 %v4644, %v4900
        %v4933 = vmul.f32 %v4645, %v4901
        %v4934 = vmul.f32 %v4646, %v4902
        %v4935 = vmul.f32 %v4647, %v4903
        %v4936 = vmul.f32 %v4648, %v4904
        %v4937 = vmul.f32 %v4649, %v4905
        %v4938 = vmul.f32 %v4650, %v4906
        %v4939 = vmul.f32 %v4651, %v4907
        %v4940 = vmul.f32 %v4652, %v4908
        %v4941 = vmul.f32 %v4653, %v4909
        %v4942 = vmul.f32 %v4654, %v4910
        %v4943 = vmul.f32 %v4655, %v4911
        %v4944 = vmul.f32 %v4656, %v4912
        %4977 = vrot.lane.b32.xlu0 %v3871, 16
        %v4978 = vpop.permute.xlu0 %4977
        %4979 = vrot.lane.b32.xlu0 %v3872, 16
        %v4980 = vpop.permute.xlu0 %4979
        %4981 = vrot.lane.b32.xlu0 %v3873, 16
        %v4982 = vpop.permute.xlu0 %4981
        %4983 = vrot.lane.b32.xlu0 %v3874, 16
        %v4984 = vpop.permute.xlu0 %4983
        %4985 = vrot.lane.b32.xlu0 %v3875, 16
        %v4986 = vpop.permute.xlu0 %4985
        %4987 = vrot.lane.b32.xlu0 %v3876, 16
        %v4988 = vpop.permute.xlu0 %4987
        %4989 = vrot.lane.b32.xlu0 %v3877, 16
        %v4990 = vpop.permute.xlu0 %4989
        %4991 = vrot.lane.b32.xlu0 %v3878, 16
        %v4992 = vpop.permute.xlu0 %4991
        %4993 = vrot.lane.b32.xlu0 %v3879, 16
        %v4994 = vpop.permute.xlu0 %4993
        %4995 = vrot.lane.b32.xlu0 %v3880, 16
        %v4996 = vpop.permute.xlu0 %4995
        %4997 = vrot.lane.b32.xlu0 %v3881, 16
        %v4998 = vpop.permute.xlu0 %4997
        %4999 = vrot.lane.b32.xlu0 %v3882, 16
        %v5000 = vpop.permute.xlu0 %4999
        %5001 = vrot.lane.b32.xlu0 %v3883, 16
        %v5002 = vpop.permute.xlu0 %5001
        %5003 = vrot.lane.b32.xlu0 %v3884, 16
        %v5004 = vpop.permute.xlu0 %5003
        %5005 = vrot.lane.b32.xlu0 %v3885, 16
        %v5006 = vpop.permute.xlu0 %5005
        %5007 = vrot.lane.b32.xlu0 %v3886, 16
        %v5008 = vpop.permute.xlu0 %5007
        %5009 = vrot.lane.b32.xlu0 %v3887, 16
        %v5010 = vpop.permute.xlu0 %5009
        %5011 = vrot.lane.b32.xlu0 %v3888, 16
        %v5012 = vpop.permute.xlu0 %5011
        %5013 = vrot.lane.b32.xlu0 %v3889, 16
        %v5014 = vpop.permute.xlu0 %5013
        %5015 = vrot.lane.b32.xlu0 %v3890, 16
        %v5016 = vpop.permute.xlu0 %5015
        %5017 = vrot.lane.b32.xlu0 %v3891, 16
        %v5018 = vpop.permute.xlu0 %5017
        %5019 = vrot.lane.b32.xlu0 %v3892, 16
        %v5020 = vpop.permute.xlu0 %5019
        %5021 = vrot.lane.b32.xlu0 %v3893, 16
        %v5022 = vpop.permute.xlu0 %5021
        %5023 = vrot.lane.b32.xlu0 %v3894, 16
        %v5024 = vpop.permute.xlu0 %5023
        %5025 = vrot.lane.b32.xlu0 %v3895, 16
        %v5026 = vpop.permute.xlu0 %5025
        %5027 = vrot.lane.b32.xlu0 %v3896, 16
        %v5028 = vpop.permute.xlu0 %5027
        %5029 = vrot.lane.b32.xlu0 %v3897, 16
        %v5030 = vpop.permute.xlu0 %5029
        %5031 = vrot.lane.b32.xlu0 %v3898, 16
        %v5032 = vpop.permute.xlu0 %5031
        %5033 = vrot.lane.b32.xlu0 %v3899, 16
        %v5034 = vpop.permute.xlu0 %5033
        %5035 = vrot.lane.b32.xlu0 %v3900, 16
        %v5036 = vpop.permute.xlu0 %5035
        %5037 = vrot.lane.b32.xlu0 %v3901, 16
        %v5038 = vpop.permute.xlu0 %5037
        %5039 = vrot.lane.b32.xlu0 %v3902, 16
        %v5040 = vpop.permute.xlu0 %5039
        %5105 = vrot.lane.b32.xlu0 %v4913, 32
        %v5106 = vpop.permute.xlu0 %5105
        %5107 = vrot.lane.b32.xlu0 %v4914, 32
        %v5108 = vpop.permute.xlu0 %5107
        %5109 = vrot.lane.b32.xlu0 %v4915, 32
        %v5110 = vpop.permute.xlu0 %5109
        %5111 = vrot.lane.b32.xlu0 %v4916, 32
        %v5112 = vpop.permute.xlu0 %5111
        %5113 = vrot.lane.b32.xlu0 %v4917, 32
        %v5114 = vpop.permute.xlu0 %5113
        %5115 = vrot.lane.b32.xlu0 %v4918, 32
        %v5116 = vpop.permute.xlu0 %5115
        %5117 = vrot.lane.b32.xlu0 %v4919, 32
        %v5118 = vpop.permute.xlu0 %5117
        %5119 = vrot.lane.b32.xlu0 %v4920, 32
        %v5120 = vpop.permute.xlu0 %5119
        %5121 = vrot.lane.b32.xlu0 %v4921, 32
        %v5122 = vpop.permute.xlu0 %5121
        %5123 = vrot.lane.b32.xlu0 %v4922, 32
        %v5124 = vpop.permute.xlu0 %5123
        %5125 = vrot.lane.b32.xlu0 %v4923, 32
        %v5126 = vpop.permute.xlu0 %5125
        %5127 = vrot.lane.b32.xlu0 %v4924, 32
        %v5128 = vpop.permute.xlu0 %5127
        %5129 = vrot.lane.b32.xlu0 %v4925, 32
        %v5130 = vpop.permute.xlu0 %5129
        %5131 = vrot.lane.b32.xlu0 %v4926, 32
        %v5132 = vpop.permute.xlu0 %5131
        %5133 = vrot.lane.b32.xlu0 %v4927, 32
        %v5134 = vpop.permute.xlu0 %5133
        %5135 = vrot.lane.b32.xlu0 %v4928, 32
        %v5136 = vpop.permute.xlu0 %5135
        %5137 = vrot.lane.b32.xlu0 %v4929, 32
        %v5138 = vpop.permute.xlu0 %5137
        %5139 = vrot.lane.b32.xlu0 %v4930, 32
        %v5140 = vpop.permute.xlu0 %5139
        %5141 = vrot.lane.b32.xlu0 %v4931, 32
        %v5142 = vpop.permute.xlu0 %5141
        %5143 = vrot.lane.b32.xlu0 %v4932, 32
        %v5144 = vpop.permute.xlu0 %5143
        %5145 = vrot.lane.b32.xlu0 %v4933, 32
        %v5146 = vpop.permute.xlu0 %5145
        %5147 = vrot.lane.b32.xlu0 %v4934, 32
        %v5148 = vpop.permute.xlu0 %5147
        %5149 = vrot.lane.b32.xlu0 %v4935, 32
        %v5150 = vpop.permute.xlu0 %5149
        %5151 = vrot.lane.b32.xlu0 %v4936, 32
        %v5152 = vpop.permute.xlu0 %5151
        %5153 = vrot.lane.b32.xlu0 %v4937, 32
        %v5154 = vpop.permute.xlu0 %5153
        %5155 = vrot.lane.b32.xlu0 %v4938, 32
        %v5156 = vpop.permute.xlu0 %5155
        %5157 = vrot.lane.b32.xlu0 %v4939, 32
        %v5158 = vpop.permute.xlu0 %5157
        %5159 = vrot.lane.b32.xlu0 %v4940, 32
        %v5160 = vpop.permute.xlu0 %5159
        %5161 = vrot.lane.b32.xlu0 %v4941, 32
        %v5162 = vpop.permute.xlu0 %5161
        %5163 = vrot.lane.b32.xlu0 %v4942, 32
        %v5164 = vpop.permute.xlu0 %5163
        %5165 = vrot.lane.b32.xlu0 %v4943, 32
        %v5166 = vpop.permute.xlu0 %5165
        %5167 = vrot.lane.b32.xlu0 %v4944, 32
        %v5168 = vpop.permute.xlu0 %5167
        %v5201 = vsel %vm223, %v2841, %v4978
        %v5202 = vsel %vm223, %v2842, %v4980
        %v5203 = vsel %vm223, %v2843, %v4982
        %v5204 = vsel %vm223, %v2844, %v4984
        %v5205 = vsel %vm223, %v2845, %v4986
        %v5206 = vsel %vm223, %v2846, %v4988
        %v5207 = vsel %vm223, %v2847, %v4990
        %v5208 = vsel %vm223, %v2848, %v4992
        %v5209 = vsel %vm223, %v2849, %v4994
        %v5210 = vsel %vm223, %v2850, %v4996
        %v5211 = vsel %vm223, %v2851, %v4998
        %v5212 = vsel %vm223, %v2852, %v5000
        %v5213 = vsel %vm223, %v2853, %v5002
        %v5214 = vsel %vm223, %v2854, %v5004
        %v5215 = vsel %vm223, %v2855, %v5006
        %v5216 = vsel %vm223, %v2856, %v5008
        %v5217 = vsel %vm223, %v2857, %v5010
        %v5218 = vsel %vm223, %v2858, %v5012
        %v5219 = vsel %vm223, %v2859, %v5014
        %v5220 = vsel %vm223, %v2860, %v5016
        %v5221 = vsel %vm223, %v2861, %v5018
        %v5222 = vsel %vm223, %v2862, %v5020
        %v5223 = vsel %vm223, %v2863, %v5022
        %v5224 = vsel %vm223, %v2864, %v5024
        %v5225 = vsel %vm223, %v2865, %v5026
        %v5226 = vsel %vm223, %v2866, %v5028
        %v5227 = vsel %vm223, %v2867, %v5030
        %v5228 = vsel %vm223, %v2868, %v5032
        %v5229 = vsel %vm223, %v2869, %v5034
        %v5230 = vsel %vm223, %v2870, %v5036
        %v5231 = vsel %vm223, %v2871, %v5038
        %v5232 = vsel %vm223, %v2872, %v5040
        %vm5233 = vcmask 261120
        %v5234 = vsel %vm5233, %v5201, %v5106
        %v5235 = vsel %vm5233, %v5202, %v5108
        %v5236 = vsel %vm5233, %v5203, %v5110
        %v5237 = vsel %vm5233, %v5204, %v5112
        %v5238 = vsel %vm5233, %v5205, %v5114
        %v5239 = vsel %vm5233, %v5206, %v5116
        %v5240 = vsel %vm5233, %v5207, %v5118
        %v5241 = vsel %vm5233, %v5208, %v5120
        %v5242 = vsel %vm5233, %v5209, %v5122
        %v5243 = vsel %vm5233, %v5210, %v5124
        %v5244 = vsel %vm5233, %v5211, %v5126
        %v5245 = vsel %vm5233, %v5212, %v5128
        %v5246 = vsel %vm5233, %v5213, %v5130
        %v5247 = vsel %vm5233, %v5214, %v5132
        %v5248 = vsel %vm5233, %v5215, %v5134
        %v5249 = vsel %vm5233, %v5216, %v5136
        %v5250 = vsel %vm5233, %v5217, %v5138
        %v5251 = vsel %vm5233, %v5218, %v5140
        %v5252 = vsel %vm5233, %v5219, %v5142
        %v5253 = vsel %vm5233, %v5220, %v5144
        %v5254 = vsel %vm5233, %v5221, %v5146
        %v5255 = vsel %vm5233, %v5222, %v5148
        %v5256 = vsel %vm5233, %v5223, %v5150
        %v5257 = vsel %vm5233, %v5224, %v5152
        %v5258 = vsel %vm5233, %v5225, %v5154
        %v5259 = vsel %vm5233, %v5226, %v5156
        %v5260 = vsel %vm5233, %v5227, %v5158
        %v5261 = vsel %vm5233, %v5228, %v5160
        %v5262 = vsel %vm5233, %v5229, %v5162
        %v5263 = vsel %vm5233, %v5230, %v5164
        %v5264 = vsel %vm5233, %v5231, %v5166
        %v5265 = vsel %vm5233, %v5232, %v5168
        %vm5266 = vcmask 392192
        %5267 = vst.msk [vmem:[%s217] sm:$0xff] %vm5266, %v5234
        %5268 = vst.msk [vmem:[%s217 + $0x8] sm:$0xff] %vm5266, %v5235
        %5269 = vst.msk [vmem:[%s217 + $0x10] sm:$0xff] %vm5266, %v5236
        %5270 = vst.msk [vmem:[%s217 + $0x18] sm:$0xff] %vm5266, %v5237
        %5271 = vst.msk [vmem:[%s217 + $0x20] sm:$0xff] %vm5266, %v5238
        %5272 = vst.msk [vmem:[%s217 + $0x28] sm:$0xff] %vm5266, %v5239
        %5273 = vst.msk [vmem:[%s217 + $0x30] sm:$0xff] %vm5266, %v5240
        %5274 = vst.msk [vmem:[%s217 + $0x38] sm:$0xff] %vm5266, %v5241
        %5275 = vst.msk [vmem:[%s217 + $0x40] sm:$0xff] %vm5266, %v5242
        %5276 = vst.msk [vmem:[%s217 + $0x48] sm:$0xff] %vm5266, %v5243
        %5277 = vst.msk [vmem:[%s217 + $0x50] sm:$0xff] %vm5266, %v5244
        %5278 = vst.msk [vmem:[%s217 + $0x58] sm:$0xff] %vm5266, %v5245
        %5279 = vst.msk [vmem:[%s217 + $0x60] sm:$0xff] %vm5266, %v5246
        %5280 = vst.msk [vmem:[%s217 + $0x68] sm:$0xff] %vm5266, %v5247
        %5281 = vst.msk [vmem:[%s217 + $0x70] sm:$0xff] %vm5266, %v5248
        %5282 = vst.msk [vmem:[%s217 + $0x78] sm:$0xff] %vm5266, %v5249
        %5283 = vst.msk [vmem:[%s217 + $0x80] sm:$0xff] %vm5266, %v5250
        %5284 = vst.msk [vmem:[%s217 + $0x88] sm:$0xff] %vm5266, %v5251
        %5285 = vst.msk [vmem:[%s217 + $0x90] sm:$0xff] %vm5266, %v5252
        %5286 = vst.msk [vmem:[%s217 + $0x98] sm:$0xff] %vm5266, %v5253
        %5287 = vst.msk [vmem:[%s217 + $0xa0] sm:$0xff] %vm5266, %v5254
        %5288 = vst.msk [vmem:[%s217 + $0xa8] sm:$0xff] %vm5266, %v5255
        %5289 = vst.msk [vmem:[%s217 + $0xb0] sm:$0xff] %vm5266, %v5256
        %5290 = vst.msk [vmem:[%s217 + $0xb8] sm:$0xff] %vm5266, %v5257
        %5291 = vst.msk [vmem:[%s217 + $0xc0] sm:$0xff] %vm5266, %v5258
        %5292 = vst.msk [vmem:[%s217 + $0xc8] sm:$0xff] %vm5266, %v5259
        %5293 = vst.msk [vmem:[%s217 + $0xd0] sm:$0xff] %vm5266, %v5260
        %5294 = vst.msk [vmem:[%s217 + $0xd8] sm:$0xff] %vm5266, %v5261
        %5295 = vst.msk [vmem:[%s217 + $0xe0] sm:$0xff] %vm5266, %v5262
        %5296 = vst.msk [vmem:[%s217 + $0xe8] sm:$0xff] %vm5266, %v5263
        %5297 = vst.msk [vmem:[%s217 + $0xf0] sm:$0xff] %vm5266, %v5264
        %5298 = vst.msk [vmem:[%s217 + $0xf8] sm:$0xff] %vm5266, %v5265
        %s5299 = sand.u32 %s137, 1
        %s5300 = scalar_lea.sflag [#allocation4], %s5299
        %s5301 = sand.u32 %s137, 1
        %s5302 = smul.addr %s5301, 256
        %s5303 = scalar_lea.vmem [#allocation3], %s5302
        // Predicated region
        $region41: #{tpu_custom_call.1} parent=39 // pred_check
          %p5304 = pneg %p147
        $region42: #{tpu_custom_call.1} parent=39 // pred_check_branch
          %5306 = sbr.rel (%p5304) target = $region44
        $region43: #{tpu_custom_call.1} parent=39 // pred_region
          %5308 = vsyncadd %s5300, 0
          %s5309 = smul.addr %s19, 32
          %s5310 = smul.addr %s5309, 8
          %s5311 = scalar_lea.hbm %s5, %s5310
          %s5312 = sshll.u32 %s5303, 4
          %s5313 = int_to_ptr.vmem [resolvable:$true] %s5312
          %s5314 = sshll.u32 %s5311, 4
          %s5315 = int_to_ptr.hbm [resolvable:$true] %s5314
          %5320 = dma.vmem_to_hbm [thread:$0]  %s5313, 4096, %s5315, %s5300, 128, 128, 8
        $region44: #{tpu_custom_call.1} parent=39 // pred_fallthru
          _
      $region40: #{tpu_custom_call.1} parent=5 // pred_fallthru
        _
      %p5321 = scmp.le.s32.totalorder 2, %s14
      // Predicated region
      $region45: #{tpu_custom_call.1} parent=5 // pred_check
        %p5322 = pneg %p5321
      $region46: #{tpu_custom_call.1} parent=5 // pred_check_branch
        %5324 = sbr.rel (%p5322) target = $region48
      $region47: #{tpu_custom_call.1} parent=5 // pred_region
        %s5325 = ssub.s32 %s14, 2
        // Predicated region
        $region49: #{tpu_custom_call.1} parent=47 // pred_check
          %p5326 = pneg %p153
        $region50: #{tpu_custom_call.1} parent=47 // pred_check_branch
          %5328 = sbr.rel (%p5326) target = $region52
        $region51: #{tpu_custom_call.1} parent=47 // pred_region
          %s5329 = sand.u32 %s138, 1
          %s5330 = scalar_lea.sflag [#allocation4], %s5329
          %s5331 = sand.u32 %s138, 1
          %s5332 = smul.addr %s5331, 256
          %s5333 = scalar_lea.vmem [#allocation3], %s5332
          %5335 = dma.done %s5330, 4096
        $region52: #{tpu_custom_call.1} parent=47 // pred_fallthru
          _
      $region48: #{tpu_custom_call.1} parent=5 // pred_fallthru
        _
    $region6: #{tpu_custom_call.1} parent=1 // loop_footer
      %s18 = sadd.s32 1, %s14
    $region7: #{tpu_custom_call.1} parent=1 // loop_footer_branch
      %13 = sbr.rel target = $region3
    $region8: #{tpu_custom_call.1} parent=1 // loop_exit
      _
    %5336 = vsyncpa [#allocation4], 1
    %s5337 = scalar_lea.sflag [#allocation4], 1
    %5338 = vsyncpa %s5337, 1

</llo_original>
